<compile_context>
chip_gen: v5e
topology: v5e:2x2
jax: 0.10.0
libtpu: 0.0.40
codegen_flags: <defaults>
</compile_context>

<pallas_src>
import jax
import jax.numpy as jnp
import numpy as np
from jax.experimental import pallas as pl
from jax.experimental.pallas import tpu as pltpu

NUM_CLASSES = 3
LOGIT_PAD = 128          # lane-dense logits slab; sliced back to NUM_CLASSES
FEAT = 1024              # conv4 / pooled feature width
CHUNK = 256              # conv4 output-channel chunk (bounds live f32 tile)
EPS = 1e-5


# ---------------------------------------------------------------------------
# Kernel 1: per-point MLP (conv1..conv4, BN folded, ReLU) + running max.
# grid = (n_splits, B, tiles_per_split); the point-tile axis is the sequential
# reduction axis ("arbitrary"), split/batch axes are "parallel" (megacore).
# Output block (8, FEAT) per (batch, split) is the max accumulator itself.
# ---------------------------------------------------------------------------
def _point_mlp_kernel(x_ref, w1, b1, w2, b2, w3, b3, w4, b4, part_ref):
    n = pl.program_id(2)

    @pl.when(n == 0)
    def _init():
        part_ref[...] = jnp.full_like(part_ref, -jnp.inf)

    x = x_ref[...]                     # (tile_n, 3) f32
    w1f = w1[...]                      # (3, 64) f32

    # conv1 (K=3): three VPU broadcast-FMAs; keeps the MXU for wide layers.
    h = (x[:, 0:1] * w1f[0:1, :]
         + x[:, 1:2] * w1f[1:2, :]
         + x[:, 2:3] * w1f[2:3, :]) + b1[...]
    h = jnp.maximum(h, 0.0)

    def mm(a, w_ref, b_ref):           # bf16 MXU inputs, f32 accumulation
        return jnp.dot(a.astype(jnp.bfloat16), w_ref[...],
                       preferred_element_type=jnp.float32) + b_ref[...]

    h = jnp.maximum(mm(h, w2, b2), 0.0)     # (tile_n, 64)
    h = jnp.maximum(mm(h, w3, b3), 0.0)     # (tile_n, 128)

    tile_n = h.shape[0]
    h3b = h.astype(jnp.bfloat16)            # cast once for all conv4 chunks

    # conv4 in 256-lane chunks, folded straight into the running max so the
    # live f32 intermediate is only (tile_n, CHUNK).
    for c in range(FEAT // CHUNK):
        c0 = c * CHUNK
        wc = w4[:, c0:c0 + CHUNK]           # (128, CHUNK) bf16, static slice
        bc = b4[:, c0:c0 + CHUNK]           # (1, CHUNK)
        hc = jnp.maximum(
            jnp.dot(h3b, wc, preferred_element_type=jnp.float32) + bc, 0.0)
        pc = jnp.max(hc.reshape(tile_n // 8, 8, CHUNK), axis=0)  # (8, CHUNK)
        part_ref[:, c0:c0 + CHUNK] = jnp.maximum(
            part_ref[:, c0:c0 + CHUNK], pc)


# ---------------------------------------------------------------------------
# Kernel 2: combine partial maxes + FC head, batched over B (single launch,
# whole arrays resident in VMEM).  Head weights stream through the MXU once.
# ---------------------------------------------------------------------------
def _head_kernel(part_ref, fw1, fb1, fw2, fb2, fw3, fb3, out_ref):
    feat = jnp.max(part_ref[...], axis=1)      # (B, FEAT)

    def mm(a, w_ref, b_ref):
        return jnp.dot(a.astype(jnp.bfloat16), w_ref[...],
                       preferred_element_type=jnp.float32) + b_ref[...]

    g = jnp.maximum(mm(feat, fw1, fb1), 0.0)   # (B, 512)
    # TODO(synk): Dropout(p=0.3) is identity in eval mode; training-mode
    # stochastic dropout is not implemented.
    g = jnp.maximum(mm(g, fw2, fb2), 0.0)      # (B, 256)
    out_ref[...] = mm(g, fw3, fb3)             # (B, LOGIT_PAD)


# ---------------------------------------------------------------------------
# Wrapper
# ---------------------------------------------------------------------------
def cls_model_forward(points, P, *, tile_n=1024, n_splits=None):
    """points: (B, 3, N), as in the PyTorch module. Returns (B, NUM_CLASSES)."""
    B, C, N = points.shape
    assert C == 3 and N >= 1

    # Large tiles amortize per-grid-step pipeline overhead; bound by N.
    tile_n = min(tile_n, ((N + 7) // 8) * 8)
    assert tile_n % 8 == 0

    # Point-split axis: keeps both v7x TensorCores busy when B is odd/1.
    if n_splits is None:
        n_splits = 2 if (B % 2 == 1 and N >= 2 * tile_n) else 1

    x = jnp.transpose(points, (0, 2, 1)).astype(jnp.float32)   # (B, N, 3)
    step = tile_n * n_splits
    n_pad_total = ((N + step - 1) // step) * step
    pad = n_pad_total - N
    if pad:
        # Duplicate the last point; duplicates do not change the max-pool.
        x = jnp.concatenate(
            [x, jnp.broadcast_to(x[:, -1:, :], (B, pad, 3))], axis=1)
    tiles_per_split = n_pad_total // step

    conv_w = [P["w1"], P["b1"], P["w2"], P["b2"], P["w3"], P["b3"],
              P["w4"], P["b4"]]

    def const_spec(arr):
        nd = arr.ndim
        return pl.BlockSpec(arr.shape, lambda s, b, n, _nd=nd: (0,) * _nd)

    flops = int(B * n_pad_total * 2 *
                (3 * 64 + 64 * 64 + 64 * 128 + 128 * FEAT))
    bytes_accessed = int(x.size * 4
                         + sum(int(w.size) * w.dtype.itemsize for w in conv_w)
                         + B * n_splits * 8 * FEAT * 4)

    partials = pl.pallas_call(
        _point_mlp_kernel,
        out_shape=jax.ShapeDtypeStruct((B, n_splits, 8, FEAT), jnp.float32),
        grid_spec=pltpu.PrefetchScalarGridSpec(
            num_scalar_prefetch=0,
            grid=(n_splits, B, tiles_per_split),
            in_specs=[pl.BlockSpec(
                          (None, tile_n, 3),
                          lambda s, b, n: (b, s * tiles_per_split + n, 0))]
                     + [const_spec(w) for w in conv_w],
            out_specs=pl.BlockSpec((None, None, 8, FEAT),
                                   lambda s, b, n: (b, s, 0, 0)),
        ),
        compiler_params=pltpu.CompilerParams(
            dimension_semantics=("parallel", "parallel", "arbitrary"),
            vmem_limit_bytes=32 * 1024 * 1024),
        cost_estimate=pl.CostEstimate(
            flops=flops, transcendentals=0, bytes_accessed=bytes_accessed),
    )(x, *conv_w)

    part_flat = partials.reshape(B, n_splits * 8, FEAT)

    logits = pl.pallas_call(
        _head_kernel,
        out_shape=jax.ShapeDtypeStruct((B, LOGIT_PAD), jnp.float32),
    )(part_flat, P["fw1"], P["fb1"], P["fw2"], P["fb2"], P["fw3"], P["fb3"])

    return logits[:, :NUM_CLASSES]


# ---------------------------------------------------------------------------
# Deterministic synthetic parameters (BN folded into weights/bias, bf16 MXU
# weights, conv1 kept f32 for the VPU path).
# ---------------------------------------------------------------------------
def make_params(key):
    conv_dims = [(3, 64), (64, 64), (64, 128), (128, FEAT)]
    fc_dims = [(FEAT, 512), (512, 256), (256, NUM_CLASSES)]
    keys = jax.random.split(key, 64)
    ki = iter(range(64))
    P = {}

    def rnd(shape, scale=0.1):
        return jax.random.normal(keys[next(ki)], shape, dtype=jnp.float32) * scale

    def fold(w, b, cout):
        gamma = 1.0 + rnd((cout,))
        beta = rnd((cout,))
        mean = rnd((cout,))
        var = 1.0 + jnp.abs(rnd((cout,)))
        scale = gamma / jnp.sqrt(var + EPS)
        w_f = w * scale[None, :]                    # fold BN scale into weights
        b_f = (b - mean) * scale + beta
        return w_f, b_f.reshape(1, -1)

    for idx, (cin, cout) in enumerate(conv_dims, start=1):
        w_f, b_f = fold(rnd((cin, cout)), rnd((cout,)), cout)
        if idx == 1:
            P["w1"] = w_f                            # f32 (VPU FMA path)
        else:
            P[f"w{idx}"] = w_f.astype(jnp.bfloat16)  # bf16 MXU input
        P[f"b{idx}"] = b_f

    for idx, (cin, cout) in enumerate(fc_dims[:2], start=1):
        w_f, b_f = fold(rnd((cin, cout)), rnd((cout,)), cout)
        P[f"fw{idx}"] = w_f.astype(jnp.bfloat16)
        P[f"fb{idx}"] = b_f

    cin, cout = fc_dims[2]
    w3 = rnd((cin, cout))
    b3 = rnd((cout,))
    # Pad the final linear to a lane-dense 128-wide slab (zeros beyond 3).
    P["fw3"] = (jnp.zeros((cin, LOGIT_PAD), jnp.float32)
                .at[:, :cout].set(w3).astype(jnp.bfloat16))
    P["fb3"] = jnp.zeros((1, LOGIT_PAD), jnp.float32).at[0, :cout].set(b3)
    return P


def reference_forward(points, P):
    """Pure-JAX reference with the same bf16-input / f32-accumulate math."""
    x = jnp.transpose(points, (0, 2, 1)).astype(jnp.float32)    # (B, N, 3)

    def mm(a, w, b):
        return jnp.dot(a.astype(jnp.bfloat16), w.astype(jnp.bfloat16),
                       preferred_element_type=jnp.float32) + b

    h = jax.nn.relu(jnp.dot(x, P["w1"],
                            preferred_element_type=jnp.float32) + P["b1"])
    h = jax.nn.relu(mm(h, P["w2"], P["b2"]))
    h = jax.nn.relu(mm(h, P["w3"], P["b3"]))
    h = jax.nn.relu(mm(h, P["w4"], P["b4"]))
    f = jnp.max(h, axis=1)                                      # (B, 1024)
    g = jax.nn.relu(mm(f, P["fw1"], P["fb1"]))
    g = jax.nn.relu(mm(g, P["fw2"], P["fb2"]))
    return (mm(g, P["fw3"], P["fb3"]))[:, :NUM_CLASSES]


if __name__ == "__main__":
    key = jax.random.PRNGKey(0)
    kp, kx1, kx2 = jax.random.split(key, 3)
    params = make_params(kp)

    # Case 1: B=2 (even) — single point-split, one 512-point tile per batch.
    B1, N1 = 2, 512
    pts1 = jax.random.normal(kx1, (B1, 3, N1), dtype=jnp.float32)
    out1 = jax.block_until_ready(cls_model_forward(pts1, params))
    ref1 = reference_forward(pts1, params)
    assert out1.shape == (B1, NUM_CLASSES)
    np.testing.assert_allclose(np.asarray(out1), np.asarray(ref1),
                               rtol=1e-2, atol=1e-2)

    # Case 2: B=1 — exercises the dual-core point-split path, duplicate-point
    # padding, multi-tile max accumulation and chunked conv4.
    B2, N2 = 1, 2500
    pts2 = jax.random.normal(kx2, (B2, 3, N2), dtype=jnp.float32)
    out2 = jax.block_until_ready(cls_model_forward(pts2, params))
    ref2 = reference_forward(pts2, params)
    assert out2.shape == (B2, NUM_CLASSES)
    np.testing.assert_allclose(np.asarray(out2), np.asarray(ref2),
                               rtol=1e-2, atol=1e-2)

    print("KERNEL_OK")
</pallas_src>

<mosaic_0001>
module attributes {stable_mosaic.version = 11 : i64} {
  func.func @_point_mlp_kernel(%arg0: i32, %arg1: i32, %arg2: i32, %arg3: memref<1x512x3xf32, #tpu.memory_space<vmem>>, %arg4: memref<3x64xf32, #tpu.memory_space<vmem>>, %arg5: memref<1x64xf32, #tpu.memory_space<vmem>>, %arg6: memref<64x64xbf16, #tpu.memory_space<vmem>>, %arg7: memref<1x64xf32, #tpu.memory_space<vmem>>, %arg8: memref<64x128xbf16, #tpu.memory_space<vmem>>, %arg9: memref<1x128xf32, #tpu.memory_space<vmem>>, %arg10: memref<128x1024xbf16, #tpu.memory_space<vmem>>, %arg11: memref<1x1024xf32, #tpu.memory_space<vmem>>, %arg12: memref<1x1x8x1024xf32, #tpu.memory_space<vmem>>) attributes {dimension_semantics = [#tpu.dimension_semantics<parallel>, #tpu.dimension_semantics<parallel>, #tpu.dimension_semantics<arbitrary>], iteration_bounds = array<i64: 1, 2, 1>, scalar_prefetch = 0 : i64, scratch_operands = 0 : i64, tpu.core_type = #tpu.core_type<tc>, window_params = [{transform_indices = @transform_0, window_bounds = array<i64: 1, 512, 3>}, {pipeline_mode = #tpu.pipeline_mode<synchronous>, transform_indices = @transform_1, window_bounds = array<i64: 3, 64>}, {pipeline_mode = #tpu.pipeline_mode<synchronous>, transform_indices = @transform_2, window_bounds = array<i64: 1, 64>}, {pipeline_mode = #tpu.pipeline_mode<synchronous>, transform_indices = @transform_3, window_bounds = array<i64: 64, 64>}, {pipeline_mode = #tpu.pipeline_mode<synchronous>, transform_indices = @transform_4, window_bounds = array<i64: 1, 64>}, {pipeline_mode = #tpu.pipeline_mode<synchronous>, transform_indices = @transform_5, window_bounds = array<i64: 64, 128>}, {pipeline_mode = #tpu.pipeline_mode<synchronous>, transform_indices = @transform_6, window_bounds = array<i64: 1, 128>}, {pipeline_mode = #tpu.pipeline_mode<synchronous>, transform_indices = @transform_7, window_bounds = array<i64: 128, 1024>}, {pipeline_mode = #tpu.pipeline_mode<synchronous>, transform_indices = @transform_8, window_bounds = array<i64: 1, 1024>}, {transform_indices = @transform_9, window_bounds = array<i64: 1, 1, 8, 1024>}]} {
    %c0_i32 = arith.constant 0 : i32
    %0 = arith.cmpi eq, %arg2, %c0_i32 : i32
    %1 = arith.extui %0 : i1 to i32
    %c0_i32_0 = arith.constant 0 : i32
    %2 = arith.cmpi ne, %1, %c0_i32_0 : i32
    scf.if %2 {
      %cst_76 = arith.constant 0xFF800000 : f32
      %105 = vector.broadcast %cst_76 : f32 to vector<8x1024xf32>
      %c0_77 = arith.constant 0 : index
      %c0_78 = arith.constant 0 : index
      %c0_79 = arith.constant 0 : index
      %c0_80 = arith.constant 0 : index
      %106 = vector.load %arg12[%c0_77, %c0_78, %c0_79, %c0_80] : memref<1x1x8x1024xf32, #tpu.memory_space<vmem>>, vector<1x1x8x1024xf32>
      %107 = vector.shape_cast %106 : vector<1x1x8x1024xf32> to vector<8x1024xf32>
      %108 = vector.shape_cast %105 : vector<8x1024xf32> to vector<1x1x8x1024xf32>
      tpu.vector_store %arg12[%c0_77, %c0_78, %c0_79, %c0_80], %108 {strides = array<i32>} : memref<1x1x8x1024xf32, #tpu.memory_space<vmem>>, vector<1x1x8x1024xf32>,
    } else {
    }
    %c0 = arith.constant 0 : index
    %c0_1 = arith.constant 0 : index
    %c0_2 = arith.constant 0 : index
    %3 = vector.load %arg3[%c0, %c0_1, %c0_2] : memref<1x512x3xf32, #tpu.memory_space<vmem>>, vector<1x512x3xf32>
    %4 = vector.shape_cast %3 : vector<1x512x3xf32> to vector<512x3xf32>
    %c0_3 = arith.constant 0 : index
    %c0_4 = arith.constant 0 : index
    %5 = vector.load %arg4[%c0_3, %c0_4] : memref<3x64xf32, #tpu.memory_space<vmem>>, vector<3x64xf32>
    %6 = vector.extract_strided_slice %4 {offsets = [0, 0], sizes = [512, 1], strides = [1, 1]} : vector<512x3xf32> to vector<512x1xf32>
    %7 = vector.extract_strided_slice %5 {offsets = [0, 0], sizes = [1, 64], strides = [1, 1]} : vector<3x64xf32> to vector<1x64xf32>
    %8 = vector.broadcast %6 : vector<512x1xf32> to vector<512x64xf32>
    %9 = vector.broadcast %7 : vector<1x64xf32> to vector<512x64xf32>
    %10 = arith.mulf %8, %9 : vector<512x64xf32>
    %11 = vector.extract_strided_slice %4 {offsets = [0, 1], sizes = [512, 1], strides = [1, 1]} : vector<512x3xf32> to vector<512x1xf32>
    %12 = vector.extract_strided_slice %5 {offsets = [1, 0], sizes = [1, 64], strides = [1, 1]} : vector<3x64xf32> to vector<1x64xf32>
    %13 = vector.broadcast %11 : vector<512x1xf32> to vector<512x64xf32>
    %14 = vector.broadcast %12 : vector<1x64xf32> to vector<512x64xf32>
    %15 = arith.mulf %13, %14 : vector<512x64xf32>
    %16 = arith.addf %10, %15 : vector<512x64xf32>
    %17 = vector.extract_strided_slice %4 {offsets = [0, 2], sizes = [512, 1], strides = [1, 1]} : vector<512x3xf32> to vector<512x1xf32>
    %18 = vector.extract_strided_slice %5 {offsets = [2, 0], sizes = [1, 64], strides = [1, 1]} : vector<3x64xf32> to vector<1x64xf32>
    %19 = vector.broadcast %17 : vector<512x1xf32> to vector<512x64xf32>
    %20 = vector.broadcast %18 : vector<1x64xf32> to vector<512x64xf32>
    %21 = arith.mulf %19, %20 : vector<512x64xf32>
    %22 = arith.addf %16, %21 : vector<512x64xf32>
    %c0_5 = arith.constant 0 : index
    %c0_6 = arith.constant 0 : index
    %23 = vector.load %arg5[%c0_5, %c0_6] : memref<1x64xf32, #tpu.memory_space<vmem>>, vector<1x64xf32>
    %24 = vector.broadcast %23 : vector<1x64xf32> to vector<512x64xf32>
    %25 = arith.addf %22, %24 : vector<512x64xf32>
    %cst = arith.constant 0.000000e+00 : f32
    %26 = vector.broadcast %cst : f32 to vector<512x64xf32>
    %27 = arith.maximumf %25, %26 : vector<512x64xf32>
    %28 = arith.truncf %27 : vector<512x64xf32> to vector<512x64xbf16>
    %c0_7 = arith.constant 0 : index
    %c0_8 = arith.constant 0 : index
    %29 = vector.load %arg6[%c0_7, %c0_8] : memref<64x64xbf16, #tpu.memory_space<vmem>>, vector<64x64xbf16>
    %cst_9 = arith.constant dense<0.000000e+00> : vector<512x64xf32>
    %30 = tpu.matmul %28, %29, %cst_9 {dimension_numbers = #tpu.dot_dimension_numbers<[1], [0], [0], [1], [0, 0, 1, 1], [], []>} : vector<512x64xbf16>, vector<64x64xbf16>, vector<512x64xf32> -> vector<512x64xf32>
    %c0_10 = arith.constant 0 : index
    %c0_11 = arith.constant 0 : index
    %31 = vector.load %arg7[%c0_10, %c0_11] : memref<1x64xf32, #tpu.memory_space<vmem>>, vector<1x64xf32>
    %32 = vector.broadcast %31 : vector<1x64xf32> to vector<512x64xf32>
    %33 = arith.addf %30, %32 : vector<512x64xf32>
    %cst_12 = arith.constant 0.000000e+00 : f32
    %34 = vector.broadcast %cst_12 : f32 to vector<512x64xf32>
    %35 = arith.maximumf %33, %34 : vector<512x64xf32>
    %36 = arith.truncf %35 : vector<512x64xf32> to vector<512x64xbf16>
    %c0_13 = arith.constant 0 : index
    %c0_14 = arith.constant 0 : index
    %37 = vector.load %arg8[%c0_13, %c0_14] : memref<64x128xbf16, #tpu.memory_space<vmem>>, vector<64x128xbf16>
    %cst_15 = arith.constant dense<0.000000e+00> : vector<512x128xf32>
    %38 = tpu.matmul %36, %37, %cst_15 {dimension_numbers = #tpu.dot_dimension_numbers<[1], [0], [0], [1], [0, 0, 1, 1], [], []>} : vector<512x64xbf16>, vector<64x128xbf16>, vector<512x128xf32> -> vector<512x128xf32>
    %c0_16 = arith.constant 0 : index
    %c0_17 = arith.constant 0 : index
    %39 = vector.load %arg9[%c0_16, %c0_17] : memref<1x128xf32, #tpu.memory_space<vmem>>, vector<1x128xf32>
    %40 = vector.broadcast %39 : vector<1x128xf32> to vector<512x128xf32>
    %41 = arith.addf %38, %40 : vector<512x128xf32>
    %cst_18 = arith.constant 0.000000e+00 : f32
    %42 = vector.broadcast %cst_18 : f32 to vector<512x128xf32>
    %43 = arith.maximumf %41, %42 : vector<512x128xf32>
    %44 = arith.truncf %43 : vector<512x128xf32> to vector<512x128xbf16>
    %c0_19 = arith.constant 0 : index
    %c0_20 = arith.constant 0 : index
    %45 = vector.load %arg10[%c0_19, %c0_20] : memref<128x1024xbf16, #tpu.memory_space<vmem>>, vector<128x256xbf16>
    %c0_21 = arith.constant 0 : index
    %c0_22 = arith.constant 0 : index
    %46 = vector.load %arg11[%c0_21, %c0_22] : memref<1x1024xf32, #tpu.memory_space<vmem>>, vector<1x256xf32>
    %cst_23 = arith.constant dense<0.000000e+00> : vector<512x256xf32>
    %47 = tpu.matmul %44, %45, %cst_23 {dimension_numbers = #tpu.dot_dimension_numbers<[1], [0], [0], [1], [0, 0, 1, 1], [], []>} : vector<512x128xbf16>, vector<128x256xbf16>, vector<512x256xf32> -> vector<512x256xf32>
    %48 = vector.broadcast %46 : vector<1x256xf32> to vector<512x256xf32>
    %49 = arith.addf %47, %48 : vector<512x256xf32>
    %cst_24 = arith.constant 0.000000e+00 : f32
    %50 = vector.broadcast %cst_24 : f32 to vector<512x256xf32>
    %51 = arith.maximumf %49, %50 : vector<512x256xf32>
    %52 = vector.shape_cast %51 : vector<512x256xf32> to vector<64x8x256xf32>
    %cst_25 = arith.constant dense<0xFF800000> : vector<8x256xf32>
    %53 = vector.multi_reduction <maximumf>, %52, %cst_25 [0] : vector<64x8x256xf32> to vector<8x256xf32>
    %c0_26 = arith.constant 0 : index
    %c0_27 = arith.constant 0 : index
    %c0_28 = arith.constant 0 : index
    %c0_29 = arith.constant 0 : index
    %54 = vector.load %arg12[%c0_26, %c0_27, %c0_28, %c0_29] : memref<1x1x8x1024xf32, #tpu.memory_space<vmem>>, vector<1x1x8x256xf32>
    %55 = vector.shape_cast %54 : vector<1x1x8x256xf32> to vector<8x256xf32>
    %56 = arith.maximumf %55, %53 : vector<8x256xf32>
    %c0_30 = arith.constant 0 : index
    %c0_31 = arith.constant 0 : index
    %c0_32 = arith.constant 0 : index
    %c0_33 = arith.constant 0 : index
    %57 = vector.load %arg12[%c0_30, %c0_31, %c0_32, %c0_33] : memref<1x1x8x1024xf32, #tpu.memory_space<vmem>>, vector<1x1x8x256xf32>
    %58 = vector.shape_cast %57 : vector<1x1x8x256xf32> to vector<8x256xf32>
    %59 = vector.shape_cast %56 : vector<8x256xf32> to vector<1x1x8x256xf32>
    tpu.vector_store %arg12[%c0_30, %c0_31, %c0_32, %c0_33], %59 {strides = array<i32>} : memref<1x1x8x1024xf32, #tpu.memory_space<vmem>>, vector<1x1x8x256xf32>,
    %c0_34 = arith.constant 0 : index
    %c256 = arith.constant 256 : index
    %60 = vector.load %arg10[%c0_34, %c256] : memref<128x1024xbf16, #tpu.memory_space<vmem>>, vector<128x256xbf16>
    %c0_35 = arith.constant 0 : index
    %c256_36 = arith.constant 256 : index
    %61 = vector.load %arg11[%c0_35, %c256_36] : memref<1x1024xf32, #tpu.memory_space<vmem>>, vector<1x256xf32>
    %cst_37 = arith.constant dense<0.000000e+00> : vector<512x256xf32>
    %62 = tpu.matmul %44, %60, %cst_37 {dimension_numbers = #tpu.dot_dimension_numbers<[1], [0], [0], [1], [0, 0, 1, 1], [], []>} : vector<512x128xbf16>, vector<128x256xbf16>, vector<512x256xf32> -> vector<512x256xf32>
    %63 = vector.broadcast %61 : vector<1x256xf32> to vector<512x256xf32>
    %64 = arith.addf %62, %63 : vector<512x256xf32>
    %cst_38 = arith.constant 0.000000e+00 : f32
    %65 = vector.broadcast %cst_38 : f32 to vector<512x256xf32>
    %66 = arith.maximumf %64, %65 : vector<512x256xf32>
    %67 = vector.shape_cast %66 : vector<512x256xf32> to vector<64x8x256xf32>
    %cst_39 = arith.constant dense<0xFF800000> : vector<8x256xf32>
    %68 = vector.multi_reduction <maximumf>, %67, %cst_39 [0] : vector<64x8x256xf32> to vector<8x256xf32>
    %c0_40 = arith.constant 0 : index
    %c0_41 = arith.constant 0 : index
    %c0_42 = arith.constant 0 : index
    %c256_43 = arith.constant 256 : index
    %69 = vector.load %arg12[%c0_40, %c0_41, %c0_42, %c256_43] : memref<1x1x8x1024xf32, #tpu.memory_space<vmem>>, vector<1x1x8x256xf32>
    %70 = vector.shape_cast %69 : vector<1x1x8x256xf32> to vector<8x256xf32>
    %71 = arith.maximumf %70, %68 : vector<8x256xf32>
    %c0_44 = arith.constant 0 : index
    %c0_45 = arith.constant 0 : index
    %c0_46 = arith.constant 0 : index
    %c256_47 = arith.constant 256 : index
    %72 = vector.load %arg12[%c0_44, %c0_45, %c0_46, %c256_47] : memref<1x1x8x1024xf32, #tpu.memory_space<vmem>>, vector<1x1x8x256xf32>
    %73 = vector.shape_cast %72 : vector<1x1x8x256xf32> to vector<8x256xf32>
    %74 = vector.shape_cast %71 : vector<8x256xf32> to vector<1x1x8x256xf32>
    tpu.vector_store %arg12[%c0_44, %c0_45, %c0_46, %c256_47], %74 {strides = array<i32>} : memref<1x1x8x1024xf32, #tpu.memory_space<vmem>>, vector<1x1x8x256xf32>,
    %c0_48 = arith.constant 0 : index
    %c512 = arith.constant 512 : index
    %75 = vector.load %arg10[%c0_48, %c512] : memref<128x1024xbf16, #tpu.memory_space<vmem>>, vector<128x256xbf16>
    %c0_49 = arith.constant 0 : index
    %c512_50 = arith.constant 512 : index
    %76 = vector.load %arg11[%c0_49, %c512_50] : memref<1x1024xf32, #tpu.memory_space<vmem>>, vector<1x256xf32>
    %cst_51 = arith.constant dense<0.000000e+00> : vector<512x256xf32>
    %77 = tpu.matmul %44, %75, %cst_51 {dimension_numbers = #tpu.dot_dimension_numbers<[1], [0], [0], [1], [0, 0, 1, 1], [], []>} : vector<512x128xbf16>, vector<128x256xbf16>, vector<512x256xf32> -> vector<512x256xf32>
    %78 = vector.broadcast %76 : vector<1x256xf32> to vector<512x256xf32>
    %79 = arith.addf %77, %78 : vector<512x256xf32>
    %cst_52 = arith.constant 0.000000e+00 : f32
    %80 = vector.broadcast %cst_52 : f32 to vector<512x256xf32>
    %81 = arith.maximumf %79, %80 : vector<512x256xf32>
    %82 = vector.shape_cast %81 : vector<512x256xf32> to vector<64x8x256xf32>
    %cst_53 = arith.constant dense<0xFF800000> : vector<8x256xf32>
    %83 = vector.multi_reduction <maximumf>, %82, %cst_53 [0] : vector<64x8x256xf32> to vector<8x256xf32>
    %c0_54 = arith.constant 0 : index
    %c0_55 = arith.constant 0 : index
    %c0_56 = arith.constant 0 : index
    %c512_57 = arith.constant 512 : index
    %84 = vector.load %arg12[%c0_54, %c0_55, %c0_56, %c512_57] : memref<1x1x8x1024xf32, #tpu.memory_space<vmem>>, vector<1x1x8x256xf32>
    %85 = vector.shape_cast %84 : vector<1x1x8x256xf32> to vector<8x256xf32>
    %86 = arith.maximumf %85, %83 : vector<8x256xf32>
    %c0_58 = arith.constant 0 : index
    %c0_59 = arith.constant 0 : index
    %c0_60 = arith.constant 0 : index
    %c512_61 = arith.constant 512 : index
    %87 = vector.load %arg12[%c0_58, %c0_59, %c0_60, %c512_61] : memref<1x1x8x1024xf32, #tpu.memory_space<vmem>>, vector<1x1x8x256xf32>
    %88 = vector.shape_cast %87 : vector<1x1x8x256xf32> to vector<8x256xf32>
    %89 = vector.shape_cast %86 : vector<8x256xf32> to vector<1x1x8x256xf32>
    tpu.vector_store %arg12[%c0_58, %c0_59, %c0_60, %c512_61], %89 {strides = array<i32>} : memref<1x1x8x1024xf32, #tpu.memory_space<vmem>>, vector<1x1x8x256xf32>,
    %c0_62 = arith.constant 0 : index
    %c768 = arith.constant 768 : index
    %90 = vector.load %arg10[%c0_62, %c768] : memref<128x1024xbf16, #tpu.memory_space<vmem>>, vector<128x256xbf16>
    %c0_63 = arith.constant 0 : index
    %c768_64 = arith.constant 768 : index
    %91 = vector.load %arg11[%c0_63, %c768_64] : memref<1x1024xf32, #tpu.memory_space<vmem>>, vector<1x256xf32>
    %cst_65 = arith.constant dense<0.000000e+00> : vector<512x256xf32>
    %92 = tpu.matmul %44, %90, %cst_65 {dimension_numbers = #tpu.dot_dimension_numbers<[1], [0], [0], [1], [0, 0, 1, 1], [], []>} : vector<512x128xbf16>, vector<128x256xbf16>, vector<512x256xf32> -> vector<512x256xf32>
    %93 = vector.broadcast %91 : vector<1x256xf32> to vector<512x256xf32>
    %94 = arith.addf %92, %93 : vector<512x256xf32>
    %cst_66 = arith.constant 0.000000e+00 : f32
    %95 = vector.broadcast %cst_66 : f32 to vector<512x256xf32>
    %96 = arith.maximumf %94, %95 : vector<512x256xf32>
    %97 = vector.shape_cast %96 : vector<512x256xf32> to vector<64x8x256xf32>
    %cst_67 = arith.constant dense<0xFF800000> : vector<8x256xf32>
    %98 = vector.multi_reduction <maximumf>, %97, %cst_67 [0] : vector<64x8x256xf32> to vector<8x256xf32>
    %c0_68 = arith.constant 0 : index
    %c0_69 = arith.constant 0 : index
    %c0_70 = arith.constant 0 : index
    %c768_71 = arith.constant 768 : index
    %99 = vector.load %arg12[%c0_68, %c0_69, %c0_70, %c768_71] : memref<1x1x8x1024xf32, #tpu.memory_space<vmem>>, vector<1x1x8x256xf32>
    %100 = vector.shape_cast %99 : vector<1x1x8x256xf32> to vector<8x256xf32>
    %101 = arith.maximumf %100, %98 : vector<8x256xf32>
    %c0_72 = arith.constant 0 : index
    %c0_73 = arith.constant 0 : index
    %c0_74 = arith.constant 0 : index
    %c768_75 = arith.constant 768 : index
    %102 = vector.load %arg12[%c0_72, %c0_73, %c0_74, %c768_75] : memref<1x1x8x1024xf32, #tpu.memory_space<vmem>>, vector<1x1x8x256xf32>
    %103 = vector.shape_cast %102 : vector<1x1x8x256xf32> to vector<8x256xf32>
    %104 = vector.shape_cast %101 : vector<8x256xf32> to vector<1x1x8x256xf32>
    tpu.vector_store %arg12[%c0_72, %c0_73, %c0_74, %c768_75], %104 {strides = array<i32>} : memref<1x1x8x1024xf32, #tpu.memory_space<vmem>>, vector<1x1x8x256xf32>,
    return
  }
  func.func @transform_0(%arg0: i32, %arg1: i32, %arg2: i32) -> (i32, i32, i32) {
    %c1_i32 = arith.constant 1 : i32
    %0 = arith.muli %arg0, %c1_i32 : i32
    %1 = arith.addi %0, %arg2 : i32
    %c0_i32 = arith.constant 0 : i32
    %c0_i32_0 = arith.constant 0 : i32
    return %arg1, %1, %c0_i32 : i32, i32, i32
  }
  func.func @transform_1(%arg0: i32, %arg1: i32, %arg2: i32) -> (i32, i32) {
    %c0_i32 = arith.constant 0 : i32
    %c0_i32_0 = arith.constant 0 : i32
    %c0_i32_1 = arith.constant 0 : i32
    return %c0_i32, %c0_i32_0 : i32, i32
  }
  func.func @transform_2(%arg0: i32, %arg1: i32, %arg2: i32) -> (i32, i32) {
    %c0_i32 = arith.constant 0 : i32
    %c0_i32_0 = arith.constant 0 : i32
    %c0_i32_1 = arith.constant 0 : i32
    return %c0_i32, %c0_i32_0 : i32, i32
  }
  func.func @transform_3(%arg0: i32, %arg1: i32, %arg2: i32) -> (i32, i32) {
    %c0_i32 = arith.constant 0 : i32
    %c0_i32_0 = arith.constant 0 : i32
    %c0_i32_1 = arith.constant 0 : i32
    return %c0_i32, %c0_i32_0 : i32, i32
  }
  func.func @transform_4(%arg0: i32, %arg1: i32, %arg2: i32) -> (i32, i32) {
    %c0_i32 = arith.constant 0 : i32
    %c0_i32_0 = arith.constant 0 : i32
    %c0_i32_1 = arith.constant 0 : i32
    return %c0_i32, %c0_i32_0 : i32, i32
  }
  func.func @transform_5(%arg0: i32, %arg1: i32, %arg2: i32) -> (i32, i32) {
    %c0_i32 = arith.constant 0 : i32
    %c0_i32_0 = arith.constant 0 : i32
    %c0_i32_1 = arith.constant 0 : i32
    return %c0_i32, %c0_i32_0 : i32, i32
  }
  func.func @transform_6(%arg0: i32, %arg1: i32, %arg2: i32) -> (i32, i32) {
    %c0_i32 = arith.constant 0 : i32
    %c0_i32_0 = arith.constant 0 : i32
    %c0_i32_1 = arith.constant 0 : i32
    return %c0_i32, %c0_i32_0 : i32, i32
  }
  func.func @transform_7(%arg0: i32, %arg1: i32, %arg2: i32) -> (i32, i32) {
    %c0_i32 = arith.constant 0 : i32
    %c0_i32_0 = arith.constant 0 : i32
    %c0_i32_1 = arith.constant 0 : i32
    return %c0_i32, %c0_i32_0 : i32, i32
  }
  func.func @transform_8(%arg0: i32, %arg1: i32, %arg2: i32) -> (i32, i32) {
    %c0_i32 = arith.constant 0 : i32
    %c0_i32_0 = arith.constant 0 : i32
    %c0_i32_1 = arith.constant 0 : i32
    return %c0_i32, %c0_i32_0 : i32, i32
  }
  func.func @transform_9(%arg0: i32, %arg1: i32, %arg2: i32) -> (i32, i32, i32, i32) {
    %c0_i32 = arith.constant 0 : i32
    %c0_i32_0 = arith.constant 0 : i32
    %c0_i32_1 = arith.constant 0 : i32
    return %arg1, %arg0, %c0_i32, %c0_i32_0 : i32, i32, i32, i32
  }
}

</mosaic_0001>

<llo_original>
// kernel: tpu_custom_call.1
$region0: #{tpu_custom_call.1}
  #allocation0 [shape = 'u32[]', space=smem, size = 0x4, offset = 0x4, fixed_abs, tag = 'smem constant byte address 0x4 - core index']
  #allocation1 [shape = 'u32[72,128]{1,0:T(1,128)}', space=vmem, size = 0x9000, scoped, tag = 'internal scratch']
  %s0 = inlined_call_operand.vmem [shape: f32[2,512,3], index: 0, kind: input, shape index: {}]
  %s1 = inlined_call_operand.vmem [shape: f32[3,64], index: 1, kind: input, shape index: {}]
  %s2 = inlined_call_operand.vmem [shape: f32[1,64], index: 2, kind: input, shape index: {}]
  %s3 = inlined_call_operand.vmem [shape: bf16[64,64], index: 3, kind: input, shape index: {}]
  %s4 = inlined_call_operand.vmem [shape: f32[1,64], index: 4, kind: input, shape index: {}]
  %s5 = inlined_call_operand.vmem [shape: bf16[64,128], index: 5, kind: input, shape index: {}]
  %s6 = inlined_call_operand.vmem [shape: f32[1,128], index: 6, kind: input, shape index: {}]
  %s7 = inlined_call_operand.vmem [shape: bf16[128,1024], index: 7, kind: input, shape index: {}]
  %s8 = inlined_call_operand.vmem [shape: f32[1,1024], index: 8, kind: input, shape index: {}]
  %s9 = inlined_call_operand.hbm [shape: f32[2,1,8,1024], index: 9, kind: output, shape index: {}]
  %s10 = sld [smem:[#allocation0]]
  $region73: #{tpu_custom_call.1} parent=0
    _
  %s12 = ssub.s32 1, %s10
  %s13 = scalar_select 0, %s12, %s10
  $region1: #{tpu_custom_call.1} parent=0
    #allocation2 [shape = 'u8[65536]{0}', space=vmem, size = 0x10000, scoped, tag = 'output window, operand 0']
    #allocation3 [shape = 's32[2]{0}', space=sflag, size = 0x8, scoped, tag = 'scoped memory for tpu_custom_call.1']
    %14 = vsyncpa [#allocation3], 0
    %s15 = scalar_lea.sflag [#allocation3], 1
    %16 = vsyncpa %s15, 0
    loop: start=0, step=1, limit=4
    $region2: #{tpu_custom_call.1} parent=1 // loop_pre_header
      _
    $region3: #{tpu_custom_call.1} parent=1 // loop_header
      %s18 = sphi 0, %s22
      %p19 = scmp.ge.s32.totalorder %s18, 4
      %s25 = sphi 0, %s44
      %s26 = sphi 0, %s40
      %s27 = sphi 0, %s36
      %s28 = sphi 0, %s25
      %s29 = sphi 0, %s26
      %s30 = sphi 0, %s27
      %s31 = sphi 0, %s28
      %s32 = sphi 0, %s29
      %s33 = sphi 0, %s30
      %s51 = sphi 0, %s53
      %s54 = sphi 0, %s51
      %s55 = sphi 0, %s54
      %s71 = sphi 0, %s55
      %s75 = sphi 0, %s75
      %s77 = sphi 0, %s75
      %s78 = sphi 0, %s77
      %s92 = sphi 0, %s78
      %s96 = sphi 0, %s96
      %s98 = sphi 0, %s96
      %s99 = sphi 0, %s98
      %s113 = sphi 0, %s99
      %s117 = sphi 0, %s117
      %s119 = sphi 0, %s117
      %s120 = sphi 0, %s119
      %s134 = sphi 0, %s120
      %s138 = sphi 0, %s138
      %s140 = sphi 0, %s138
      %s141 = sphi 0, %s140
      %s155 = sphi 0, %s141
      %s159 = sphi 0, %s159
      %s161 = sphi 0, %s159
      %s162 = sphi 0, %s161
      %s176 = sphi 0, %s162
      %s180 = sphi 0, %s180
      %s182 = sphi 0, %s180
      %s183 = sphi 0, %s182
      %s197 = sphi 0, %s183
      %s201 = sphi 0, %s201
      %s203 = sphi 0, %s201
      %s204 = sphi 0, %s203
      %s218 = sphi 0, %s204
      %s222 = sphi 0, %s222
      %s224 = sphi 0, %s222
      %s225 = sphi 0, %s224
      %s239 = sphi 0, %s225
      %s247 = sphi 0, %s249
      %s250 = sphi 0, %s247
      %s251 = sphi 0, %s250
      %s267 = sphi 0, %s251
    $region4: #{tpu_custom_call.1} parent=1 // loop_header_branch
      %21 = sbr.rel (%p19) target = $region8
    $region5: #{tpu_custom_call.1} parent=1 // loop_body
      %s23 = ssub.s32 %s18, 1
      %s24 = ssub.s32 %s18, 2
      %s34 = sadd.s32 1, %s27
      %p35 = scmp.ge.s32.totalorder %s34, 1
      %s36 = scalar_select %p35, 0, %s34
      %s37 = sadd.s32 1, %s26
      %s38 = scalar_select %p35, %s37, %s26
      %p39 = scmp.ge.s32.totalorder %s38, 2
      %s40 = scalar_select %p39, 0, %s38
      %s41 = sadd.s32 1, %s25
      %s42 = scalar_select %p39, %s41, %s25
      %p43 = scmp.ge.s32.totalorder %s42, 1
      %s44 = scalar_select %p43, 0, %s42
      %s45 = sadd.s32 %s25, %s27
      %s46 = sadd.s32 %s44, %s36
      %s47 = ssub.s32 %s26, %s40
      %s48 = ssub.s32 %s45, %s46
      %s49 = sor.u32 %s47, %s48
      %p50 = scmp.eq.s32.totalorder %s49, 0
      %s52 = sadd.s32 %s51, 1
      %s53 = scalar_select %p50, %s51, %s52
      %p56 = pneg %p50
      %p57 = scmp.eq.s32.totalorder %s18, 1
      %p58 = por %p56, %p57
      %p59 = scmp.ne.s32.totalorder %s51, %s54
      %p60 = scmp.eq.s32.totalorder %s18, 0
      %p61 = por %p59, %p60
      %p62 = scmp.ne.s32.totalorder %s51, %s54
      %p63 = scmp.eq.s32.totalorder %s23, 1
      %p64 = por %p62, %p63
      %p65 = scmp.ne.s32.totalorder %s54, %s55
      %p66 = scmp.eq.s32.totalorder %s23, 0
      %p67 = por %p65, %p66
      %p68 = scmp.ne.s32.totalorder %s54, %s55
      %p69 = scmp.eq.s32.totalorder %s24, 1
      %p70 = por %p68, %p69
      %p72 = scmp.ne.s32.totalorder %s55, %s71
      %p73 = scmp.eq.s32.totalorder %s24, 0
      %p74 = por %p72, %p73
      %s76 = sadd.s32 %s75, 1
      %p79 = scmp.eq.s32.totalorder %s18, 1
      %p80 = scmp.ne.s32.totalorder %s75, %s77
      %p81 = scmp.eq.s32.totalorder %s18, 0
      %p82 = por %p80, %p81
      %p83 = scmp.ne.s32.totalorder %s75, %s77
      %p84 = scmp.eq.s32.totalorder %s23, 1
      %p85 = por %p83, %p84
      %p86 = scmp.ne.s32.totalorder %s77, %s78
      %p87 = scmp.eq.s32.totalorder %s23, 0
      %p88 = por %p86, %p87
      %p89 = scmp.ne.s32.totalorder %s77, %s78
      %p90 = scmp.eq.s32.totalorder %s24, 1
      %p91 = por %p89, %p90
      %p93 = scmp.ne.s32.totalorder %s78, %s92
      %p94 = scmp.eq.s32.totalorder %s24, 0
      %p95 = por %p93, %p94
      %s97 = sadd.s32 %s96, 1
      %p100 = scmp.eq.s32.totalorder %s18, 1
      %p101 = scmp.ne.s32.totalorder %s96, %s98
      %p102 = scmp.eq.s32.totalorder %s18, 0
      %p103 = por %p101, %p102
      %p104 = scmp.ne.s32.totalorder %s96, %s98
      %p105 = scmp.eq.s32.totalorder %s23, 1
      %p106 = por %p104, %p105
      %p107 = scmp.ne.s32.totalorder %s98, %s99
      %p108 = scmp.eq.s32.totalorder %s23, 0
      %p109 = por %p107, %p108
      %p110 = scmp.ne.s32.totalorder %s98, %s99
      %p111 = scmp.eq.s32.totalorder %s24, 1
      %p112 = por %p110, %p111
      %p114 = scmp.ne.s32.totalorder %s99, %s113
      %p115 = scmp.eq.s32.totalorder %s24, 0
      %p116 = por %p114, %p115
      %s118 = sadd.s32 %s117, 1
      %p121 = scmp.eq.s32.totalorder %s18, 1
      %p122 = scmp.ne.s32.totalorder %s117, %s119
      %p123 = scmp.eq.s32.totalorder %s18, 0
      %p124 = por %p122, %p123
      %p125 = scmp.ne.s32.totalorder %s117, %s119
      %p126 = scmp.eq.s32.totalorder %s23, 1
      %p127 = por %p125, %p126
      %p128 = scmp.ne.s32.totalorder %s119, %s120
      %p129 = scmp.eq.s32.totalorder %s23, 0
      %p130 = por %p128, %p129
      %p131 = scmp.ne.s32.totalorder %s119, %s120
      %p132 = scmp.eq.s32.totalorder %s24, 1
      %p133 = por %p131, %p132
      %p135 = scmp.ne.s32.totalorder %s120, %s134
      %p136 = scmp.eq.s32.totalorder %s24, 0
      %p137 = por %p135, %p136
      %s139 = sadd.s32 %s138, 1
      %p142 = scmp.eq.s32.totalorder %s18, 1
      %p143 = scmp.ne.s32.totalorder %s138, %s140
      %p144 = scmp.eq.s32.totalorder %s18, 0
      %p145 = por %p143, %p144
      %p146 = scmp.ne.s32.totalorder %s138, %s140
      %p147 = scmp.eq.s32.totalorder %s23, 1
      %p148 = por %p146, %p147
      %p149 = scmp.ne.s32.totalorder %s140, %s141
      %p150 = scmp.eq.s32.totalorder %s23, 0
      %p151 = por %p149, %p150
      %p152 = scmp.ne.s32.totalorder %s140, %s141
      %p153 = scmp.eq.s32.totalorder %s24, 1
      %p154 = por %p152, %p153
      %p156 = scmp.ne.s32.totalorder %s141, %s155
      %p157 = scmp.eq.s32.totalorder %s24, 0
      %p158 = por %p156, %p157
      %s160 = sadd.s32 %s159, 1
      %p163 = scmp.eq.s32.totalorder %s18, 1
      %p164 = scmp.ne.s32.totalorder %s159, %s161
      %p165 = scmp.eq.s32.totalorder %s18, 0
      %p166 = por %p164, %p165
      %p167 = scmp.ne.s32.totalorder %s159, %s161
      %p168 = scmp.eq.s32.totalorder %s23, 1
      %p169 = por %p167, %p168
      %p170 = scmp.ne.s32.totalorder %s161, %s162
      %p171 = scmp.eq.s32.totalorder %s23, 0
      %p172 = por %p170, %p171
      %p173 = scmp.ne.s32.totalorder %s161, %s162
      %p174 = scmp.eq.s32.totalorder %s24, 1
      %p175 = por %p173, %p174
      %p177 = scmp.ne.s32.totalorder %s162, %s176
      %p178 = scmp.eq.s32.totalorder %s24, 0
      %p179 = por %p177, %p178
      %s181 = sadd.s32 %s180, 1
      %p184 = scmp.eq.s32.totalorder %s18, 1
      %p185 = scmp.ne.s32.totalorder %s180, %s182
      %p186 = scmp.eq.s32.totalorder %s18, 0
      %p187 = por %p185, %p186
      %p188 = scmp.ne.s32.totalorder %s180, %s182
      %p189 = scmp.eq.s32.totalorder %s23, 1
      %p190 = por %p188, %p189
      %p191 = scmp.ne.s32.totalorder %s182, %s183
      %p192 = scmp.eq.s32.totalorder %s23, 0
      %p193 = por %p191, %p192
      %p194 = scmp.ne.s32.totalorder %s182, %s183
      %p195 = scmp.eq.s32.totalorder %s24, 1
      %p196 = por %p194, %p195
      %p198 = scmp.ne.s32.totalorder %s183, %s197
      %p199 = scmp.eq.s32.totalorder %s24, 0
      %p200 = por %p198, %p199
      %s202 = sadd.s32 %s201, 1
      %p205 = scmp.eq.s32.totalorder %s18, 1
      %p206 = scmp.ne.s32.totalorder %s201, %s203
      %p207 = scmp.eq.s32.totalorder %s18, 0
      %p208 = por %p206, %p207
      %p209 = scmp.ne.s32.totalorder %s201, %s203
      %p210 = scmp.eq.s32.totalorder %s23, 1
      %p211 = por %p209, %p210
      %p212 = scmp.ne.s32.totalorder %s203, %s204
      %p213 = scmp.eq.s32.totalorder %s23, 0
      %p214 = por %p212, %p213
      %p215 = scmp.ne.s32.totalorder %s203, %s204
      %p216 = scmp.eq.s32.totalorder %s24, 1
      %p217 = por %p215, %p216
      %p219 = scmp.ne.s32.totalorder %s204, %s218
      %p220 = scmp.eq.s32.totalorder %s24, 0
      %p221 = por %p219, %p220
      %s223 = sadd.s32 %s222, 1
      %p226 = scmp.eq.s32.totalorder %s18, 1
      %p227 = scmp.ne.s32.totalorder %s222, %s224
      %p228 = scmp.eq.s32.totalorder %s18, 0
      %p229 = por %p227, %p228
      %p230 = scmp.ne.s32.totalorder %s222, %s224
      %p231 = scmp.eq.s32.totalorder %s23, 1
      %p232 = por %p230, %p231
      %p233 = scmp.ne.s32.totalorder %s224, %s225
      %p234 = scmp.eq.s32.totalorder %s23, 0
      %p235 = por %p233, %p234
      %p236 = scmp.ne.s32.totalorder %s224, %s225
      %p237 = scmp.eq.s32.totalorder %s24, 1
      %p238 = por %p236, %p237
      %p240 = scmp.ne.s32.totalorder %s225, %s239
      %p241 = scmp.eq.s32.totalorder %s24, 0
      %p242 = por %p240, %p241
      %s243 = ssub.s32 %s26, %s40
      %s244 = ssub.s32 %s25, %s44
      %s245 = sor.u32 %s243, %s244
      %p246 = scmp.eq.s32.totalorder %s245, 0
      %s248 = sadd.s32 %s247, 1
      %s249 = scalar_select %p246, %s247, %s248
      %p252 = pneg %p246
      %p253 = scmp.eq.s32.totalorder %s18, 1
      %p254 = por %p252, %p253
      %p255 = scmp.ne.s32.totalorder %s247, %s250
      %p256 = scmp.eq.s32.totalorder %s18, 0
      %p257 = por %p255, %p256
      %p258 = scmp.ne.s32.totalorder %s247, %s250
      %p259 = scmp.eq.s32.totalorder %s23, 1
      %p260 = por %p258, %p259
      %p261 = scmp.ne.s32.totalorder %s250, %s251
      %p262 = scmp.eq.s32.totalorder %s23, 0
      %p263 = por %p261, %p262
      %p264 = scmp.ne.s32.totalorder %s250, %s251
      %p265 = scmp.eq.s32.totalorder %s24, 1
      %p266 = por %p264, %p265
      %p268 = scmp.ne.s32.totalorder %s251, %s267
      %p269 = scmp.eq.s32.totalorder %s24, 0
      %p270 = por %p268, %p269
      %p271 = scmp.le.s32.totalorder 1, %s18
      %p272 = scmp.lt.s32.totalorder %s18, 3
      %p273 = pnand %p271, %p272
      %p274 = pneg %p273
      // Predicated region
      $region9: #{tpu_custom_call.1} parent=5 // pred_check
        _
      $region10: #{tpu_custom_call.1} parent=5 // pred_check_branch
        %276 = sbr.rel (%p273) target = $region12
      $region11: #{tpu_custom_call.1} parent=5 // pred_region
        %s277 = ssub.s32 %s18, 1
        // Predicated region
        $region13: #{tpu_custom_call.1} parent=11 // pred_check
          %p278 = pneg %p88
        $region14: #{tpu_custom_call.1} parent=11 // pred_check_branch
          %280 = sbr.rel (%p278) target = $region16
        $region15: #{tpu_custom_call.1} parent=11 // pred_region
          _
        $region16: #{tpu_custom_call.1} parent=11 // pred_fallthru
          _
        // Predicated region
        $region17: #{tpu_custom_call.1} parent=11 // pred_check
          %p281 = pneg %p109
        $region18: #{tpu_custom_call.1} parent=11 // pred_check_branch
          %283 = sbr.rel (%p281) target = $region20
        $region19: #{tpu_custom_call.1} parent=11 // pred_region
          _
        $region20: #{tpu_custom_call.1} parent=11 // pred_fallthru
          _
        // Predicated region
        $region21: #{tpu_custom_call.1} parent=11 // pred_check
          %p284 = pneg %p130
        $region22: #{tpu_custom_call.1} parent=11 // pred_check_branch
          %286 = sbr.rel (%p284) target = $region24
        $region23: #{tpu_custom_call.1} parent=11 // pred_region
          _
        $region24: #{tpu_custom_call.1} parent=11 // pred_fallthru
          _
        // Predicated region
        $region25: #{tpu_custom_call.1} parent=11 // pred_check
          %p287 = pneg %p151
        $region26: #{tpu_custom_call.1} parent=11 // pred_check_branch
          %289 = sbr.rel (%p287) target = $region28
        $region27: #{tpu_custom_call.1} parent=11 // pred_region
          _
        $region28: #{tpu_custom_call.1} parent=11 // pred_fallthru
          _
        // Predicated region
        $region29: #{tpu_custom_call.1} parent=11 // pred_check
          %p290 = pneg %p172
        $region30: #{tpu_custom_call.1} parent=11 // pred_check_branch
          %292 = sbr.rel (%p290) target = $region32
        $region31: #{tpu_custom_call.1} parent=11 // pred_region
          _
        $region32: #{tpu_custom_call.1} parent=11 // pred_fallthru
          _
        // Predicated region
        $region33: #{tpu_custom_call.1} parent=11 // pred_check
          %p293 = pneg %p193
        $region34: #{tpu_custom_call.1} parent=11 // pred_check_branch
          %295 = sbr.rel (%p293) target = $region36
        $region35: #{tpu_custom_call.1} parent=11 // pred_region
          _
        $region36: #{tpu_custom_call.1} parent=11 // pred_fallthru
          _
        // Predicated region
        $region37: #{tpu_custom_call.1} parent=11 // pred_check
          %p296 = pneg %p214
        $region38: #{tpu_custom_call.1} parent=11 // pred_check_branch
          %298 = sbr.rel (%p296) target = $region40
        $region39: #{tpu_custom_call.1} parent=11 // pred_region
          _
        $region40: #{tpu_custom_call.1} parent=11 // pred_fallthru
          _
        // Predicated region
        $region41: #{tpu_custom_call.1} parent=11 // pred_check
          %p299 = pneg %p235
        $region42: #{tpu_custom_call.1} parent=11 // pred_check_branch
          %301 = sbr.rel (%p299) target = $region44
        $region43: #{tpu_custom_call.1} parent=11 // pred_region
          _
        $region44: #{tpu_custom_call.1} parent=11 // pred_fallthru
          _
      $region12: #{tpu_custom_call.1} parent=5 // pred_fallthru
        _
      %p302 = scmp.lt.s32.totalorder %s18, 2
      // Predicated region
      $region45: #{tpu_custom_call.1} parent=5 // pred_check
        %p303 = pneg %p302
      $region46: #{tpu_custom_call.1} parent=5 // pred_check_branch
        %305 = sbr.rel (%p303) target = $region48
      $region47: #{tpu_custom_call.1} parent=5 // pred_region
        // Predicated region
        $region49: #{tpu_custom_call.1} parent=47 // pred_check
          %p306 = pneg %p61
        $region50: #{tpu_custom_call.1} parent=47 // pred_check_branch
          %308 = sbr.rel (%p306) target = $region52
        $region51: #{tpu_custom_call.1} parent=47 // pred_region
          %s309 = sadd.s32 %s25, %s27
          %s310 = smul.u32 64, %s309
          %p311 = scmp.lt.s32.totalorder %s26, 1
          %s312 = scalar_select %p311, %s26, 1
          %p313 = scmp.lt.s32.totalorder %s310, 63
          %s314 = scalar_select %p313, %s310, 63
          %s315 = smul.addr %s312, 64
          %s316 = sadd.s32 %s314, %s315
          %s317 = smul.addr %s316, 8
          %s318 = scalar_lea.vmem %s0, %s317
          %s319 = sadd.s32 %s25, %s27
          %s320 = smul.u32 64, %s319
        $region52: #{tpu_custom_call.1} parent=47 // pred_fallthru
          _
      $region48: #{tpu_custom_call.1} parent=5 // pred_fallthru
        _
      %p321 = scmp.le.s32.totalorder 1, %s18
      %p322 = scmp.lt.s32.totalorder %s18, 3
      %p323 = pnand %p321, %p322
      %p324 = pneg %p323
      // Predicated region
      $region53: #{tpu_custom_call.1} parent=5 // pred_check
        _
      $region54: #{tpu_custom_call.1} parent=5 // pred_check_branch
        %326 = sbr.rel (%p323) target = $region56
      $region55: #{tpu_custom_call.1} parent=5 // pred_region
        %s327 = ssub.s32 %s18, 1
        %s328 = sadd.s32 %s28, %s30
        %s329 = smul.u32 64, %s328
        %p330 = scmp.lt.s32.totalorder %s29, 1
        %s331 = scalar_select %p330, %s29, 1
        %p332 = scmp.lt.s32.totalorder %s329, 63
        %s333 = scalar_select %p332, %s329, 63
        %s334 = smul.addr %s331, 64
        %s335 = sadd.s32 %s333, %s334
        %s336 = smul.addr %s335, 8
        %s337 = scalar_lea.vmem %s0, %s336
        %p338 = pneg %p67
        %p339 = pneg %p64
        %p340 = pneg %p88
        %p341 = pneg %p85
        %p342 = pneg %p109
        %p343 = pneg %p106
        %p344 = pneg %p130
        %p345 = pneg %p127
        %p346 = pneg %p151
        %p347 = pneg %p148
        %p348 = pneg %p172
        %p349 = pneg %p169
        %p350 = pneg %p193
        %p351 = pneg %p190
        %p352 = pneg %p214
        %p353 = pneg %p211
        %p354 = pneg %p235
        %p355 = pneg %p232
        %p356 = pneg %p263
        %p357 = pneg %p260
        %s358 = sand.u32 %s250, 1
        %s359 = scalar_lea.sflag [#allocation3], %s358
        %s360 = sand.u32 %s250, 1
        %s361 = smul.addr %s360, 64
        %s362 = scalar_lea.vmem [#allocation2], %s361
        %s363 = sadd.s32 %s28, %s30
        %s364 = smul.u32 64, %s363
        %p365 = scmp.lt.s32.totalorder %s29, 1
        %s366 = scalar_select %p365, %s29, 1
        %p367 = scmp.lt.s32.totalorder %s364, 63
        %s368 = scalar_select %p367, %s364, 63
        %s369 = smul.addr %s366, 64
        %s370 = sadd.s32 %s368, %s369
        %s371 = smul.addr %s370, 8
        %s372 = scalar_lea.vmem %s0, %s371
        %s373 = sadd.s32 %s28, %s30
        %s374 = smul.u32 64, %s373
        %p376 = scmp.eq.s32.totalorder %s30, 0
        // Predicated region
        $region57: #{tpu_custom_call.1} parent=55 // pred_check
          %p377 = pneg %p376
        $region58: #{tpu_custom_call.1} parent=55 // pred_check_branch
          %379 = sbr.rel (%p377) target = $region60
        $region59: #{tpu_custom_call.1} parent=55 // pred_region
          %380 = vst [vmem:[%s362] sm:$0xff] -inf
          %381 = vst [vmem:[%s362 + $0x8] sm:$0xff] -inf
          %382 = vst [vmem:[%s362 + $0x10] sm:$0xff] -inf
          %383 = vst [vmem:[%s362 + $0x18] sm:$0xff] -inf
          %384 = vst [vmem:[%s362 + $0x20] sm:$0xff] -inf
          %385 = vst [vmem:[%s362 + $0x28] sm:$0xff] -inf
          %386 = vst [vmem:[%s362 + $0x30] sm:$0xff] -inf
          %387 = vst [vmem:[%s362 + $0x38] sm:$0xff] -inf
        $region60: #{tpu_custom_call.1} parent=55 // pred_fallthru
          _
        %v388 = vld [vmem:[%s372] sm:$0xff]
        %v389 = vld [vmem:[%s372 + $0x8] sm:$0xff]
        %v390 = vld [vmem:[%s372 + $0x10] sm:$0xff]
        %v391 = vld [vmem:[%s372 + $0x18] sm:$0xff]
        %v392 = vld [vmem:[%s372 + $0x20] sm:$0xff]
        %v393 = vld [vmem:[%s372 + $0x28] sm:$0xff]
        %v394 = vld [vmem:[%s372 + $0x30] sm:$0xff]
        %v395 = vld [vmem:[%s372 + $0x38] sm:$0xff]
        %v396 = vld [vmem:[%s372 + $0x40] sm:$0xff]
        %v397 = vld [vmem:[%s372 + $0x48] sm:$0xff]
        %v398 = vld [vmem:[%s372 + $0x50] sm:$0xff]
        %v399 = vld [vmem:[%s372 + $0x58] sm:$0xff]
        %v400 = vld [vmem:[%s372 + $0x60] sm:$0xff]
        %v401 = vld [vmem:[%s372 + $0x68] sm:$0xff]
        %v402 = vld [vmem:[%s372 + $0x70] sm:$0xff]
        %v403 = vld [vmem:[%s372 + $0x78] sm:$0xff]
        %v404 = vld [vmem:[%s372 + $0x80] sm:$0xff]
        %v405 = vld [vmem:[%s372 + $0x88] sm:$0xff]
        %v406 = vld [vmem:[%s372 + $0x90] sm:$0xff]
        %v407 = vld [vmem:[%s372 + $0x98] sm:$0xff]
        %v408 = vld [vmem:[%s372 + $0xa0] sm:$0xff]
        %v409 = vld [vmem:[%s372 + $0xa8] sm:$0xff]
        %v410 = vld [vmem:[%s372 + $0xb0] sm:$0xff]
        %v411 = vld [vmem:[%s372 + $0xb8] sm:$0xff]
        %v412 = vld [vmem:[%s372 + $0xc0] sm:$0xff]
        %v413 = vld [vmem:[%s372 + $0xc8] sm:$0xff]
        %v414 = vld [vmem:[%s372 + $0xd0] sm:$0xff]
        %v415 = vld [vmem:[%s372 + $0xd8] sm:$0xff]
        %v416 = vld [vmem:[%s372 + $0xe0] sm:$0xff]
        %v417 = vld [vmem:[%s372 + $0xe8] sm:$0xff]
        %v418 = vld [vmem:[%s372 + $0xf0] sm:$0xff]
        %v419 = vld [vmem:[%s372 + $0xf8] sm:$0xff]
        %v420 = vld [vmem:[%s372 + $0x100] sm:$0xff]
        %v421 = vld [vmem:[%s372 + $0x108] sm:$0xff]
        %v422 = vld [vmem:[%s372 + $0x110] sm:$0xff]
        %v423 = vld [vmem:[%s372 + $0x118] sm:$0xff]
        %v424 = vld [vmem:[%s372 + $0x120] sm:$0xff]
        %v425 = vld [vmem:[%s372 + $0x128] sm:$0xff]
        %v426 = vld [vmem:[%s372 + $0x130] sm:$0xff]
        %v427 = vld [vmem:[%s372 + $0x138] sm:$0xff]
        %v428 = vld [vmem:[%s372 + $0x140] sm:$0xff]
        %v429 = vld [vmem:[%s372 + $0x148] sm:$0xff]
        %v430 = vld [vmem:[%s372 + $0x150] sm:$0xff]
        %v431 = vld [vmem:[%s372 + $0x158] sm:$0xff]
        %v432 = vld [vmem:[%s372 + $0x160] sm:$0xff]
        %v433 = vld [vmem:[%s372 + $0x168] sm:$0xff]
        %v434 = vld [vmem:[%s372 + $0x170] sm:$0xff]
        %v435 = vld [vmem:[%s372 + $0x178] sm:$0xff]
        %v436 = vld [vmem:[%s372 + $0x180] sm:$0xff]
        %v437 = vld [vmem:[%s372 + $0x188] sm:$0xff]
        %v438 = vld [vmem:[%s372 + $0x190] sm:$0xff]
        %v439 = vld [vmem:[%s372 + $0x198] sm:$0xff]
        %v440 = vld [vmem:[%s372 + $0x1a0] sm:$0xff]
        %v441 = vld [vmem:[%s372 + $0x1a8] sm:$0xff]
        %v442 = vld [vmem:[%s372 + $0x1b0] sm:$0xff]
        %v443 = vld [vmem:[%s372 + $0x1b8] sm:$0xff]
        %v444 = vld [vmem:[%s372 + $0x1c0] sm:$0xff]
        %v445 = vld [vmem:[%s372 + $0x1c8] sm:$0xff]
        %v446 = vld [vmem:[%s372 + $0x1d0] sm:$0xff]
        %v447 = vld [vmem:[%s372 + $0x1d8] sm:$0xff]
        %v448 = vld [vmem:[%s372 + $0x1e0] sm:$0xff]
        %v449 = vld [vmem:[%s372 + $0x1e8] sm:$0xff]
        %v450 = vld [vmem:[%s372 + $0x1f0] sm:$0xff]
        %v451 = vld [vmem:[%s372 + $0x1f8] sm:$0xff]
        %v452 = vld [vmem:[%s1] sm:$0x7]
        %454 = vset.pattern.permute.xlu0 0
        %455 = vperm.xlu0 %454, %v388
        %v456 = vpop.permute.xlu0 %455
        %459 = vset.pattern.permute.xlu0 0
        %460 = vperm.xlu0 %459, %v389
        %v461 = vpop.permute.xlu0 %460
        %464 = vset.pattern.permute.xlu0 0
        %465 = vperm.xlu0 %464, %v390
        %v466 = vpop.permute.xlu0 %465
        %469 = vset.pattern.permute.xlu0 0
        %470 = vperm.xlu0 %469, %v391
        %v471 = vpop.permute.xlu0 %470
        %474 = vset.pattern.permute.xlu0 0
        %475 = vperm.xlu0 %474, %v392
        %v476 = vpop.permute.xlu0 %475
        %479 = vset.pattern.permute.xlu0 0
        %480 = vperm.xlu0 %479, %v393
        %v481 = vpop.permute.xlu0 %480
        %484 = vset.pattern.permute.xlu0 0
        %485 = vperm.xlu0 %484, %v394
        %v486 = vpop.permute.xlu0 %485
        %489 = vset.pattern.permute.xlu0 0
        %490 = vperm.xlu0 %489, %v395
        %v491 = vpop.permute.xlu0 %490
        %494 = vset.pattern.permute.xlu0 0
        %495 = vperm.xlu0 %494, %v396
        %v496 = vpop.permute.xlu0 %495
        %499 = vset.pattern.permute.xlu0 0
        %500 = vperm.xlu0 %499, %v397
        %v501 = vpop.permute.xlu0 %500
        %504 = vset.pattern.permute.xlu0 0
        %505 = vperm.xlu0 %504, %v398
        %v506 = vpop.permute.xlu0 %505
        %509 = vset.pattern.permute.xlu0 0
        %510 = vperm.xlu0 %509, %v399
        %v511 = vpop.permute.xlu0 %510
        %514 = vset.pattern.permute.xlu0 0
        %515 = vperm.xlu0 %514, %v400
        %v516 = vpop.permute.xlu0 %515
        %519 = vset.pattern.permute.xlu0 0
        %520 = vperm.xlu0 %519, %v401
        %v521 = vpop.permute.xlu0 %520
        %524 = vset.pattern.permute.xlu0 0
        %525 = vperm.xlu0 %524, %v402
        %v526 = vpop.permute.xlu0 %525
        %529 = vset.pattern.permute.xlu0 0
        %530 = vperm.xlu0 %529, %v403
        %v531 = vpop.permute.xlu0 %530
        %534 = vset.pattern.permute.xlu0 0
        %535 = vperm.xlu0 %534, %v404
        %v536 = vpop.permute.xlu0 %535
        %539 = vset.pattern.permute.xlu0 0
        %540 = vperm.xlu0 %539, %v405
        %v541 = vpop.permute.xlu0 %540
        %544 = vset.pattern.permute.xlu0 0
        %545 = vperm.xlu0 %544, %v406
        %v546 = vpop.permute.xlu0 %545
        %549 = vset.pattern.permute.xlu0 0
        %550 = vperm.xlu0 %549, %v407
        %v551 = vpop.permute.xlu0 %550
        %554 = vset.pattern.permute.xlu0 0
        %555 = vperm.xlu0 %554, %v408
        %v556 = vpop.permute.xlu0 %555
        %559 = vset.pattern.permute.xlu0 0
        %560 = vperm.xlu0 %559, %v409
        %v561 = vpop.permute.xlu0 %560
        %564 = vset.pattern.permute.xlu0 0
        %565 = vperm.xlu0 %564, %v410
        %v566 = vpop.permute.xlu0 %565
        %569 = vset.pattern.permute.xlu0 0
        %570 = vperm.xlu0 %569, %v411
        %v571 = vpop.permute.xlu0 %570
        %574 = vset.pattern.permute.xlu0 0
        %575 = vperm.xlu0 %574, %v412
        %v576 = vpop.permute.xlu0 %575
        %579 = vset.pattern.permute.xlu0 0
        %580 = vperm.xlu0 %579, %v413
        %v581 = vpop.permute.xlu0 %580
        %584 = vset.pattern.permute.xlu0 0
        %585 = vperm.xlu0 %584, %v414
        %v586 = vpop.permute.xlu0 %585
        %589 = vset.pattern.permute.xlu0 0
        %590 = vperm.xlu0 %589, %v415
        %v591 = vpop.permute.xlu0 %590
        %594 = vset.pattern.permute.xlu0 0
        %595 = vperm.xlu0 %594, %v416
        %v596 = vpop.permute.xlu0 %595
        %599 = vset.pattern.permute.xlu0 0
        %600 = vperm.xlu0 %599, %v417
        %v601 = vpop.permute.xlu0 %600
        %604 = vset.pattern.permute.xlu0 0
        %605 = vperm.xlu0 %604, %v418
        %v606 = vpop.permute.xlu0 %605
        %609 = vset.pattern.permute.xlu0 0
        %610 = vperm.xlu0 %609, %v419
        %v611 = vpop.permute.xlu0 %610
        %614 = vset.pattern.permute.xlu0 0
        %615 = vperm.xlu0 %614, %v420
        %v616 = vpop.permute.xlu0 %615
        %619 = vset.pattern.permute.xlu0 0
        %620 = vperm.xlu0 %619, %v421
        %v621 = vpop.permute.xlu0 %620
        %624 = vset.pattern.permute.xlu0 0
        %625 = vperm.xlu0 %624, %v422
        %v626 = vpop.permute.xlu0 %625
        %629 = vset.pattern.permute.xlu0 0
        %630 = vperm.xlu0 %629, %v423
        %v631 = vpop.permute.xlu0 %630
        %634 = vset.pattern.permute.xlu0 0
        %635 = vperm.xlu0 %634, %v424
        %v636 = vpop.permute.xlu0 %635
        %639 = vset.pattern.permute.xlu0 0
        %640 = vperm.xlu0 %639, %v425
        %v641 = vpop.permute.xlu0 %640
        %644 = vset.pattern.permute.xlu0 0
        %645 = vperm.xlu0 %644, %v426
        %v646 = vpop.permute.xlu0 %645
        %649 = vset.pattern.permute.xlu0 0
        %650 = vperm.xlu0 %649, %v427
        %v651 = vpop.permute.xlu0 %650
        %654 = vset.pattern.permute.xlu0 0
        %655 = vperm.xlu0 %654, %v428
        %v656 = vpop.permute.xlu0 %655
        %659 = vset.pattern.permute.xlu0 0
        %660 = vperm.xlu0 %659, %v429
        %v661 = vpop.permute.xlu0 %660
        %664 = vset.pattern.permute.xlu0 0
        %665 = vperm.xlu0 %664, %v430
        %v666 = vpop.permute.xlu0 %665
        %669 = vset.pattern.permute.xlu0 0
        %670 = vperm.xlu0 %669, %v431
        %v671 = vpop.permute.xlu0 %670
        %674 = vset.pattern.permute.xlu0 0
        %675 = vperm.xlu0 %674, %v432
        %v676 = vpop.permute.xlu0 %675
        %679 = vset.pattern.permute.xlu0 0
        %680 = vperm.xlu0 %679, %v433
        %v681 = vpop.permute.xlu0 %680
        %684 = vset.pattern.permute.xlu0 0
        %685 = vperm.xlu0 %684, %v434
        %v686 = vpop.permute.xlu0 %685
        %689 = vset.pattern.permute.xlu0 0
        %690 = vperm.xlu0 %689, %v435
        %v691 = vpop.permute.xlu0 %690
        %694 = vset.pattern.permute.xlu0 0
        %695 = vperm.xlu0 %694, %v436
        %v696 = vpop.permute.xlu0 %695
        %699 = vset.pattern.permute.xlu0 0
        %700 = vperm.xlu0 %699, %v437
        %v701 = vpop.permute.xlu0 %700
        %704 = vset.pattern.permute.xlu0 0
        %705 = vperm.xlu0 %704, %v438
        %v706 = vpop.permute.xlu0 %705
        %709 = vset.pattern.permute.xlu0 0
        %710 = vperm.xlu0 %709, %v439
        %v711 = vpop.permute.xlu0 %710
        %714 = vset.pattern.permute.xlu0 0
        %715 = vperm.xlu0 %714, %v440
        %v716 = vpop.permute.xlu0 %715
        %719 = vset.pattern.permute.xlu0 0
        %720 = vperm.xlu0 %719, %v441
        %v721 = vpop.permute.xlu0 %720
        %724 = vset.pattern.permute.xlu0 0
        %725 = vperm.xlu0 %724, %v442
        %v726 = vpop.permute.xlu0 %725
        %729 = vset.pattern.permute.xlu0 0
        %730 = vperm.xlu0 %729, %v443
        %v731 = vpop.permute.xlu0 %730
        %734 = vset.pattern.permute.xlu0 0
        %735 = vperm.xlu0 %734, %v444
        %v736 = vpop.permute.xlu0 %735
        %739 = vset.pattern.permute.xlu0 0
        %740 = vperm.xlu0 %739, %v445
        %v741 = vpop.permute.xlu0 %740
        %744 = vset.pattern.permute.xlu0 0
        %745 = vperm.xlu0 %744, %v446
        %v746 = vpop.permute.xlu0 %745
        %749 = vset.pattern.permute.xlu0 0
        %750 = vperm.xlu0 %749, %v447
        %v751 = vpop.permute.xlu0 %750
        %754 = vset.pattern.permute.xlu0 0
        %755 = vperm.xlu0 %754, %v448
        %v756 = vpop.permute.xlu0 %755
        %759 = vset.pattern.permute.xlu0 0
        %760 = vperm.xlu0 %759, %v449
        %v761 = vpop.permute.xlu0 %760
        %764 = vset.pattern.permute.xlu0 0
        %765 = vperm.xlu0 %764, %v450
        %v766 = vpop.permute.xlu0 %765
        %769 = vset.pattern.permute.xlu0 0
        %770 = vperm.xlu0 %769, %v451
        %v771 = vpop.permute.xlu0 %770
        %v773 = vperm.slane %v452, 0
        %v774 = vmul.f32 %v456, %v773
        %v775 = vmul.f32 %v461, %v773
        %v776 = vmul.f32 %v466, %v773
        %v777 = vmul.f32 %v471, %v773
        %v778 = vmul.f32 %v476, %v773
        %v779 = vmul.f32 %v481, %v773
        %v780 = vmul.f32 %v486, %v773
        %v781 = vmul.f32 %v491, %v773
        %v782 = vmul.f32 %v496, %v773
        %v783 = vmul.f32 %v501, %v773
        %v784 = vmul.f32 %v506, %v773
        %v785 = vmul.f32 %v511, %v773
        %v786 = vmul.f32 %v516, %v773
        %v787 = vmul.f32 %v521, %v773
        %v788 = vmul.f32 %v526, %v773
        %v789 = vmul.f32 %v531, %v773
        %v790 = vmul.f32 %v536, %v773
        %v791 = vmul.f32 %v541, %v773
        %v792 = vmul.f32 %v546, %v773
        %v793 = vmul.f32 %v551, %v773
        %v794 = vmul.f32 %v556, %v773
        %v795 = vmul.f32 %v561, %v773
        %v796 = vmul.f32 %v566, %v773
        %v797 = vmul.f32 %v571, %v773
        %v798 = vmul.f32 %v576, %v773
        %v799 = vmul.f32 %v581, %v773
        %v800 = vmul.f32 %v586, %v773
        %v801 = vmul.f32 %v591, %v773
        %v802 = vmul.f32 %v596, %v773
        %v803 = vmul.f32 %v601, %v773
        %v804 = vmul.f32 %v606, %v773
        %v805 = vmul.f32 %v611, %v773
        %v806 = vmul.f32 %v616, %v773
        %v807 = vmul.f32 %v621, %v773
        %v808 = vmul.f32 %v626, %v773
        %v809 = vmul.f32 %v631, %v773
        %v810 = vmul.f32 %v636, %v773
        %v811 = vmul.f32 %v641, %v773
        %v812 = vmul.f32 %v646, %v773
        %v813 = vmul.f32 %v651, %v773
        %v814 = vmul.f32 %v656, %v773
        %v815 = vmul.f32 %v661, %v773
        %v816 = vmul.f32 %v666, %v773
        %v817 = vmul.f32 %v671, %v773
        %v818 = vmul.f32 %v676, %v773
        %v819 = vmul.f32 %v681, %v773
        %v820 = vmul.f32 %v686, %v773
        %v821 = vmul.f32 %v691, %v773
        %v822 = vmul.f32 %v696, %v773
        %v823 = vmul.f32 %v701, %v773
        %v824 = vmul.f32 %v706, %v773
        %v825 = vmul.f32 %v711, %v773
        %v826 = vmul.f32 %v716, %v773
        %v827 = vmul.f32 %v721, %v773
        %v828 = vmul.f32 %v726, %v773
        %v829 = vmul.f32 %v731, %v773
        %v830 = vmul.f32 %v736, %v773
        %v831 = vmul.f32 %v741, %v773
        %v832 = vmul.f32 %v746, %v773
        %v833 = vmul.f32 %v751, %v773
        %v834 = vmul.f32 %v756, %v773
        %v835 = vmul.f32 %v761, %v773
        %v836 = vmul.f32 %v766, %v773
        %v837 = vmul.f32 %v771, %v773
        %838 = vset.pattern.permute.xlu0 1
        %839 = vperm.xlu0 %838, %v388
        %v840 = vpop.permute.xlu0 %839
        %842 = vset.pattern.permute.xlu0 1
        %843 = vperm.xlu0 %842, %v389
        %v844 = vpop.permute.xlu0 %843
        %846 = vset.pattern.permute.xlu0 1
        %847 = vperm.xlu0 %846, %v390
        %v848 = vpop.permute.xlu0 %847
        %850 = vset.pattern.permute.xlu0 1
        %851 = vperm.xlu0 %850, %v391
        %v852 = vpop.permute.xlu0 %851
        %854 = vset.pattern.permute.xlu0 1
        %855 = vperm.xlu0 %854, %v392
        %v856 = vpop.permute.xlu0 %855
        %858 = vset.pattern.permute.xlu0 1
        %859 = vperm.xlu0 %858, %v393
        %v860 = vpop.permute.xlu0 %859
        %862 = vset.pattern.permute.xlu0 1
        %863 = vperm.xlu0 %862, %v394
        %v864 = vpop.permute.xlu0 %863
        %866 = vset.pattern.permute.xlu0 1
        %867 = vperm.xlu0 %866, %v395
        %v868 = vpop.permute.xlu0 %867
        %870 = vset.pattern.permute.xlu0 1
        %871 = vperm.xlu0 %870, %v396
        %v872 = vpop.permute.xlu0 %871
        %874 = vset.pattern.permute.xlu0 1
        %875 = vperm.xlu0 %874, %v397
        %v876 = vpop.permute.xlu0 %875
        %878 = vset.pattern.permute.xlu0 1
        %879 = vperm.xlu0 %878, %v398
        %v880 = vpop.permute.xlu0 %879
        %882 = vset.pattern.permute.xlu0 1
        %883 = vperm.xlu0 %882, %v399
        %v884 = vpop.permute.xlu0 %883
        %886 = vset.pattern.permute.xlu0 1
        %887 = vperm.xlu0 %886, %v400
        %v888 = vpop.permute.xlu0 %887
        %890 = vset.pattern.permute.xlu0 1
        %891 = vperm.xlu0 %890, %v401
        %v892 = vpop.permute.xlu0 %891
        %894 = vset.pattern.permute.xlu0 1
        %895 = vperm.xlu0 %894, %v402
        %v896 = vpop.permute.xlu0 %895
        %898 = vset.pattern.permute.xlu0 1
        %899 = vperm.xlu0 %898, %v403
        %v900 = vpop.permute.xlu0 %899
        %902 = vset.pattern.permute.xlu0 1
        %903 = vperm.xlu0 %902, %v404
        %v904 = vpop.permute.xlu0 %903
        %906 = vset.pattern.permute.xlu0 1
        %907 = vperm.xlu0 %906, %v405
        %v908 = vpop.permute.xlu0 %907
        %910 = vset.pattern.permute.xlu0 1
        %911 = vperm.xlu0 %910, %v406
        %v912 = vpop.permute.xlu0 %911
        %914 = vset.pattern.permute.xlu0 1
        %915 = vperm.xlu0 %914, %v407
        %v916 = vpop.permute.xlu0 %915
        %918 = vset.pattern.permute.xlu0 1
        %919 = vperm.xlu0 %918, %v408
        %v920 = vpop.permute.xlu0 %919
        %922 = vset.pattern.permute.xlu0 1
        %923 = vperm.xlu0 %922, %v409
        %v924 = vpop.permute.xlu0 %923
        %926 = vset.pattern.permute.xlu0 1
        %927 = vperm.xlu0 %926, %v410
        %v928 = vpop.permute.xlu0 %927
        %930 = vset.pattern.permute.xlu0 1
        %931 = vperm.xlu0 %930, %v411
        %v932 = vpop.permute.xlu0 %931
        %934 = vset.pattern.permute.xlu0 1
        %935 = vperm.xlu0 %934, %v412
        %v936 = vpop.permute.xlu0 %935
        %938 = vset.pattern.permute.xlu0 1
        %939 = vperm.xlu0 %938, %v413
        %v940 = vpop.permute.xlu0 %939
        %942 = vset.pattern.permute.xlu0 1
        %943 = vperm.xlu0 %942, %v414
        %v944 = vpop.permute.xlu0 %943
        %946 = vset.pattern.permute.xlu0 1
        %947 = vperm.xlu0 %946, %v415
        %v948 = vpop.permute.xlu0 %947
        %950 = vset.pattern.permute.xlu0 1
        %951 = vperm.xlu0 %950, %v416
        %v952 = vpop.permute.xlu0 %951
        %954 = vset.pattern.permute.xlu0 1
        %955 = vperm.xlu0 %954, %v417
        %v956 = vpop.permute.xlu0 %955
        %958 = vset.pattern.permute.xlu0 1
        %959 = vperm.xlu0 %958, %v418
        %v960 = vpop.permute.xlu0 %959
        %962 = vset.pattern.permute.xlu0 1
        %963 = vperm.xlu0 %962, %v419
        %v964 = vpop.permute.xlu0 %963
        %966 = vset.pattern.permute.xlu0 1
        %967 = vperm.xlu0 %966, %v420
        %v968 = vpop.permute.xlu0 %967
        %970 = vset.pattern.permute.xlu0 1
        %971 = vperm.xlu0 %970, %v421
        %v972 = vpop.permute.xlu0 %971
        %974 = vset.pattern.permute.xlu0 1
        %975 = vperm.xlu0 %974, %v422
        %v976 = vpop.permute.xlu0 %975
        %978 = vset.pattern.permute.xlu0 1
        %979 = vperm.xlu0 %978, %v423
        %v980 = vpop.permute.xlu0 %979
        %982 = vset.pattern.permute.xlu0 1
        %983 = vperm.xlu0 %982, %v424
        %v984 = vpop.permute.xlu0 %983
        %986 = vset.pattern.permute.xlu0 1
        %987 = vperm.xlu0 %986, %v425
        %v988 = vpop.permute.xlu0 %987
        %990 = vset.pattern.permute.xlu0 1
        %991 = vperm.xlu0 %990, %v426
        %v992 = vpop.permute.xlu0 %991
        %994 = vset.pattern.permute.xlu0 1
        %995 = vperm.xlu0 %994, %v427
        %v996 = vpop.permute.xlu0 %995
        %998 = vset.pattern.permute.xlu0 1
        %999 = vperm.xlu0 %998, %v428
        %v1000 = vpop.permute.xlu0 %999
        %1002 = vset.pattern.permute.xlu0 1
        %1003 = vperm.xlu0 %1002, %v429
        %v1004 = vpop.permute.xlu0 %1003
        %1006 = vset.pattern.permute.xlu0 1
        %1007 = vperm.xlu0 %1006, %v430
        %v1008 = vpop.permute.xlu0 %1007
        %1010 = vset.pattern.permute.xlu0 1
        %1011 = vperm.xlu0 %1010, %v431
        %v1012 = vpop.permute.xlu0 %1011
        %1014 = vset.pattern.permute.xlu0 1
        %1015 = vperm.xlu0 %1014, %v432
        %v1016 = vpop.permute.xlu0 %1015
        %1018 = vset.pattern.permute.xlu0 1
        %1019 = vperm.xlu0 %1018, %v433
        %v1020 = vpop.permute.xlu0 %1019
        %1022 = vset.pattern.permute.xlu0 1
        %1023 = vperm.xlu0 %1022, %v434
        %v1024 = vpop.permute.xlu0 %1023
        %1026 = vset.pattern.permute.xlu0 1
        %1027 = vperm.xlu0 %1026, %v435
        %v1028 = vpop.permute.xlu0 %1027
        %1030 = vset.pattern.permute.xlu0 1
        %1031 = vperm.xlu0 %1030, %v436
        %v1032 = vpop.permute.xlu0 %1031
        %1034 = vset.pattern.permute.xlu0 1
        %1035 = vperm.xlu0 %1034, %v437
        %v1036 = vpop.permute.xlu0 %1035
        %1038 = vset.pattern.permute.xlu0 1
        %1039 = vperm.xlu0 %1038, %v438
        %v1040 = vpop.permute.xlu0 %1039
        %1042 = vset.pattern.permute.xlu0 1
        %1043 = vperm.xlu0 %1042, %v439
        %v1044 = vpop.permute.xlu0 %1043
        %1046 = vset.pattern.permute.xlu0 1
        %1047 = vperm.xlu0 %1046, %v440
        %v1048 = vpop.permute.xlu0 %1047
        %1050 = vset.pattern.permute.xlu0 1
        %1051 = vperm.xlu0 %1050, %v441
        %v1052 = vpop.permute.xlu0 %1051
        %1054 = vset.pattern.permute.xlu0 1
        %1055 = vperm.xlu0 %1054, %v442
        %v1056 = vpop.permute.xlu0 %1055
        %1058 = vset.pattern.permute.xlu0 1
        %1059 = vperm.xlu0 %1058, %v443
        %v1060 = vpop.permute.xlu0 %1059
        %1062 = vset.pattern.permute.xlu0 1
        %1063 = vperm.xlu0 %1062, %v444
        %v1064 = vpop.permute.xlu0 %1063
        %1066 = vset.pattern.permute.xlu0 1
        %1067 = vperm.xlu0 %1066, %v445
        %v1068 = vpop.permute.xlu0 %1067
        %1070 = vset.pattern.permute.xlu0 1
        %1071 = vperm.xlu0 %1070, %v446
        %v1072 = vpop.permute.xlu0 %1071
        %1074 = vset.pattern.permute.xlu0 1
        %1075 = vperm.xlu0 %1074, %v447
        %v1076 = vpop.permute.xlu0 %1075
        %1078 = vset.pattern.permute.xlu0 1
        %1079 = vperm.xlu0 %1078, %v448
        %v1080 = vpop.permute.xlu0 %1079
        %1082 = vset.pattern.permute.xlu0 1
        %1083 = vperm.xlu0 %1082, %v449
        %v1084 = vpop.permute.xlu0 %1083
        %1086 = vset.pattern.permute.xlu0 1
        %1087 = vperm.xlu0 %1086, %v450
        %v1088 = vpop.permute.xlu0 %1087
        %1090 = vset.pattern.permute.xlu0 1
        %1091 = vperm.xlu0 %1090, %v451
        %v1092 = vpop.permute.xlu0 %1091
        %v1094 = vperm.slane %v452, 1
        %v1095 = vmul.f32 %v840, %v1094
        %v1096 = vmul.f32 %v844, %v1094
        %v1097 = vmul.f32 %v848, %v1094
        %v1098 = vmul.f32 %v852, %v1094
        %v1099 = vmul.f32 %v856, %v1094
        %v1100 = vmul.f32 %v860, %v1094
        %v1101 = vmul.f32 %v864, %v1094
        %v1102 = vmul.f32 %v868, %v1094
        %v1103 = vmul.f32 %v872, %v1094
        %v1104 = vmul.f32 %v876, %v1094
        %v1105 = vmul.f32 %v880, %v1094
        %v1106 = vmul.f32 %v884, %v1094
        %v1107 = vmul.f32 %v888, %v1094
        %v1108 = vmul.f32 %v892, %v1094
        %v1109 = vmul.f32 %v896, %v1094
        %v1110 = vmul.f32 %v900, %v1094
        %v1111 = vmul.f32 %v904, %v1094
        %v1112 = vmul.f32 %v908, %v1094
        %v1113 = vmul.f32 %v912, %v1094
        %v1114 = vmul.f32 %v916, %v1094
        %v1115 = vmul.f32 %v920, %v1094
        %v1116 = vmul.f32 %v924, %v1094
        %v1117 = vmul.f32 %v928, %v1094
        %v1118 = vmul.f32 %v932, %v1094
        %v1119 = vmul.f32 %v936, %v1094
        %v1120 = vmul.f32 %v940, %v1094
        %v1121 = vmul.f32 %v944, %v1094
        %v1122 = vmul.f32 %v948, %v1094
        %v1123 = vmul.f32 %v952, %v1094
        %v1124 = vmul.f32 %v956, %v1094
        %v1125 = vmul.f32 %v960, %v1094
        %v1126 = vmul.f32 %v964, %v1094
        %v1127 = vmul.f32 %v968, %v1094
        %v1128 = vmul.f32 %v972, %v1094
        %v1129 = vmul.f32 %v976, %v1094
        %v1130 = vmul.f32 %v980, %v1094
        %v1131 = vmul.f32 %v984, %v1094
        %v1132 = vmul.f32 %v988, %v1094
        %v1133 = vmul.f32 %v992, %v1094
        %v1134 = vmul.f32 %v996, %v1094
        %v1135 = vmul.f32 %v1000, %v1094
        %v1136 = vmul.f32 %v1004, %v1094
        %v1137 = vmul.f32 %v1008, %v1094
        %v1138 = vmul.f32 %v1012, %v1094
        %v1139 = vmul.f32 %v1016, %v1094
        %v1140 = vmul.f32 %v1020, %v1094
        %v1141 = vmul.f32 %v1024, %v1094
        %v1142 = vmul.f32 %v1028, %v1094
        %v1143 = vmul.f32 %v1032, %v1094
        %v1144 = vmul.f32 %v1036, %v1094
        %v1145 = vmul.f32 %v1040, %v1094
        %v1146 = vmul.f32 %v1044, %v1094
        %v1147 = vmul.f32 %v1048, %v1094
        %v1148 = vmul.f32 %v1052, %v1094
        %v1149 = vmul.f32 %v1056, %v1094
        %v1150 = vmul.f32 %v1060, %v1094
        %v1151 = vmul.f32 %v1064, %v1094
        %v1152 = vmul.f32 %v1068, %v1094
        %v1153 = vmul.f32 %v1072, %v1094
        %v1154 = vmul.f32 %v1076, %v1094
        %v1155 = vmul.f32 %v1080, %v1094
        %v1156 = vmul.f32 %v1084, %v1094
        %v1157 = vmul.f32 %v1088, %v1094
        %v1158 = vmul.f32 %v1092, %v1094
        %v1159 = vadd.f32 %v774, %v1095
        %v1160 = vadd.f32 %v775, %v1096
        %v1161 = vadd.f32 %v776, %v1097
        %v1162 = vadd.f32 %v777, %v1098
        %v1163 = vadd.f32 %v778, %v1099
        %v1164 = vadd.f32 %v779, %v1100
        %v1165 = vadd.f32 %v780, %v1101
        %v1166 = vadd.f32 %v781, %v1102
        %v1167 = vadd.f32 %v782, %v1103
        %v1168 = vadd.f32 %v783, %v1104
        %v1169 = vadd.f32 %v784, %v1105
        %v1170 = vadd.f32 %v785, %v1106
        %v1171 = vadd.f32 %v786, %v1107
        %v1172 = vadd.f32 %v787, %v1108
        %v1173 = vadd.f32 %v788, %v1109
        %v1174 = vadd.f32 %v789, %v1110
        %v1175 = vadd.f32 %v790, %v1111
        %v1176 = vadd.f32 %v791, %v1112
        %v1177 = vadd.f32 %v792, %v1113
        %v1178 = vadd.f32 %v793, %v1114
        %v1179 = vadd.f32 %v794, %v1115
        %v1180 = vadd.f32 %v795, %v1116
        %v1181 = vadd.f32 %v796, %v1117
        %v1182 = vadd.f32 %v797, %v1118
        %v1183 = vadd.f32 %v798, %v1119
        %v1184 = vadd.f32 %v799, %v1120
        %v1185 = vadd.f32 %v800, %v1121
        %v1186 = vadd.f32 %v801, %v1122
        %v1187 = vadd.f32 %v802, %v1123
        %v1188 = vadd.f32 %v803, %v1124
        %v1189 = vadd.f32 %v804, %v1125
        %v1190 = vadd.f32 %v805, %v1126
        %v1191 = vadd.f32 %v806, %v1127
        %v1192 = vadd.f32 %v807, %v1128
        %v1193 = vadd.f32 %v808, %v1129
        %v1194 = vadd.f32 %v809, %v1130
        %v1195 = vadd.f32 %v810, %v1131
        %v1196 = vadd.f32 %v811, %v1132
        %v1197 = vadd.f32 %v812, %v1133
        %v1198 = vadd.f32 %v813, %v1134
        %v1199 = vadd.f32 %v814, %v1135
        %v1200 = vadd.f32 %v815, %v1136
        %v1201 = vadd.f32 %v816, %v1137
        %v1202 = vadd.f32 %v817, %v1138
        %v1203 = vadd.f32 %v818, %v1139
        %v1204 = vadd.f32 %v819, %v1140
        %v1205 = vadd.f32 %v820, %v1141
        %v1206 = vadd.f32 %v821, %v1142
        %v1207 = vadd.f32 %v822, %v1143
        %v1208 = vadd.f32 %v823, %v1144
        %v1209 = vadd.f32 %v824, %v1145
        %v1210 = vadd.f32 %v825, %v1146
        %v1211 = vadd.f32 %v826, %v1147
        %v1212 = vadd.f32 %v827, %v1148
        %v1213 = vadd.f32 %v828, %v1149
        %v1214 = vadd.f32 %v829, %v1150
        %v1215 = vadd.f32 %v830, %v1151
        %v1216 = vadd.f32 %v831, %v1152
        %v1217 = vadd.f32 %v832, %v1153
        %v1218 = vadd.f32 %v833, %v1154
        %v1219 = vadd.f32 %v834, %v1155
        %v1220 = vadd.f32 %v835, %v1156
        %v1221 = vadd.f32 %v836, %v1157
        %v1222 = vadd.f32 %v837, %v1158
        %1223 = vset.pattern.permute.xlu0 2
        %1224 = vperm.xlu0 %1223, %v388
        %v1225 = vpop.permute.xlu0 %1224
        %1227 = vset.pattern.permute.xlu0 2
        %1228 = vperm.xlu0 %1227, %v389
        %v1229 = vpop.permute.xlu0 %1228
        %1231 = vset.pattern.permute.xlu0 2
        %1232 = vperm.xlu0 %1231, %v390
        %v1233 = vpop.permute.xlu0 %1232
        %1235 = vset.pattern.permute.xlu0 2
        %1236 = vperm.xlu0 %1235, %v391
        %v1237 = vpop.permute.xlu0 %1236
        %1239 = vset.pattern.permute.xlu0 2
        %1240 = vperm.xlu0 %1239, %v392
        %v1241 = vpop.permute.xlu0 %1240
        %1243 = vset.pattern.permute.xlu0 2
        %1244 = vperm.xlu0 %1243, %v393
        %v1245 = vpop.permute.xlu0 %1244
        %1247 = vset.pattern.permute.xlu0 2
        %1248 = vperm.xlu0 %1247, %v394
        %v1249 = vpop.permute.xlu0 %1248
        %1251 = vset.pattern.permute.xlu0 2
        %1252 = vperm.xlu0 %1251, %v395
        %v1253 = vpop.permute.xlu0 %1252
        %1255 = vset.pattern.permute.xlu0 2
        %1256 = vperm.xlu0 %1255, %v396
        %v1257 = vpop.permute.xlu0 %1256
        %1259 = vset.pattern.permute.xlu0 2
        %1260 = vperm.xlu0 %1259, %v397
        %v1261 = vpop.permute.xlu0 %1260
        %1263 = vset.pattern.permute.xlu0 2
        %1264 = vperm.xlu0 %1263, %v398
        %v1265 = vpop.permute.xlu0 %1264
        %1267 = vset.pattern.permute.xlu0 2
        %1268 = vperm.xlu0 %1267, %v399
        %v1269 = vpop.permute.xlu0 %1268
        %1271 = vset.pattern.permute.xlu0 2
        %1272 = vperm.xlu0 %1271, %v400
        %v1273 = vpop.permute.xlu0 %1272
        %1275 = vset.pattern.permute.xlu0 2
        %1276 = vperm.xlu0 %1275, %v401
        %v1277 = vpop.permute.xlu0 %1276
        %1279 = vset.pattern.permute.xlu0 2
        %1280 = vperm.xlu0 %1279, %v402
        %v1281 = vpop.permute.xlu0 %1280
        %1283 = vset.pattern.permute.xlu0 2
        %1284 = vperm.xlu0 %1283, %v403
        %v1285 = vpop.permute.xlu0 %1284
        %1287 = vset.pattern.permute.xlu0 2
        %1288 = vperm.xlu0 %1287, %v404
        %v1289 = vpop.permute.xlu0 %1288
        %1291 = vset.pattern.permute.xlu0 2
        %1292 = vperm.xlu0 %1291, %v405
        %v1293 = vpop.permute.xlu0 %1292
        %1295 = vset.pattern.permute.xlu0 2
        %1296 = vperm.xlu0 %1295, %v406
        %v1297 = vpop.permute.xlu0 %1296
        %1299 = vset.pattern.permute.xlu0 2
        %1300 = vperm.xlu0 %1299, %v407
        %v1301 = vpop.permute.xlu0 %1300
        %1303 = vset.pattern.permute.xlu0 2
        %1304 = vperm.xlu0 %1303, %v408
        %v1305 = vpop.permute.xlu0 %1304
        %1307 = vset.pattern.permute.xlu0 2
        %1308 = vperm.xlu0 %1307, %v409
        %v1309 = vpop.permute.xlu0 %1308
        %1311 = vset.pattern.permute.xlu0 2
        %1312 = vperm.xlu0 %1311, %v410
        %v1313 = vpop.permute.xlu0 %1312
        %1315 = vset.pattern.permute.xlu0 2
        %1316 = vperm.xlu0 %1315, %v411
        %v1317 = vpop.permute.xlu0 %1316
        %1319 = vset.pattern.permute.xlu0 2
        %1320 = vperm.xlu0 %1319, %v412
        %v1321 = vpop.permute.xlu0 %1320
        %1323 = vset.pattern.permute.xlu0 2
        %1324 = vperm.xlu0 %1323, %v413
        %v1325 = vpop.permute.xlu0 %1324
        %1327 = vset.pattern.permute.xlu0 2
        %1328 = vperm.xlu0 %1327, %v414
        %v1329 = vpop.permute.xlu0 %1328
        %1331 = vset.pattern.permute.xlu0 2
        %1332 = vperm.xlu0 %1331, %v415
        %v1333 = vpop.permute.xlu0 %1332
        %1335 = vset.pattern.permute.xlu0 2
        %1336 = vperm.xlu0 %1335, %v416
        %v1337 = vpop.permute.xlu0 %1336
        %1339 = vset.pattern.permute.xlu0 2
        %1340 = vperm.xlu0 %1339, %v417
        %v1341 = vpop.permute.xlu0 %1340
        %1343 = vset.pattern.permute.xlu0 2
        %1344 = vperm.xlu0 %1343, %v418
        %v1345 = vpop.permute.xlu0 %1344
        %1347 = vset.pattern.permute.xlu0 2
        %1348 = vperm.xlu0 %1347, %v419
        %v1349 = vpop.permute.xlu0 %1348
        %1351 = vset.pattern.permute.xlu0 2
        %1352 = vperm.xlu0 %1351, %v420
        %v1353 = vpop.permute.xlu0 %1352
        %1355 = vset.pattern.permute.xlu0 2
        %1356 = vperm.xlu0 %1355, %v421
        %v1357 = vpop.permute.xlu0 %1356
        %1359 = vset.pattern.permute.xlu0 2
        %1360 = vperm.xlu0 %1359, %v422
        %v1361 = vpop.permute.xlu0 %1360
        %1363 = vset.pattern.permute.xlu0 2
        %1364 = vperm.xlu0 %1363, %v423
        %v1365 = vpop.permute.xlu0 %1364
        %1367 = vset.pattern.permute.xlu0 2
        %1368 = vperm.xlu0 %1367, %v424
        %v1369 = vpop.permute.xlu0 %1368
        %1371 = vset.pattern.permute.xlu0 2
        %1372 = vperm.xlu0 %1371, %v425
        %v1373 = vpop.permute.xlu0 %1372
        %1375 = vset.pattern.permute.xlu0 2
        %1376 = vperm.xlu0 %1375, %v426
        %v1377 = vpop.permute.xlu0 %1376
        %1379 = vset.pattern.permute.xlu0 2
        %1380 = vperm.xlu0 %1379, %v427
        %v1381 = vpop.permute.xlu0 %1380
        %1383 = vset.pattern.permute.xlu0 2
        %1384 = vperm.xlu0 %1383, %v428
        %v1385 = vpop.permute.xlu0 %1384
        %1387 = vset.pattern.permute.xlu0 2
        %1388 = vperm.xlu0 %1387, %v429
        %v1389 = vpop.permute.xlu0 %1388
        %1391 = vset.pattern.permute.xlu0 2
        %1392 = vperm.xlu0 %1391, %v430
        %v1393 = vpop.permute.xlu0 %1392
        %1395 = vset.pattern.permute.xlu0 2
        %1396 = vperm.xlu0 %1395, %v431
        %v1397 = vpop.permute.xlu0 %1396
        %1399 = vset.pattern.permute.xlu0 2
        %1400 = vperm.xlu0 %1399, %v432
        %v1401 = vpop.permute.xlu0 %1400
        %1403 = vset.pattern.permute.xlu0 2
        %1404 = vperm.xlu0 %1403, %v433
        %v1405 = vpop.permute.xlu0 %1404
        %1407 = vset.pattern.permute.xlu0 2
        %1408 = vperm.xlu0 %1407, %v434
        %v1409 = vpop.permute.xlu0 %1408
        %1411 = vset.pattern.permute.xlu0 2
        %1412 = vperm.xlu0 %1411, %v435
        %v1413 = vpop.permute.xlu0 %1412
        %1415 = vset.pattern.permute.xlu0 2
        %1416 = vperm.xlu0 %1415, %v436
        %v1417 = vpop.permute.xlu0 %1416
        %1419 = vset.pattern.permute.xlu0 2
        %1420 = vperm.xlu0 %1419, %v437
        %v1421 = vpop.permute.xlu0 %1420
        %1423 = vset.pattern.permute.xlu0 2
        %1424 = vperm.xlu0 %1423, %v438
        %v1425 = vpop.permute.xlu0 %1424
        %1427 = vset.pattern.permute.xlu0 2
        %1428 = vperm.xlu0 %1427, %v439
        %v1429 = vpop.permute.xlu0 %1428
        %1431 = vset.pattern.permute.xlu0 2
        %1432 = vperm.xlu0 %1431, %v440
        %v1433 = vpop.permute.xlu0 %1432
        %1435 = vset.pattern.permute.xlu0 2
        %1436 = vperm.xlu0 %1435, %v441
        %v1437 = vpop.permute.xlu0 %1436
        %1439 = vset.pattern.permute.xlu0 2
        %1440 = vperm.xlu0 %1439, %v442
        %v1441 = vpop.permute.xlu0 %1440
        %1443 = vset.pattern.permute.xlu0 2
        %1444 = vperm.xlu0 %1443, %v443
        %v1445 = vpop.permute.xlu0 %1444
        %1447 = vset.pattern.permute.xlu0 2
        %1448 = vperm.xlu0 %1447, %v444
        %v1449 = vpop.permute.xlu0 %1448
        %1451 = vset.pattern.permute.xlu0 2
        %1452 = vperm.xlu0 %1451, %v445
        %v1453 = vpop.permute.xlu0 %1452
        %1455 = vset.pattern.permute.xlu0 2
        %1456 = vperm.xlu0 %1455, %v446
        %v1457 = vpop.permute.xlu0 %1456
        %1459 = vset.pattern.permute.xlu0 2
        %1460 = vperm.xlu0 %1459, %v447
        %v1461 = vpop.permute.xlu0 %1460
        %1463 = vset.pattern.permute.xlu0 2
        %1464 = vperm.xlu0 %1463, %v448
        %v1465 = vpop.permute.xlu0 %1464
        %1467 = vset.pattern.permute.xlu0 2
        %1468 = vperm.xlu0 %1467, %v449
        %v1469 = vpop.permute.xlu0 %1468
        %1471 = vset.pattern.permute.xlu0 2
        %1472 = vperm.xlu0 %1471, %v450
        %v1473 = vpop.permute.xlu0 %1472
        %1475 = vset.pattern.permute.xlu0 2
        %1476 = vperm.xlu0 %1475, %v451
        %v1477 = vpop.permute.xlu0 %1476
        %v1479 = vperm.slane %v452, 2
        %v1480 = vmul.f32 %v1225, %v1479
        %v1481 = vmul.f32 %v1229, %v1479
        %v1482 = vmul.f32 %v1233, %v1479
        %v1483 = vmul.f32 %v1237, %v1479
        %v1484 = vmul.f32 %v1241, %v1479
        %v1485 = vmul.f32 %v1245, %v1479
        %v1486 = vmul.f32 %v1249, %v1479
        %v1487 = vmul.f32 %v1253, %v1479
        %v1488 = vmul.f32 %v1257, %v1479
        %v1489 = vmul.f32 %v1261, %v1479
        %v1490 = vmul.f32 %v1265, %v1479
        %v1491 = vmul.f32 %v1269, %v1479
        %v1492 = vmul.f32 %v1273, %v1479
        %v1493 = vmul.f32 %v1277, %v1479
        %v1494 = vmul.f32 %v1281, %v1479
        %v1495 = vmul.f32 %v1285, %v1479
        %v1496 = vmul.f32 %v1289, %v1479
        %v1497 = vmul.f32 %v1293, %v1479
        %v1498 = vmul.f32 %v1297, %v1479
        %v1499 = vmul.f32 %v1301, %v1479
        %v1500 = vmul.f32 %v1305, %v1479
        %v1501 = vmul.f32 %v1309, %v1479
        %v1502 = vmul.f32 %v1313, %v1479
        %v1503 = vmul.f32 %v1317, %v1479
        %v1504 = vmul.f32 %v1321, %v1479
        %v1505 = vmul.f32 %v1325, %v1479
        %v1506 = vmul.f32 %v1329, %v1479
        %v1507 = vmul.f32 %v1333, %v1479
        %v1508 = vmul.f32 %v1337, %v1479
        %v1509 = vmul.f32 %v1341, %v1479
        %v1510 = vmul.f32 %v1345, %v1479
        %v1511 = vmul.f32 %v1349, %v1479
        %v1512 = vmul.f32 %v1353, %v1479
        %v1513 = vmul.f32 %v1357, %v1479
        %v1514 = vmul.f32 %v1361, %v1479
        %v1515 = vmul.f32 %v1365, %v1479
        %v1516 = vmul.f32 %v1369, %v1479
        %v1517 = vmul.f32 %v1373, %v1479
        %v1518 = vmul.f32 %v1377, %v1479
        %v1519 = vmul.f32 %v1381, %v1479
        %v1520 = vmul.f32 %v1385, %v1479
        %v1521 = vmul.f32 %v1389, %v1479
        %v1522 = vmul.f32 %v1393, %v1479
        %v1523 = vmul.f32 %v1397, %v1479
        %v1524 = vmul.f32 %v1401, %v1479
        %v1525 = vmul.f32 %v1405, %v1479
        %v1526 = vmul.f32 %v1409, %v1479
        %v1527 = vmul.f32 %v1413, %v1479
        %v1528 = vmul.f32 %v1417, %v1479
        %v1529 = vmul.f32 %v1421, %v1479
        %v1530 = vmul.f32 %v1425, %v1479
        %v1531 = vmul.f32 %v1429, %v1479
        %v1532 = vmul.f32 %v1433, %v1479
        %v1533 = vmul.f32 %v1437, %v1479
        %v1534 = vmul.f32 %v1441, %v1479
        %v1535 = vmul.f32 %v1445, %v1479
        %v1536 = vmul.f32 %v1449, %v1479
        %v1537 = vmul.f32 %v1453, %v1479
        %v1538 = vmul.f32 %v1457, %v1479
        %v1539 = vmul.f32 %v1461, %v1479
        %v1540 = vmul.f32 %v1465, %v1479
        %v1541 = vmul.f32 %v1469, %v1479
        %v1542 = vmul.f32 %v1473, %v1479
        %v1543 = vmul.f32 %v1477, %v1479
        %v1544 = vadd.f32 %v1159, %v1480
        %v1545 = vadd.f32 %v1160, %v1481
        %v1546 = vadd.f32 %v1161, %v1482
        %v1547 = vadd.f32 %v1162, %v1483
        %v1548 = vadd.f32 %v1163, %v1484
        %v1549 = vadd.f32 %v1164, %v1485
        %v1550 = vadd.f32 %v1165, %v1486
        %v1551 = vadd.f32 %v1166, %v1487
        %v1552 = vadd.f32 %v1167, %v1488
        %v1553 = vadd.f32 %v1168, %v1489
        %v1554 = vadd.f32 %v1169, %v1490
        %v1555 = vadd.f32 %v1170, %v1491
        %v1556 = vadd.f32 %v1171, %v1492
        %v1557 = vadd.f32 %v1172, %v1493
        %v1558 = vadd.f32 %v1173, %v1494
        %v1559 = vadd.f32 %v1174, %v1495
        %v1560 = vadd.f32 %v1175, %v1496
        %v1561 = vadd.f32 %v1176, %v1497
        %v1562 = vadd.f32 %v1177, %v1498
        %v1563 = vadd.f32 %v1178, %v1499
        %v1564 = vadd.f32 %v1179, %v1500
        %v1565 = vadd.f32 %v1180, %v1501
        %v1566 = vadd.f32 %v1181, %v1502
        %v1567 = vadd.f32 %v1182, %v1503
        %v1568 = vadd.f32 %v1183, %v1504
        %v1569 = vadd.f32 %v1184, %v1505
        %v1570 = vadd.f32 %v1185, %v1506
        %v1571 = vadd.f32 %v1186, %v1507
        %v1572 = vadd.f32 %v1187, %v1508
        %v1573 = vadd.f32 %v1188, %v1509
        %v1574 = vadd.f32 %v1189, %v1510
        %v1575 = vadd.f32 %v1190, %v1511
        %v1576 = vadd.f32 %v1191, %v1512
        %v1577 = vadd.f32 %v1192, %v1513
        %v1578 = vadd.f32 %v1193, %v1514
        %v1579 = vadd.f32 %v1194, %v1515
        %v1580 = vadd.f32 %v1195, %v1516
        %v1581 = vadd.f32 %v1196, %v1517
        %v1582 = vadd.f32 %v1197, %v1518
        %v1583 = vadd.f32 %v1198, %v1519
        %v1584 = vadd.f32 %v1199, %v1520
        %v1585 = vadd.f32 %v1200, %v1521
        %v1586 = vadd.f32 %v1201, %v1522
        %v1587 = vadd.f32 %v1202, %v1523
        %v1588 = vadd.f32 %v1203, %v1524
        %v1589 = vadd.f32 %v1204, %v1525
        %v1590 = vadd.f32 %v1205, %v1526
        %v1591 = vadd.f32 %v1206, %v1527
        %v1592 = vadd.f32 %v1207, %v1528
        %v1593 = vadd.f32 %v1208, %v1529
        %v1594 = vadd.f32 %v1209, %v1530
        %v1595 = vadd.f32 %v1210, %v1531
        %v1596 = vadd.f32 %v1211, %v1532
        %v1597 = vadd.f32 %v1212, %v1533
        %v1598 = vadd.f32 %v1213, %v1534
        %v1599 = vadd.f32 %v1214, %v1535
        %v1600 = vadd.f32 %v1215, %v1536
        %v1601 = vadd.f32 %v1216, %v1537
        %v1602 = vadd.f32 %v1217, %v1538
        %v1603 = vadd.f32 %v1218, %v1539
        %v1604 = vadd.f32 %v1219, %v1540
        %v1605 = vadd.f32 %v1220, %v1541
        %v1606 = vadd.f32 %v1221, %v1542
        %v1607 = vadd.f32 %v1222, %v1543
        %v1608 = vld [vmem:[%s2] sm:$0x1]
        %v1610 = vperm.slane %v1608, 0
        %v1612 = vadd.f32 %v1544, %v1610
        %v1613 = vadd.f32 %v1545, %v1610
        %v1614 = vadd.f32 %v1546, %v1610
        %v1615 = vadd.f32 %v1547, %v1610
        %v1616 = vadd.f32 %v1548, %v1610
        %v1617 = vadd.f32 %v1549, %v1610
        %v1618 = vadd.f32 %v1550, %v1610
        %v1619 = vadd.f32 %v1551, %v1610
        %v1620 = vadd.f32 %v1552, %v1610
        %v1621 = vadd.f32 %v1553, %v1610
        %v1622 = vadd.f32 %v1554, %v1610
        %v1623 = vadd.f32 %v1555, %v1610
        %v1624 = vadd.f32 %v1556, %v1610
        %v1625 = vadd.f32 %v1557, %v1610
        %v1626 = vadd.f32 %v1558, %v1610
        %v1627 = vadd.f32 %v1559, %v1610
        %v1628 = vadd.f32 %v1560, %v1610
        %v1629 = vadd.f32 %v1561, %v1610
        %v1630 = vadd.f32 %v1562, %v1610
        %v1631 = vadd.f32 %v1563, %v1610
        %v1632 = vadd.f32 %v1564, %v1610
        %v1633 = vadd.f32 %v1565, %v1610
        %v1634 = vadd.f32 %v1566, %v1610
        %v1635 = vadd.f32 %v1567, %v1610
        %v1636 = vadd.f32 %v1568, %v1610
        %v1637 = vadd.f32 %v1569, %v1610
        %v1638 = vadd.f32 %v1570, %v1610
        %v1639 = vadd.f32 %v1571, %v1610
        %v1640 = vadd.f32 %v1572, %v1610
        %v1641 = vadd.f32 %v1573, %v1610
        %v1642 = vadd.f32 %v1574, %v1610
        %v1643 = vadd.f32 %v1575, %v1610
        %v1644 = vadd.f32 %v1576, %v1610
        %v1645 = vadd.f32 %v1577, %v1610
        %v1646 = vadd.f32 %v1578, %v1610
        %v1647 = vadd.f32 %v1579, %v1610
        %v1648 = vadd.f32 %v1580, %v1610
        %v1649 = vadd.f32 %v1581, %v1610
        %v1650 = vadd.f32 %v1582, %v1610
        %v1651 = vadd.f32 %v1583, %v1610
        %v1652 = vadd.f32 %v1584, %v1610
        %v1653 = vadd.f32 %v1585, %v1610
        %v1654 = vadd.f32 %v1586, %v1610
        %v1655 = vadd.f32 %v1587, %v1610
        %v1656 = vadd.f32 %v1588, %v1610
        %v1657 = vadd.f32 %v1589, %v1610
        %v1658 = vadd.f32 %v1590, %v1610
        %v1659 = vadd.f32 %v1591, %v1610
        %v1660 = vadd.f32 %v1592, %v1610
        %v1661 = vadd.f32 %v1593, %v1610
        %v1662 = vadd.f32 %v1594, %v1610
        %v1663 = vadd.f32 %v1595, %v1610
        %v1664 = vadd.f32 %v1596, %v1610
        %v1665 = vadd.f32 %v1597, %v1610
        %v1666 = vadd.f32 %v1598, %v1610
        %v1667 = vadd.f32 %v1599, %v1610
        %v1668 = vadd.f32 %v1600, %v1610
        %v1669 = vadd.f32 %v1601, %v1610
        %v1670 = vadd.f32 %v1602, %v1610
        %v1671 = vadd.f32 %v1603, %v1610
        %v1672 = vadd.f32 %v1604, %v1610
        %v1673 = vadd.f32 %v1605, %v1610
        %v1674 = vadd.f32 %v1606, %v1610
        %v1675 = vadd.f32 %v1607, %v1610
        %v1676 = vmax.f32 %v1612, 0.0
        %v1677 = vmax.f32 %v1613, 0.0
        %v1678 = vmax.f32 %v1614, 0.0
        %v1679 = vmax.f32 %v1615, 0.0
        %v1680 = vmax.f32 %v1616, 0.0
        %v1681 = vmax.f32 %v1617, 0.0
        %v1682 = vmax.f32 %v1618, 0.0
        %v1683 = vmax.f32 %v1619, 0.0
        %v1684 = vmax.f32 %v1620, 0.0
        %v1685 = vmax.f32 %v1621, 0.0
        %v1686 = vmax.f32 %v1622, 0.0
        %v1687 = vmax.f32 %v1623, 0.0
        %v1688 = vmax.f32 %v1624, 0.0
        %v1689 = vmax.f32 %v1625, 0.0
        %v1690 = vmax.f32 %v1626, 0.0
        %v1691 = vmax.f32 %v1627, 0.0
        %v1692 = vmax.f32 %v1628, 0.0
        %v1693 = vmax.f32 %v1629, 0.0
        %v1694 = vmax.f32 %v1630, 0.0
        %v1695 = vmax.f32 %v1631, 0.0
        %v1696 = vmax.f32 %v1632, 0.0
        %v1697 = vmax.f32 %v1633, 0.0
        %v1698 = vmax.f32 %v1634, 0.0
        %v1699 = vmax.f32 %v1635, 0.0
        %v1700 = vmax.f32 %v1636, 0.0
        %v1701 = vmax.f32 %v1637, 0.0
        %v1702 = vmax.f32 %v1638, 0.0
        %v1703 = vmax.f32 %v1639, 0.0
        %v1704 = vmax.f32 %v1640, 0.0
        %v1705 = vmax.f32 %v1641, 0.0
        %v1706 = vmax.f32 %v1642, 0.0
        %v1707 = vmax.f32 %v1643, 0.0
        %v1708 = vmax.f32 %v1644, 0.0
        %v1709 = vmax.f32 %v1645, 0.0
        %v1710 = vmax.f32 %v1646, 0.0
        %v1711 = vmax.f32 %v1647, 0.0
        %v1712 = vmax.f32 %v1648, 0.0
        %v1713 = vmax.f32 %v1649, 0.0
        %v1714 = vmax.f32 %v1650, 0.0
        %v1715 = vmax.f32 %v1651, 0.0
        %v1716 = vmax.f32 %v1652, 0.0
        %v1717 = vmax.f32 %v1653, 0.0
        %v1718 = vmax.f32 %v1654, 0.0
        %v1719 = vmax.f32 %v1655, 0.0
        %v1720 = vmax.f32 %v1656, 0.0
        %v1721 = vmax.f32 %v1657, 0.0
        %v1722 = vmax.f32 %v1658, 0.0
        %v1723 = vmax.f32 %v1659, 0.0
        %v1724 = vmax.f32 %v1660, 0.0
        %v1725 = vmax.f32 %v1661, 0.0
        %v1726 = vmax.f32 %v1662, 0.0
        %v1727 = vmax.f32 %v1663, 0.0
        %v1728 = vmax.f32 %v1664, 0.0
        %v1729 = vmax.f32 %v1665, 0.0
        %v1730 = vmax.f32 %v1666, 0.0
        %v1731 = vmax.f32 %v1667, 0.0
        %v1732 = vmax.f32 %v1668, 0.0
        %v1733 = vmax.f32 %v1669, 0.0
        %v1734 = vmax.f32 %v1670, 0.0
        %v1735 = vmax.f32 %v1671, 0.0
        %v1736 = vmax.f32 %v1672, 0.0
        %v1737 = vmax.f32 %v1673, 0.0
        %v1738 = vmax.f32 %v1674, 0.0
        %v1739 = vmax.f32 %v1675, 0.0
        %v1740 = vpack.c.bf16 %v1677, %v1676
        %v1741 = vpack.c.bf16 %v1679, %v1678
        %v1742 = vpack.c.bf16 %v1681, %v1680
        %v1743 = vpack.c.bf16 %v1683, %v1682
        %v1744 = vpack.c.bf16 %v1685, %v1684
        %v1745 = vpack.c.bf16 %v1687, %v1686
        %v1746 = vpack.c.bf16 %v1689, %v1688
        %v1747 = vpack.c.bf16 %v1691, %v1690
        %v1748 = vpack.c.bf16 %v1693, %v1692
        %v1749 = vpack.c.bf16 %v1695, %v1694
        %v1750 = vpack.c.bf16 %v1697, %v1696
        %v1751 = vpack.c.bf16 %v1699, %v1698
        %v1752 = vpack.c.bf16 %v1701, %v1700
        %v1753 = vpack.c.bf16 %v1703, %v1702
        %v1754 = vpack.c.bf16 %v1705, %v1704
        %v1755 = vpack.c.bf16 %v1707, %v1706
        %v1756 = vpack.c.bf16 %v1709, %v1708
        %v1757 = vpack.c.bf16 %v1711, %v1710
        %v1758 = vpack.c.bf16 %v1713, %v1712
        %v1759 = vpack.c.bf16 %v1715, %v1714
        %v1760 = vpack.c.bf16 %v1717, %v1716
        %v1761 = vpack.c.bf16 %v1719, %v1718
        %v1762 = vpack.c.bf16 %v1721, %v1720
        %v1763 = vpack.c.bf16 %v1723, %v1722
        %v1764 = vpack.c.bf16 %v1725, %v1724
        %v1765 = vpack.c.bf16 %v1727, %v1726
        %v1766 = vpack.c.bf16 %v1729, %v1728
        %v1767 = vpack.c.bf16 %v1731, %v1730
        %v1768 = vpack.c.bf16 %v1733, %v1732
        %v1769 = vpack.c.bf16 %v1735, %v1734
        %v1770 = vpack.c.bf16 %v1737, %v1736
        %v1771 = vpack.c.bf16 %v1739, %v1738
        %v1772 = vld [vmem:[%s3] sm:$0xf]
        %v1773 = vld [vmem:[%s3 + $0x4] sm:$0xf]
        %v1774 = vld [vmem:[%s3 + $0x8] sm:$0xf]
        %v1775 = vld [vmem:[%s3 + $0xc] sm:$0xf]
        %v1776 = vld [vmem:[%s3 + $0x10] sm:$0xf]
        %v1777 = vld [vmem:[%s3 + $0x14] sm:$0xf]
        %v1778 = vld [vmem:[%s3 + $0x18] sm:$0xf]
        %v1779 = vld [vmem:[%s3 + $0x1c] sm:$0xf]
        %v1780 = vld [vmem:[%s4] sm:$0x1]
        %v1782 = vperm.slane %v1780, 0
        %v1792 = vunpack.c.l.b16 %v1772
        %v1793 = vunpack.c.l.b16 %v1773
        %v1794 = vunpack.c.l.b16 %v1774
        %v1795 = vunpack.c.l.b16 %v1775
        %v1796 = vunpack.c.l.b16 %v1776
        %v1797 = vunpack.c.l.b16 %v1777
        %v1798 = vunpack.c.l.b16 %v1778
        %v1799 = vunpack.c.l.b16 %v1779
        %v1800 = vpack.c.b16 %v1793, %v1792
        %v1801 = vpack.c.b16 %v1795, %v1794
        %v1802 = vpack.c.b16 %v1797, %v1796
        %v1803 = vpack.c.b16 %v1799, %v1798
        %vm1808 = vcmask 523264
        %v1810 = vsel %vm1808, %v1740, 0
        %v1813 = vsel %vm1808, %v1741, 0
        %v1816 = vsel %vm1808, %v1742, 0
        %v1819 = vsel %vm1808, %v1743, 0
        %v1822 = vsel %vm1808, %v1744, 0
        %v1825 = vsel %vm1808, %v1745, 0
        %v1828 = vsel %vm1808, %v1746, 0
        %v1831 = vsel %vm1808, %v1747, 0
        %v1834 = vsel %vm1808, %v1748, 0
        %v1837 = vsel %vm1808, %v1749, 0
        %v1840 = vsel %vm1808, %v1750, 0
        %v1843 = vsel %vm1808, %v1751, 0
        %v1846 = vsel %vm1808, %v1752, 0
        %v1849 = vsel %vm1808, %v1753, 0
        %v1852 = vsel %vm1808, %v1754, 0
        %v1855 = vsel %vm1808, %v1755, 0
        %v1858 = vsel %vm1808, %v1756, 0
        %v1861 = vsel %vm1808, %v1757, 0
        %v1864 = vsel %vm1808, %v1758, 0
        %v1867 = vsel %vm1808, %v1759, 0
        %v1870 = vsel %vm1808, %v1760, 0
        %v1873 = vsel %vm1808, %v1761, 0
        %v1876 = vsel %vm1808, %v1762, 0
        %v1879 = vsel %vm1808, %v1763, 0
        %v1882 = vsel %vm1808, %v1764, 0
        %v1885 = vsel %vm1808, %v1765, 0
        %v1888 = vsel %vm1808, %v1766, 0
        %v1891 = vsel %vm1808, %v1767, 0
        %v1894 = vsel %vm1808, %v1768, 0
        %v1897 = vsel %vm1808, %v1769, 0
        %v1900 = vsel %vm1808, %v1770, 0
        %v1903 = vsel %vm1808, %v1771, 0
        %1905 = vmatpush.bf16.msra.mxu0 0
        %1906 = vmatpush.bf16.msra.mxu0 0
        %1907 = vmatpush.bf16.msra.mxu0 0
        %1908 = vmatpush.bf16.msra.mxu0 0
        %1909 = vmatpush.bf16.msra.mxu0 %v1803
        %1910 = vmatpush.bf16.msra.mxu0 %v1802
        %1911 = vmatpush.bf16.msra.mxu0 %v1801
        %1912 = vmatpush.bf16.msra.mxu0 %v1800
        %1913 = vmatmul.bf16.gmra.mxu0 %v1810
        %v1914 = vpop.f32.mrf.mxu0
        %v1915 = vadd.f32 %v1782, %v1914
        %v1916 = vpop.f32.mrf.mxu0
        %v1917 = vadd.f32 %v1782, %v1916
        %1918 = vmatmul.bf16.gmra.mxu0 %v1813
        %v1919 = vpop.f32.mrf.mxu0
        %v1920 = vadd.f32 %v1782, %v1919
        %v1921 = vpop.f32.mrf.mxu0
        %v1922 = vadd.f32 %v1782, %v1921
        %1923 = vmatmul.bf16.gmra.mxu0 %v1816
        %v1924 = vpop.f32.mrf.mxu0
        %v1925 = vadd.f32 %v1782, %v1924
        %v1926 = vpop.f32.mrf.mxu0
        %v1927 = vadd.f32 %v1782, %v1926
        %1928 = vmatmul.bf16.gmra.mxu0 %v1819
        %v1929 = vpop.f32.mrf.mxu0
        %v1930 = vadd.f32 %v1782, %v1929
        %v1931 = vpop.f32.mrf.mxu0
        %v1932 = vadd.f32 %v1782, %v1931
        %1933 = vmatmul.bf16.gmra.mxu0 %v1822
        %v1934 = vpop.f32.mrf.mxu0
        %v1935 = vadd.f32 %v1782, %v1934
        %v1936 = vpop.f32.mrf.mxu0
        %v1937 = vadd.f32 %v1782, %v1936
        %1938 = vmatmul.bf16.gmra.mxu0 %v1825
        %v1939 = vpop.f32.mrf.mxu0
        %v1940 = vadd.f32 %v1782, %v1939
        %v1941 = vpop.f32.mrf.mxu0
        %v1942 = vadd.f32 %v1782, %v1941
        %1943 = vmatmul.bf16.gmra.mxu0 %v1828
        %v1944 = vpop.f32.mrf.mxu0
        %v1945 = vadd.f32 %v1782, %v1944
        %v1946 = vpop.f32.mrf.mxu0
        %v1947 = vadd.f32 %v1782, %v1946
        %1948 = vmatmul.bf16.gmra.mxu0 %v1831
        %v1949 = vpop.f32.mrf.mxu0
        %v1950 = vadd.f32 %v1782, %v1949
        %v1951 = vpop.f32.mrf.mxu0
        %v1952 = vadd.f32 %v1782, %v1951
        %1953 = vmatmul.bf16.gmra.mxu0 %v1834
        %v1954 = vpop.f32.mrf.mxu0
        %v1955 = vadd.f32 %v1782, %v1954
        %v1956 = vpop.f32.mrf.mxu0
        %v1957 = vadd.f32 %v1782, %v1956
        %1958 = vmatmul.bf16.gmra.mxu0 %v1837
        %v1959 = vpop.f32.mrf.mxu0
        %v1960 = vadd.f32 %v1782, %v1959
        %v1961 = vpop.f32.mrf.mxu0
        %v1962 = vadd.f32 %v1782, %v1961
        %1963 = vmatmul.bf16.gmra.mxu0 %v1840
        %v1964 = vpop.f32.mrf.mxu0
        %v1965 = vadd.f32 %v1782, %v1964
        %v1966 = vpop.f32.mrf.mxu0
        %v1967 = vadd.f32 %v1782, %v1966
        %1968 = vmatmul.bf16.gmra.mxu0 %v1843
        %v1969 = vpop.f32.mrf.mxu0
        %v1970 = vadd.f32 %v1782, %v1969
        %v1971 = vpop.f32.mrf.mxu0
        %v1972 = vadd.f32 %v1782, %v1971
        %1973 = vmatmul.bf16.gmra.mxu0 %v1846
        %v1974 = vpop.f32.mrf.mxu0
        %v1975 = vadd.f32 %v1782, %v1974
        %v1976 = vpop.f32.mrf.mxu0
        %v1977 = vadd.f32 %v1782, %v1976
        %1978 = vmatmul.bf16.gmra.mxu0 %v1849
        %v1979 = vpop.f32.mrf.mxu0
        %v1980 = vadd.f32 %v1782, %v1979
        %v1981 = vpop.f32.mrf.mxu0
        %v1982 = vadd.f32 %v1782, %v1981
        %1983 = vmatmul.bf16.gmra.mxu0 %v1852
        %v1984 = vpop.f32.mrf.mxu0
        %v1985 = vadd.f32 %v1782, %v1984
        %v1986 = vpop.f32.mrf.mxu0
        %v1987 = vadd.f32 %v1782, %v1986
        %1988 = vmatmul.bf16.gmra.mxu0 %v1855
        %v1989 = vpop.f32.mrf.mxu0
        %v1990 = vadd.f32 %v1782, %v1989
        %v1991 = vpop.f32.mrf.mxu0
        %v1992 = vadd.f32 %v1782, %v1991
        %1993 = vmatmul.bf16.gmra.mxu0 %v1858
        %v1994 = vpop.f32.mrf.mxu0
        %v1995 = vadd.f32 %v1782, %v1994
        %v1996 = vpop.f32.mrf.mxu0
        %v1997 = vadd.f32 %v1782, %v1996
        %1998 = vmatmul.bf16.gmra.mxu0 %v1861
        %v1999 = vpop.f32.mrf.mxu0
        %v2000 = vadd.f32 %v1782, %v1999
        %v2001 = vpop.f32.mrf.mxu0
        %v2002 = vadd.f32 %v1782, %v2001
        %2003 = vmatmul.bf16.gmra.mxu0 %v1864
        %v2004 = vpop.f32.mrf.mxu0
        %v2005 = vadd.f32 %v1782, %v2004
        %v2006 = vpop.f32.mrf.mxu0
        %v2007 = vadd.f32 %v1782, %v2006
        %2008 = vmatmul.bf16.gmra.mxu0 %v1867
        %v2009 = vpop.f32.mrf.mxu0
        %v2010 = vadd.f32 %v1782, %v2009
        %v2011 = vpop.f32.mrf.mxu0
        %v2012 = vadd.f32 %v1782, %v2011
        %2013 = vmatmul.bf16.gmra.mxu0 %v1870
        %v2014 = vpop.f32.mrf.mxu0
        %v2015 = vadd.f32 %v1782, %v2014
        %v2016 = vpop.f32.mrf.mxu0
        %v2017 = vadd.f32 %v1782, %v2016
        %2018 = vmatmul.bf16.gmra.mxu0 %v1873
        %v2019 = vpop.f32.mrf.mxu0
        %v2020 = vadd.f32 %v1782, %v2019
        %v2021 = vpop.f32.mrf.mxu0
        %v2022 = vadd.f32 %v1782, %v2021
        %2023 = vmatmul.bf16.gmra.mxu0 %v1876
        %v2024 = vpop.f32.mrf.mxu0
        %v2025 = vadd.f32 %v1782, %v2024
        %v2026 = vpop.f32.mrf.mxu0
        %v2027 = vadd.f32 %v1782, %v2026
        %2028 = vmatmul.bf16.gmra.mxu0 %v1879
        %v2029 = vpop.f32.mrf.mxu0
        %v2030 = vadd.f32 %v1782, %v2029
        %v2031 = vpop.f32.mrf.mxu0
        %v2032 = vadd.f32 %v1782, %v2031
        %2033 = vmatmul.bf16.gmra.mxu0 %v1882
        %v2034 = vpop.f32.mrf.mxu0
        %v2035 = vadd.f32 %v1782, %v2034
        %v2036 = vpop.f32.mrf.mxu0
        %v2037 = vadd.f32 %v1782, %v2036
        %2038 = vmatmul.bf16.gmra.mxu0 %v1885
        %v2039 = vpop.f32.mrf.mxu0
        %v2040 = vadd.f32 %v1782, %v2039
        %v2041 = vpop.f32.mrf.mxu0
        %v2042 = vadd.f32 %v1782, %v2041
        %2043 = vmatmul.bf16.gmra.mxu0 %v1888
        %v2044 = vpop.f32.mrf.mxu0
        %v2045 = vadd.f32 %v1782, %v2044
        %v2046 = vpop.f32.mrf.mxu0
        %v2047 = vadd.f32 %v1782, %v2046
        %2048 = vmatmul.bf16.gmra.mxu0 %v1891
        %v2049 = vpop.f32.mrf.mxu0
        %v2050 = vadd.f32 %v1782, %v2049
        %v2051 = vpop.f32.mrf.mxu0
        %v2052 = vadd.f32 %v1782, %v2051
        %2053 = vmatmul.bf16.gmra.mxu0 %v1894
        %v2054 = vpop.f32.mrf.mxu0
        %v2055 = vadd.f32 %v1782, %v2054
        %v2056 = vpop.f32.mrf.mxu0
        %v2057 = vadd.f32 %v1782, %v2056
        %2058 = vmatmul.bf16.gmra.mxu0 %v1897
        %v2059 = vpop.f32.mrf.mxu0
        %v2060 = vadd.f32 %v1782, %v2059
        %v2061 = vpop.f32.mrf.mxu0
        %v2062 = vadd.f32 %v1782, %v2061
        %2063 = vmatmul.bf16.gmra.mxu0 %v1900
        %v2064 = vpop.f32.mrf.mxu0
        %v2065 = vadd.f32 %v1782, %v2064
        %v2066 = vpop.f32.mrf.mxu0
        %v2067 = vadd.f32 %v1782, %v2066
        %2068 = vmatmul.bf16.gmra.mxu0 %v1903
        %v2069 = vpop.f32.mrf.mxu0
        %v2070 = vadd.f32 %v1782, %v2069
        %v2071 = vpop.f32.mrf.mxu0
        %v2072 = vadd.f32 %v1782, %v2071
        %2073 = vdwg.mxu0
        %v2074 = vmax.f32 %v1915, 0.0
        %v2075 = vmax.f32 %v1917, 0.0
        %v2076 = vmax.f32 %v1920, 0.0
        %v2077 = vmax.f32 %v1922, 0.0
        %v2078 = vmax.f32 %v1925, 0.0
        %v2079 = vmax.f32 %v1927, 0.0
        %v2080 = vmax.f32 %v1930, 0.0
        %v2081 = vmax.f32 %v1932, 0.0
        %v2082 = vmax.f32 %v1935, 0.0
        %v2083 = vmax.f32 %v1937, 0.0
        %v2084 = vmax.f32 %v1940, 0.0
        %v2085 = vmax.f32 %v1942, 0.0
        %v2086 = vmax.f32 %v1945, 0.0
        %v2087 = vmax.f32 %v1947, 0.0
        %v2088 = vmax.f32 %v1950, 0.0
        %v2089 = vmax.f32 %v1952, 0.0
        %v2090 = vmax.f32 %v1955, 0.0
        %v2091 = vmax.f32 %v1957, 0.0
        %v2092 = vmax.f32 %v1960, 0.0
        %v2093 = vmax.f32 %v1962, 0.0
        %v2094 = vmax.f32 %v1965, 0.0
        %v2095 = vmax.f32 %v1967, 0.0
        %v2096 = vmax.f32 %v1970, 0.0
        %v2097 = vmax.f32 %v1972, 0.0
        %v2098 = vmax.f32 %v1975, 0.0
        %v2099 = vmax.f32 %v1977, 0.0
        %v2100 = vmax.f32 %v1980, 0.0
        %v2101 = vmax.f32 %v1982, 0.0
        %v2102 = vmax.f32 %v1985, 0.0
        %v2103 = vmax.f32 %v1987, 0.0
        %v2104 = vmax.f32 %v1990, 0.0
        %v2105 = vmax.f32 %v1992, 0.0
        %v2106 = vmax.f32 %v1995, 0.0
        %v2107 = vmax.f32 %v1997, 0.0
        %v2108 = vmax.f32 %v2000, 0.0
        %v2109 = vmax.f32 %v2002, 0.0
        %v2110 = vmax.f32 %v2005, 0.0
        %v2111 = vmax.f32 %v2007, 0.0
        %v2112 = vmax.f32 %v2010, 0.0
        %v2113 = vmax.f32 %v2012, 0.0
        %v2114 = vmax.f32 %v2015, 0.0
        %v2115 = vmax.f32 %v2017, 0.0
        %v2116 = vmax.f32 %v2020, 0.0
        %v2117 = vmax.f32 %v2022, 0.0
        %v2118 = vmax.f32 %v2025, 0.0
        %v2119 = vmax.f32 %v2027, 0.0
        %v2120 = vmax.f32 %v2030, 0.0
        %v2121 = vmax.f32 %v2032, 0.0
        %v2122 = vmax.f32 %v2035, 0.0
        %v2123 = vmax.f32 %v2037, 0.0
        %v2124 = vmax.f32 %v2040, 0.0
        %v2125 = vmax.f32 %v2042, 0.0
        %v2126 = vmax.f32 %v2045, 0.0
        %v2127 = vmax.f32 %v2047, 0.0
        %v2128 = vmax.f32 %v2050, 0.0
        %v2129 = vmax.f32 %v2052, 0.0
        %v2130 = vmax.f32 %v2055, 0.0
        %v2131 = vmax.f32 %v2057, 0.0
        %v2132 = vmax.f32 %v2060, 0.0
        %v2133 = vmax.f32 %v2062, 0.0
        %v2134 = vmax.f32 %v2065, 0.0
        %v2135 = vmax.f32 %v2067, 0.0
        %v2136 = vmax.f32 %v2070, 0.0
        %v2137 = vmax.f32 %v2072, 0.0
        %v2138 = vpack.c.bf16 %v2075, %v2074
        %v2139 = vpack.c.bf16 %v2077, %v2076
        %v2140 = vpack.c.bf16 %v2079, %v2078
        %v2141 = vpack.c.bf16 %v2081, %v2080
        %v2142 = vpack.c.bf16 %v2083, %v2082
        %v2143 = vpack.c.bf16 %v2085, %v2084
        %v2144 = vpack.c.bf16 %v2087, %v2086
        %v2145 = vpack.c.bf16 %v2089, %v2088
        %v2146 = vpack.c.bf16 %v2091, %v2090
        %v2147 = vpack.c.bf16 %v2093, %v2092
        %v2148 = vpack.c.bf16 %v2095, %v2094
        %v2149 = vpack.c.bf16 %v2097, %v2096
        %v2150 = vpack.c.bf16 %v2099, %v2098
        %v2151 = vpack.c.bf16 %v2101, %v2100
        %v2152 = vpack.c.bf16 %v2103, %v2102
        %v2153 = vpack.c.bf16 %v2105, %v2104
        %v2154 = vpack.c.bf16 %v2107, %v2106
        %v2155 = vpack.c.bf16 %v2109, %v2108
        %v2156 = vpack.c.bf16 %v2111, %v2110
        %v2157 = vpack.c.bf16 %v2113, %v2112
        %v2158 = vpack.c.bf16 %v2115, %v2114
        %v2159 = vpack.c.bf16 %v2117, %v2116
        %v2160 = vpack.c.bf16 %v2119, %v2118
        %v2161 = vpack.c.bf16 %v2121, %v2120
        %v2162 = vpack.c.bf16 %v2123, %v2122
        %v2163 = vpack.c.bf16 %v2125, %v2124
        %v2164 = vpack.c.bf16 %v2127, %v2126
        %v2165 = vpack.c.bf16 %v2129, %v2128
        %v2166 = vpack.c.bf16 %v2131, %v2130
        %v2167 = vpack.c.bf16 %v2133, %v2132
        %v2168 = vpack.c.bf16 %v2135, %v2134
        %v2169 = vpack.c.bf16 %v2137, %v2136
        %v2170 = vld [vmem:[%s5] sm:$0xf]
        %v2171 = vld [vmem:[%s5 + $0x4] sm:$0xf]
        %v2172 = vld [vmem:[%s5 + $0x8] sm:$0xf]
        %v2173 = vld [vmem:[%s5 + $0xc] sm:$0xf]
        %v2174 = vld [vmem:[%s5 + $0x10] sm:$0xf]
        %v2175 = vld [vmem:[%s5 + $0x14] sm:$0xf]
        %v2176 = vld [vmem:[%s5 + $0x18] sm:$0xf]
        %v2177 = vld [vmem:[%s5 + $0x1c] sm:$0xf]
        %v2178 = vld [vmem:[%s6] sm:$0x1]
        %v2180 = vperm.slane %v2178, 0
        %v2190 = vunpack.c.l.b16 %v2170
        %v2191 = vunpack.c.l.b16 %v2171
        %v2192 = vunpack.c.l.b16 %v2172
        %v2193 = vunpack.c.l.b16 %v2173
        %v2194 = vunpack.c.l.b16 %v2174
        %v2195 = vunpack.c.l.b16 %v2175
        %v2196 = vunpack.c.l.b16 %v2176
        %v2197 = vunpack.c.l.b16 %v2177
        %v2198 = vpack.c.b16 %v2191, %v2190
        %v2199 = vpack.c.b16 %v2193, %v2192
        %v2200 = vpack.c.b16 %v2195, %v2194
        %v2201 = vpack.c.b16 %v2197, %v2196
        %v2207 = vsel %vm1808, %v2138, 0
        %v2210 = vsel %vm1808, %v2139, 0
        %v2213 = vsel %vm1808, %v2140, 0
        %v2216 = vsel %vm1808, %v2141, 0
        %v2219 = vsel %vm1808, %v2142, 0
        %v2222 = vsel %vm1808, %v2143, 0
        %v2225 = vsel %vm1808, %v2144, 0
        %v2228 = vsel %vm1808, %v2145, 0
        %v2231 = vsel %vm1808, %v2146, 0
        %v2234 = vsel %vm1808, %v2147, 0
        %v2237 = vsel %vm1808, %v2148, 0
        %v2240 = vsel %vm1808, %v2149, 0
        %v2243 = vsel %vm1808, %v2150, 0
        %v2246 = vsel %vm1808, %v2151, 0
        %v2249 = vsel %vm1808, %v2152, 0
        %v2252 = vsel %vm1808, %v2153, 0
        %v2255 = vsel %vm1808, %v2154, 0
        %v2258 = vsel %vm1808, %v2155, 0
        %v2261 = vsel %vm1808, %v2156, 0
        %v2264 = vsel %vm1808, %v2157, 0
        %v2267 = vsel %vm1808, %v2158, 0
        %v2270 = vsel %vm1808, %v2159, 0
        %v2273 = vsel %vm1808, %v2160, 0
        %v2276 = vsel %vm1808, %v2161, 0
        %v2279 = vsel %vm1808, %v2162, 0
        %v2282 = vsel %vm1808, %v2163, 0
        %v2285 = vsel %vm1808, %v2164, 0
        %v2288 = vsel %vm1808, %v2165, 0
        %v2291 = vsel %vm1808, %v2166, 0
        %v2294 = vsel %vm1808, %v2167, 0
        %v2297 = vsel %vm1808, %v2168, 0
        %v2300 = vsel %vm1808, %v2169, 0
        %2302 = vmatpush.bf16.msra.mxu0 0
        %2303 = vmatpush.bf16.msra.mxu0 0
        %2304 = vmatpush.bf16.msra.mxu0 0
        %2305 = vmatpush.bf16.msra.mxu0 0
        %2306 = vmatpush.bf16.msra.mxu0 %v2201
        %2307 = vmatpush.bf16.msra.mxu0 %v2200
        %2308 = vmatpush.bf16.msra.mxu0 %v2199
        %2309 = vmatpush.bf16.msra.mxu0 %v2198
        %2310 = vmatmul.bf16.gmra.mxu0 %v2207
        %v2311 = vpop.f32.mrf.mxu0
        %v2312 = vadd.f32 %v2180, %v2311
        %v2313 = vpop.f32.mrf.mxu0
        %v2314 = vadd.f32 %v2180, %v2313
        %2315 = vmatmul.bf16.gmra.mxu0 %v2210
        %v2316 = vpop.f32.mrf.mxu0
        %v2317 = vadd.f32 %v2180, %v2316
        %v2318 = vpop.f32.mrf.mxu0
        %v2319 = vadd.f32 %v2180, %v2318
        %2320 = vmatmul.bf16.gmra.mxu0 %v2213
        %v2321 = vpop.f32.mrf.mxu0
        %v2322 = vadd.f32 %v2180, %v2321
        %v2323 = vpop.f32.mrf.mxu0
        %v2324 = vadd.f32 %v2180, %v2323
        %2325 = vmatmul.bf16.gmra.mxu0 %v2216
        %v2326 = vpop.f32.mrf.mxu0
        %v2327 = vadd.f32 %v2180, %v2326
        %v2328 = vpop.f32.mrf.mxu0
        %v2329 = vadd.f32 %v2180, %v2328
        %2330 = vmatmul.bf16.gmra.mxu0 %v2219
        %v2331 = vpop.f32.mrf.mxu0
        %v2332 = vadd.f32 %v2180, %v2331
        %v2333 = vpop.f32.mrf.mxu0
        %v2334 = vadd.f32 %v2180, %v2333
        %2335 = vmatmul.bf16.gmra.mxu0 %v2222
        %v2336 = vpop.f32.mrf.mxu0
        %v2337 = vadd.f32 %v2180, %v2336
        %v2338 = vpop.f32.mrf.mxu0
        %v2339 = vadd.f32 %v2180, %v2338
        %2340 = vmatmul.bf16.gmra.mxu0 %v2225
        %v2341 = vpop.f32.mrf.mxu0
        %v2342 = vadd.f32 %v2180, %v2341
        %v2343 = vpop.f32.mrf.mxu0
        %v2344 = vadd.f32 %v2180, %v2343
        %2345 = vmatmul.bf16.gmra.mxu0 %v2228
        %v2346 = vpop.f32.mrf.mxu0
        %v2347 = vadd.f32 %v2180, %v2346
        %v2348 = vpop.f32.mrf.mxu0
        %v2349 = vadd.f32 %v2180, %v2348
        %2350 = vmatmul.bf16.gmra.mxu0 %v2231
        %v2351 = vpop.f32.mrf.mxu0
        %v2352 = vadd.f32 %v2180, %v2351
        %v2353 = vpop.f32.mrf.mxu0
        %v2354 = vadd.f32 %v2180, %v2353
        %2355 = vmatmul.bf16.gmra.mxu0 %v2234
        %v2356 = vpop.f32.mrf.mxu0
        %v2357 = vadd.f32 %v2180, %v2356
        %v2358 = vpop.f32.mrf.mxu0
        %v2359 = vadd.f32 %v2180, %v2358
        %2360 = vmatmul.bf16.gmra.mxu0 %v2237
        %v2361 = vpop.f32.mrf.mxu0
        %v2362 = vadd.f32 %v2180, %v2361
        %v2363 = vpop.f32.mrf.mxu0
        %v2364 = vadd.f32 %v2180, %v2363
        %2365 = vmatmul.bf16.gmra.mxu0 %v2240
        %v2366 = vpop.f32.mrf.mxu0
        %v2367 = vadd.f32 %v2180, %v2366
        %v2368 = vpop.f32.mrf.mxu0
        %v2369 = vadd.f32 %v2180, %v2368
        %2370 = vmatmul.bf16.gmra.mxu0 %v2243
        %v2371 = vpop.f32.mrf.mxu0
        %v2372 = vadd.f32 %v2180, %v2371
        %v2373 = vpop.f32.mrf.mxu0
        %v2374 = vadd.f32 %v2180, %v2373
        %2375 = vmatmul.bf16.gmra.mxu0 %v2246
        %v2376 = vpop.f32.mrf.mxu0
        %v2377 = vadd.f32 %v2180, %v2376
        %v2378 = vpop.f32.mrf.mxu0
        %v2379 = vadd.f32 %v2180, %v2378
        %2380 = vmatmul.bf16.gmra.mxu0 %v2249
        %v2381 = vpop.f32.mrf.mxu0
        %v2382 = vadd.f32 %v2180, %v2381
        %v2383 = vpop.f32.mrf.mxu0
        %v2384 = vadd.f32 %v2180, %v2383
        %2385 = vmatmul.bf16.gmra.mxu0 %v2252
        %v2386 = vpop.f32.mrf.mxu0
        %v2387 = vadd.f32 %v2180, %v2386
        %v2388 = vpop.f32.mrf.mxu0
        %v2389 = vadd.f32 %v2180, %v2388
        %2390 = vmatmul.bf16.gmra.mxu0 %v2255
        %v2391 = vpop.f32.mrf.mxu0
        %v2392 = vadd.f32 %v2180, %v2391
        %v2393 = vpop.f32.mrf.mxu0
        %v2394 = vadd.f32 %v2180, %v2393
        %2395 = vmatmul.bf16.gmra.mxu0 %v2258
        %v2396 = vpop.f32.mrf.mxu0
        %v2397 = vadd.f32 %v2180, %v2396
        %v2398 = vpop.f32.mrf.mxu0
        %v2399 = vadd.f32 %v2180, %v2398
        %2400 = vmatmul.bf16.gmra.mxu0 %v2261
        %v2401 = vpop.f32.mrf.mxu0
        %v2402 = vadd.f32 %v2180, %v2401
        %v2403 = vpop.f32.mrf.mxu0
        %v2404 = vadd.f32 %v2180, %v2403
        %2405 = vmatmul.bf16.gmra.mxu0 %v2264
        %v2406 = vpop.f32.mrf.mxu0
        %v2407 = vadd.f32 %v2180, %v2406
        %v2408 = vpop.f32.mrf.mxu0
        %v2409 = vadd.f32 %v2180, %v2408
        %2410 = vmatmul.bf16.gmra.mxu0 %v2267
        %v2411 = vpop.f32.mrf.mxu0
        %v2412 = vadd.f32 %v2180, %v2411
        %v2413 = vpop.f32.mrf.mxu0
        %v2414 = vadd.f32 %v2180, %v2413
        %2415 = vmatmul.bf16.gmra.mxu0 %v2270
        %v2416 = vpop.f32.mrf.mxu0
        %v2417 = vadd.f32 %v2180, %v2416
        %v2418 = vpop.f32.mrf.mxu0
        %v2419 = vadd.f32 %v2180, %v2418
        %2420 = vmatmul.bf16.gmra.mxu0 %v2273
        %v2421 = vpop.f32.mrf.mxu0
        %v2422 = vadd.f32 %v2180, %v2421
        %v2423 = vpop.f32.mrf.mxu0
        %v2424 = vadd.f32 %v2180, %v2423
        %2425 = vmatmul.bf16.gmra.mxu0 %v2276
        %v2426 = vpop.f32.mrf.mxu0
        %v2427 = vadd.f32 %v2180, %v2426
        %v2428 = vpop.f32.mrf.mxu0
        %v2429 = vadd.f32 %v2180, %v2428
        %2430 = vmatmul.bf16.gmra.mxu0 %v2279
        %v2431 = vpop.f32.mrf.mxu0
        %v2432 = vadd.f32 %v2180, %v2431
        %v2433 = vpop.f32.mrf.mxu0
        %v2434 = vadd.f32 %v2180, %v2433
        %2435 = vmatmul.bf16.gmra.mxu0 %v2282
        %v2436 = vpop.f32.mrf.mxu0
        %v2437 = vadd.f32 %v2180, %v2436
        %v2438 = vpop.f32.mrf.mxu0
        %v2439 = vadd.f32 %v2180, %v2438
        %2440 = vmatmul.bf16.gmra.mxu0 %v2285
        %v2441 = vpop.f32.mrf.mxu0
        %v2442 = vadd.f32 %v2180, %v2441
        %v2443 = vpop.f32.mrf.mxu0
        %v2444 = vadd.f32 %v2180, %v2443
        %2445 = vmatmul.bf16.gmra.mxu0 %v2288
        %v2446 = vpop.f32.mrf.mxu0
        %v2447 = vadd.f32 %v2180, %v2446
        %v2448 = vpop.f32.mrf.mxu0
        %v2449 = vadd.f32 %v2180, %v2448
        %2450 = vmatmul.bf16.gmra.mxu0 %v2291
        %v2451 = vpop.f32.mrf.mxu0
        %v2452 = vadd.f32 %v2180, %v2451
        %v2453 = vpop.f32.mrf.mxu0
        %v2454 = vadd.f32 %v2180, %v2453
        %2455 = vmatmul.bf16.gmra.mxu0 %v2294
        %v2456 = vpop.f32.mrf.mxu0
        %v2457 = vadd.f32 %v2180, %v2456
        %v2458 = vpop.f32.mrf.mxu0
        %v2459 = vadd.f32 %v2180, %v2458
        %2460 = vmatmul.bf16.gmra.mxu0 %v2297
        %v2461 = vpop.f32.mrf.mxu0
        %v2462 = vadd.f32 %v2180, %v2461
        %v2463 = vpop.f32.mrf.mxu0
        %v2464 = vadd.f32 %v2180, %v2463
        %2465 = vmatmul.bf16.gmra.mxu0 %v2300
        %v2466 = vpop.f32.mrf.mxu0
        %v2467 = vadd.f32 %v2180, %v2466
        %v2468 = vpop.f32.mrf.mxu0
        %v2469 = vadd.f32 %v2180, %v2468
        %2470 = vdwg.mxu0
        %v2471 = vmax.f32 %v2312, 0.0
        %v2472 = vmax.f32 %v2314, 0.0
        %v2473 = vmax.f32 %v2317, 0.0
        %v2474 = vmax.f32 %v2319, 0.0
        %v2475 = vmax.f32 %v2322, 0.0
        %v2476 = vmax.f32 %v2324, 0.0
        %v2477 = vmax.f32 %v2327, 0.0
        %v2478 = vmax.f32 %v2329, 0.0
        %v2479 = vmax.f32 %v2332, 0.0
        %v2480 = vmax.f32 %v2334, 0.0
        %v2481 = vmax.f32 %v2337, 0.0
        %v2482 = vmax.f32 %v2339, 0.0
        %v2483 = vmax.f32 %v2342, 0.0
        %v2484 = vmax.f32 %v2344, 0.0
        %v2485 = vmax.f32 %v2347, 0.0
        %v2486 = vmax.f32 %v2349, 0.0
        %v2487 = vmax.f32 %v2352, 0.0
        %v2488 = vmax.f32 %v2354, 0.0
        %v2489 = vmax.f32 %v2357, 0.0
        %v2490 = vmax.f32 %v2359, 0.0
        %v2491 = vmax.f32 %v2362, 0.0
        %v2492 = vmax.f32 %v2364, 0.0
        %v2493 = vmax.f32 %v2367, 0.0
        %v2494 = vmax.f32 %v2369, 0.0
        %v2495 = vmax.f32 %v2372, 0.0
        %v2496 = vmax.f32 %v2374, 0.0
        %v2497 = vmax.f32 %v2377, 0.0
        %v2498 = vmax.f32 %v2379, 0.0
        %v2499 = vmax.f32 %v2382, 0.0
        %v2500 = vmax.f32 %v2384, 0.0
        %v2501 = vmax.f32 %v2387, 0.0
        %v2502 = vmax.f32 %v2389, 0.0
        %v2503 = vmax.f32 %v2392, 0.0
        %v2504 = vmax.f32 %v2394, 0.0
        %v2505 = vmax.f32 %v2397, 0.0
        %v2506 = vmax.f32 %v2399, 0.0
        %v2507 = vmax.f32 %v2402, 0.0
        %v2508 = vmax.f32 %v2404, 0.0
        %v2509 = vmax.f32 %v2407, 0.0
        %v2510 = vmax.f32 %v2409, 0.0
        %v2511 = vmax.f32 %v2412, 0.0
        %v2512 = vmax.f32 %v2414, 0.0
        %v2513 = vmax.f32 %v2417, 0.0
        %v2514 = vmax.f32 %v2419, 0.0
        %v2515 = vmax.f32 %v2422, 0.0
        %v2516 = vmax.f32 %v2424, 0.0
        %v2517 = vmax.f32 %v2427, 0.0
        %v2518 = vmax.f32 %v2429, 0.0
        %v2519 = vmax.f32 %v2432, 0.0
        %v2520 = vmax.f32 %v2434, 0.0
        %v2521 = vmax.f32 %v2437, 0.0
        %v2522 = vmax.f32 %v2439, 0.0
        %v2523 = vmax.f32 %v2442, 0.0
        %v2524 = vmax.f32 %v2444, 0.0
        %v2525 = vmax.f32 %v2447, 0.0
        %v2526 = vmax.f32 %v2449, 0.0
        %v2527 = vmax.f32 %v2452, 0.0
        %v2528 = vmax.f32 %v2454, 0.0
        %v2529 = vmax.f32 %v2457, 0.0
        %v2530 = vmax.f32 %v2459, 0.0
        %v2531 = vmax.f32 %v2462, 0.0
        %v2532 = vmax.f32 %v2464, 0.0
        %v2533 = vmax.f32 %v2467, 0.0
        %v2534 = vmax.f32 %v2469, 0.0
        %v2535 = vpack.c.bf16 %v2472, %v2471
        %v2536 = vpack.c.bf16 %v2474, %v2473
        %v2537 = vpack.c.bf16 %v2476, %v2475
        %v2538 = vpack.c.bf16 %v2478, %v2477
        %v2539 = vpack.c.bf16 %v2480, %v2479
        %v2540 = vpack.c.bf16 %v2482, %v2481
        %v2541 = vpack.c.bf16 %v2484, %v2483
        %v2542 = vpack.c.bf16 %v2486, %v2485
        %v2543 = vpack.c.bf16 %v2488, %v2487
        %v2544 = vpack.c.bf16 %v2490, %v2489
        %v2545 = vpack.c.bf16 %v2492, %v2491
        %v2546 = vpack.c.bf16 %v2494, %v2493
        %v2547 = vpack.c.bf16 %v2496, %v2495
        %v2548 = vpack.c.bf16 %v2498, %v2497
        %v2549 = vpack.c.bf16 %v2500, %v2499
        %v2550 = vpack.c.bf16 %v2502, %v2501
        %v2551 = vpack.c.bf16 %v2504, %v2503
        %v2552 = vpack.c.bf16 %v2506, %v2505
        %v2553 = vpack.c.bf16 %v2508, %v2507
        %v2554 = vpack.c.bf16 %v2510, %v2509
        %v2555 = vpack.c.bf16 %v2512, %v2511
        %v2556 = vpack.c.bf16 %v2514, %v2513
        %v2557 = vpack.c.bf16 %v2516, %v2515
        %v2558 = vpack.c.bf16 %v2518, %v2517
        %v2559 = vpack.c.bf16 %v2520, %v2519
        %v2560 = vpack.c.bf16 %v2522, %v2521
        %v2561 = vpack.c.bf16 %v2524, %v2523
        %v2562 = vpack.c.bf16 %v2526, %v2525
        %v2563 = vpack.c.bf16 %v2528, %v2527
        %v2564 = vpack.c.bf16 %v2530, %v2529
        %v2565 = vpack.c.bf16 %v2532, %v2531
        %v2566 = vpack.c.bf16 %v2534, %v2533
        %v2567 = vld [vmem:[%s7] sm:$0xff]
        %v2568 = vld [vmem:[%s7 + $0x20] sm:$0xff]
        %v2569 = vld [vmem:[%s7 + $0x40] sm:$0xff]
        %v2570 = vld [vmem:[%s7 + $0x60] sm:$0xff]
        %v2571 = vld [vmem:[%s7 + $0x80] sm:$0xff]
        %v2572 = vld [vmem:[%s7 + $0xa0] sm:$0xff]
        %v2573 = vld [vmem:[%s7 + $0xc0] sm:$0xff]
        %v2574 = vld [vmem:[%s7 + $0xe0] sm:$0xff]
        %v2575 = vld [vmem:[%s7 + $0x100] sm:$0xff]
        %v2576 = vld [vmem:[%s7 + $0x120] sm:$0xff]
        %v2577 = vld [vmem:[%s7 + $0x140] sm:$0xff]
        %v2578 = vld [vmem:[%s7 + $0x160] sm:$0xff]
        %v2579 = vld [vmem:[%s7 + $0x180] sm:$0xff]
        %v2580 = vld [vmem:[%s7 + $0x1a0] sm:$0xff]
        %v2581 = vld [vmem:[%s7 + $0x1c0] sm:$0xff]
        %v2582 = vld [vmem:[%s7 + $0x1e0] sm:$0xff]
        %v2583 = vld [vmem:[%s8] sm:$0x3]
        %v2585 = vperm.slane %v2583, 0
        %v2586 = vperm.slane %v2583, 1
        %v2605 = vunpack.c.l.b16 %v2567
        %v2606 = vunpack.c.h.b16 %v2567
        %v2607 = vunpack.c.l.b16 %v2568
        %v2608 = vunpack.c.h.b16 %v2568
        %v2609 = vunpack.c.l.b16 %v2569
        %v2610 = vunpack.c.h.b16 %v2569
        %v2611 = vunpack.c.l.b16 %v2570
        %v2612 = vunpack.c.h.b16 %v2570
        %v2613 = vunpack.c.l.b16 %v2571
        %v2614 = vunpack.c.h.b16 %v2571
        %v2615 = vunpack.c.l.b16 %v2572
        %v2616 = vunpack.c.h.b16 %v2572
        %v2617 = vunpack.c.l.b16 %v2573
        %v2618 = vunpack.c.h.b16 %v2573
        %v2619 = vunpack.c.l.b16 %v2574
        %v2620 = vunpack.c.h.b16 %v2574
        %v2621 = vunpack.c.l.b16 %v2575
        %v2622 = vunpack.c.h.b16 %v2575
        %v2623 = vunpack.c.l.b16 %v2576
        %v2624 = vunpack.c.h.b16 %v2576
        %v2625 = vunpack.c.l.b16 %v2577
        %v2626 = vunpack.c.h.b16 %v2577
        %v2627 = vunpack.c.l.b16 %v2578
        %v2628 = vunpack.c.h.b16 %v2578
        %v2629 = vunpack.c.l.b16 %v2579
        %v2630 = vunpack.c.h.b16 %v2579
        %v2631 = vunpack.c.l.b16 %v2580
        %v2632 = vunpack.c.h.b16 %v2580
        %v2633 = vunpack.c.l.b16 %v2581
        %v2634 = vunpack.c.h.b16 %v2581
        %v2635 = vunpack.c.l.b16 %v2582
        %v2636 = vunpack.c.h.b16 %v2582
        %v2637 = vpack.c.b16 %v2607, %v2605
        %v2638 = vpack.c.b16 %v2608, %v2606
        %v2639 = vpack.c.b16 %v2611, %v2609
        %v2640 = vpack.c.b16 %v2612, %v2610
        %v2641 = vpack.c.b16 %v2615, %v2613
        %v2642 = vpack.c.b16 %v2616, %v2614
        %v2643 = vpack.c.b16 %v2619, %v2617
        %v2644 = vpack.c.b16 %v2620, %v2618
        %v2645 = vpack.c.b16 %v2623, %v2621
        %v2646 = vpack.c.b16 %v2624, %v2622
        %v2647 = vpack.c.b16 %v2627, %v2625
        %v2648 = vpack.c.b16 %v2628, %v2626
        %v2649 = vpack.c.b16 %v2631, %v2629
        %v2650 = vpack.c.b16 %v2632, %v2630
        %v2651 = vpack.c.b16 %v2635, %v2633
        %v2652 = vpack.c.b16 %v2636, %v2634
        %2669 = vmatpush.bf16.msra.mxu0 %v2651
        %2670 = vmatpush.bf16.msra.mxu0 %v2649
        %2671 = vmatpush.bf16.msra.mxu0 %v2647
        %2672 = vmatpush.bf16.msra.mxu0 %v2645
        %2673 = vmatpush.bf16.msra.mxu0 %v2643
        %2674 = vmatpush.bf16.msra.mxu0 %v2641
        %2675 = vmatpush.bf16.msra.mxu0 %v2639
        %2676 = vmatpush.bf16.msra.mxu0 %v2637
        %2677 = vmatmul.bf16.gmra.mxu0 %v2535
        %v2678 = vpop.f32.mrf.mxu0
        %v2679 = vadd.f32 %v2585, %v2678
        %v2680 = vpop.f32.mrf.mxu0
        %v2681 = vadd.f32 %v2585, %v2680
        %2682 = vmatmul.bf16.gmra.mxu0 %v2536
        %v2683 = vpop.f32.mrf.mxu0
        %v2684 = vadd.f32 %v2585, %v2683
        %v2685 = vpop.f32.mrf.mxu0
        %v2686 = vadd.f32 %v2585, %v2685
        %2687 = vmatmul.bf16.gmra.mxu0 %v2537
        %v2688 = vpop.f32.mrf.mxu0
        %v2689 = vadd.f32 %v2585, %v2688
        %v2690 = vpop.f32.mrf.mxu0
        %v2691 = vadd.f32 %v2585, %v2690
        %2692 = vmatmul.bf16.gmra.mxu0 %v2538
        %v2693 = vpop.f32.mrf.mxu0
        %v2694 = vadd.f32 %v2585, %v2693
        %v2695 = vpop.f32.mrf.mxu0
        %v2696 = vadd.f32 %v2585, %v2695
        %2697 = vmatmul.bf16.gmra.mxu0 %v2539
        %v2698 = vpop.f32.mrf.mxu0
        %v2699 = vadd.f32 %v2585, %v2698
        %v2700 = vpop.f32.mrf.mxu0
        %v2701 = vadd.f32 %v2585, %v2700
        %2702 = vmatmul.bf16.gmra.mxu0 %v2540
        %v2703 = vpop.f32.mrf.mxu0
        %v2704 = vadd.f32 %v2585, %v2703
        %v2705 = vpop.f32.mrf.mxu0
        %v2706 = vadd.f32 %v2585, %v2705
        %2707 = vmatmul.bf16.gmra.mxu0 %v2541
        %v2708 = vpop.f32.mrf.mxu0
        %v2709 = vadd.f32 %v2585, %v2708
        %v2710 = vpop.f32.mrf.mxu0
        %v2711 = vadd.f32 %v2585, %v2710
        %2712 = vmatmul.bf16.gmra.mxu0 %v2542
        %v2713 = vpop.f32.mrf.mxu0
        %v2714 = vadd.f32 %v2585, %v2713
        %v2715 = vpop.f32.mrf.mxu0
        %v2716 = vadd.f32 %v2585, %v2715
        %2717 = vmatmul.bf16.gmra.mxu0 %v2543
        %v2718 = vpop.f32.mrf.mxu0
        %v2719 = vadd.f32 %v2585, %v2718
        %v2720 = vpop.f32.mrf.mxu0
        %v2721 = vadd.f32 %v2585, %v2720
        %2722 = vmatmul.bf16.gmra.mxu0 %v2544
        %v2723 = vpop.f32.mrf.mxu0
        %v2724 = vadd.f32 %v2585, %v2723
        %v2725 = vpop.f32.mrf.mxu0
        %v2726 = vadd.f32 %v2585, %v2725
        %2727 = vmatmul.bf16.gmra.mxu0 %v2545
        %v2728 = vpop.f32.mrf.mxu0
        %v2729 = vadd.f32 %v2585, %v2728
        %v2730 = vpop.f32.mrf.mxu0
        %v2731 = vadd.f32 %v2585, %v2730
        %2732 = vmatmul.bf16.gmra.mxu0 %v2546
        %v2733 = vpop.f32.mrf.mxu0
        %v2734 = vadd.f32 %v2585, %v2733
        %v2735 = vpop.f32.mrf.mxu0
        %v2736 = vadd.f32 %v2585, %v2735
        %2737 = vmatmul.bf16.gmra.mxu0 %v2547
        %v2738 = vpop.f32.mrf.mxu0
        %v2739 = vadd.f32 %v2585, %v2738
        %v2740 = vpop.f32.mrf.mxu0
        %v2741 = vadd.f32 %v2585, %v2740
        %2742 = vmatmul.bf16.gmra.mxu0 %v2548
        %v2743 = vpop.f32.mrf.mxu0
        %v2744 = vadd.f32 %v2585, %v2743
        %v2745 = vpop.f32.mrf.mxu0
        %v2746 = vadd.f32 %v2585, %v2745
        %2747 = vmatmul.bf16.gmra.mxu0 %v2549
        %v2748 = vpop.f32.mrf.mxu0
        %v2749 = vadd.f32 %v2585, %v2748
        %v2750 = vpop.f32.mrf.mxu0
        %v2751 = vadd.f32 %v2585, %v2750
        %2752 = vmatmul.bf16.gmra.mxu0 %v2550
        %v2753 = vpop.f32.mrf.mxu0
        %v2754 = vadd.f32 %v2585, %v2753
        %v2755 = vpop.f32.mrf.mxu0
        %v2756 = vadd.f32 %v2585, %v2755
        %2757 = vmatmul.bf16.gmra.mxu0 %v2551
        %v2758 = vpop.f32.mrf.mxu0
        %v2759 = vadd.f32 %v2585, %v2758
        %v2760 = vpop.f32.mrf.mxu0
        %v2761 = vadd.f32 %v2585, %v2760
        %2762 = vmatmul.bf16.gmra.mxu0 %v2552
        %v2763 = vpop.f32.mrf.mxu0
        %v2764 = vadd.f32 %v2585, %v2763
        %v2765 = vpop.f32.mrf.mxu0
        %v2766 = vadd.f32 %v2585, %v2765
        %2767 = vmatmul.bf16.gmra.mxu0 %v2553
        %v2768 = vpop.f32.mrf.mxu0
        %v2769 = vadd.f32 %v2585, %v2768
        %v2770 = vpop.f32.mrf.mxu0
        %v2771 = vadd.f32 %v2585, %v2770
        %2772 = vmatmul.bf16.gmra.mxu0 %v2554
        %v2773 = vpop.f32.mrf.mxu0
        %v2774 = vadd.f32 %v2585, %v2773
        %v2775 = vpop.f32.mrf.mxu0
        %v2776 = vadd.f32 %v2585, %v2775
        %2777 = vmatmul.bf16.gmra.mxu0 %v2555
        %v2778 = vpop.f32.mrf.mxu0
        %v2779 = vadd.f32 %v2585, %v2778
        %v2780 = vpop.f32.mrf.mxu0
        %v2781 = vadd.f32 %v2585, %v2780
        %2782 = vmatmul.bf16.gmra.mxu0 %v2556
        %v2783 = vpop.f32.mrf.mxu0
        %v2784 = vadd.f32 %v2585, %v2783
        %v2785 = vpop.f32.mrf.mxu0
        %v2786 = vadd.f32 %v2585, %v2785
        %2787 = vmatmul.bf16.gmra.mxu0 %v2557
        %v2788 = vpop.f32.mrf.mxu0
        %v2789 = vadd.f32 %v2585, %v2788
        %v2790 = vpop.f32.mrf.mxu0
        %v2791 = vadd.f32 %v2585, %v2790
        %2792 = vmatmul.bf16.gmra.mxu0 %v2558
        %v2793 = vpop.f32.mrf.mxu0
        %v2794 = vadd.f32 %v2585, %v2793
        %v2795 = vpop.f32.mrf.mxu0
        %v2796 = vadd.f32 %v2585, %v2795
        %2797 = vmatmul.bf16.gmra.mxu0 %v2559
        %v2798 = vpop.f32.mrf.mxu0
        %v2799 = vadd.f32 %v2585, %v2798
        %v2800 = vpop.f32.mrf.mxu0
        %v2801 = vadd.f32 %v2585, %v2800
        %2802 = vmatmul.bf16.gmra.mxu0 %v2560
        %v2803 = vpop.f32.mrf.mxu0
        %v2804 = vadd.f32 %v2585, %v2803
        %v2805 = vpop.f32.mrf.mxu0
        %v2806 = vadd.f32 %v2585, %v2805
        %2807 = vmatmul.bf16.gmra.mxu0 %v2561
        %v2808 = vpop.f32.mrf.mxu0
        %v2809 = vadd.f32 %v2585, %v2808
        %v2810 = vpop.f32.mrf.mxu0
        %v2811 = vadd.f32 %v2585, %v2810
        %2812 = vmatmul.bf16.gmra.mxu0 %v2562
        %v2813 = vpop.f32.mrf.mxu0
        %v2814 = vadd.f32 %v2585, %v2813
        %v2815 = vpop.f32.mrf.mxu0
        %v2816 = vadd.f32 %v2585, %v2815
        %2817 = vmatmul.bf16.gmra.mxu0 %v2563
        %v2818 = vpop.f32.mrf.mxu0
        %v2819 = vadd.f32 %v2585, %v2818
        %v2820 = vpop.f32.mrf.mxu0
        %v2821 = vadd.f32 %v2585, %v2820
        %2822 = vmatmul.bf16.gmra.mxu0 %v2564
        %v2823 = vpop.f32.mrf.mxu0
        %v2824 = vadd.f32 %v2585, %v2823
        %v2825 = vpop.f32.mrf.mxu0
        %v2826 = vadd.f32 %v2585, %v2825
        %2827 = vmatmul.bf16.gmra.mxu0 %v2565
        %v2828 = vpop.f32.mrf.mxu0
        %v2829 = vadd.f32 %v2585, %v2828
        %v2830 = vpop.f32.mrf.mxu0
        %v2831 = vadd.f32 %v2585, %v2830
        %2832 = vmatmul.bf16.gmra.mxu0 %v2566
        %v2833 = vpop.f32.mrf.mxu0
        %v2834 = vadd.f32 %v2585, %v2833
        %v2835 = vpop.f32.mrf.mxu0
        %v2836 = vadd.f32 %v2585, %v2835
        %2837 = vdwg.mxu0
        %2838 = vmatpush.bf16.msra.mxu0 %v2652
        %2839 = vmatpush.bf16.msra.mxu0 %v2650
        %2840 = vmatpush.bf16.msra.mxu0 %v2648
        %2841 = vmatpush.bf16.msra.mxu0 %v2646
        %2842 = vmatpush.bf16.msra.mxu0 %v2644
        %2843 = vmatpush.bf16.msra.mxu0 %v2642
        %2844 = vmatpush.bf16.msra.mxu0 %v2640
        %2845 = vmatpush.bf16.msra.mxu0 %v2638
        %2846 = vmatmul.bf16.gmra.mxu0 %v2535
        %v2847 = vpop.f32.mrf.mxu0
        %v2848 = vadd.f32 %v2586, %v2847
        %v2849 = vpop.f32.mrf.mxu0
        %v2850 = vadd.f32 %v2586, %v2849
        %2851 = vmatmul.bf16.gmra.mxu0 %v2536
        %v2852 = vpop.f32.mrf.mxu0
        %v2853 = vadd.f32 %v2586, %v2852
        %v2854 = vpop.f32.mrf.mxu0
        %v2855 = vadd.f32 %v2586, %v2854
        %2856 = vmatmul.bf16.gmra.mxu0 %v2537
        %v2857 = vpop.f32.mrf.mxu0
        %v2858 = vadd.f32 %v2586, %v2857
        %v2859 = vpop.f32.mrf.mxu0
        %v2860 = vadd.f32 %v2586, %v2859
        %2861 = vmatmul.bf16.gmra.mxu0 %v2538
        %v2862 = vpop.f32.mrf.mxu0
        %v2863 = vadd.f32 %v2586, %v2862
        %v2864 = vpop.f32.mrf.mxu0
        %v2865 = vadd.f32 %v2586, %v2864
        %2866 = vmatmul.bf16.gmra.mxu0 %v2539
        %v2867 = vpop.f32.mrf.mxu0
        %v2868 = vadd.f32 %v2586, %v2867
        %v2869 = vpop.f32.mrf.mxu0
        %v2870 = vadd.f32 %v2586, %v2869
        %2871 = vmatmul.bf16.gmra.mxu0 %v2540
        %v2872 = vpop.f32.mrf.mxu0
        %v2873 = vadd.f32 %v2586, %v2872
        %v2874 = vpop.f32.mrf.mxu0
        %v2875 = vadd.f32 %v2586, %v2874
        %2876 = vmatmul.bf16.gmra.mxu0 %v2541
        %v2877 = vpop.f32.mrf.mxu0
        %v2878 = vadd.f32 %v2586, %v2877
        %v2879 = vpop.f32.mrf.mxu0
        %v2880 = vadd.f32 %v2586, %v2879
        %2881 = vmatmul.bf16.gmra.mxu0 %v2542
        %v2882 = vpop.f32.mrf.mxu0
        %v2883 = vadd.f32 %v2586, %v2882
        %v2884 = vpop.f32.mrf.mxu0
        %v2885 = vadd.f32 %v2586, %v2884
        %2886 = vmatmul.bf16.gmra.mxu0 %v2543
        %v2887 = vpop.f32.mrf.mxu0
        %v2888 = vadd.f32 %v2586, %v2887
        %v2889 = vpop.f32.mrf.mxu0
        %v2890 = vadd.f32 %v2586, %v2889
        %2891 = vmatmul.bf16.gmra.mxu0 %v2544
        %v2892 = vpop.f32.mrf.mxu0
        %v2893 = vadd.f32 %v2586, %v2892
        %v2894 = vpop.f32.mrf.mxu0
        %v2895 = vadd.f32 %v2586, %v2894
        %2896 = vmatmul.bf16.gmra.mxu0 %v2545
        %v2897 = vpop.f32.mrf.mxu0
        %v2898 = vadd.f32 %v2586, %v2897
        %v2899 = vpop.f32.mrf.mxu0
        %v2900 = vadd.f32 %v2586, %v2899
        %2901 = vmatmul.bf16.gmra.mxu0 %v2546
        %v2902 = vpop.f32.mrf.mxu0
        %v2903 = vadd.f32 %v2586, %v2902
        %v2904 = vpop.f32.mrf.mxu0
        %v2905 = vadd.f32 %v2586, %v2904
        %2906 = vmatmul.bf16.gmra.mxu0 %v2547
        %v2907 = vpop.f32.mrf.mxu0
        %v2908 = vadd.f32 %v2586, %v2907
        %v2909 = vpop.f32.mrf.mxu0
        %v2910 = vadd.f32 %v2586, %v2909
        %2911 = vmatmul.bf16.gmra.mxu0 %v2548
        %v2912 = vpop.f32.mrf.mxu0
        %v2913 = vadd.f32 %v2586, %v2912
        %v2914 = vpop.f32.mrf.mxu0
        %v2915 = vadd.f32 %v2586, %v2914
        %2916 = vmatmul.bf16.gmra.mxu0 %v2549
        %v2917 = vpop.f32.mrf.mxu0
        %v2918 = vadd.f32 %v2586, %v2917
        %v2919 = vpop.f32.mrf.mxu0
        %v2920 = vadd.f32 %v2586, %v2919
        %2921 = vmatmul.bf16.gmra.mxu0 %v2550
        %v2922 = vpop.f32.mrf.mxu0
        %v2923 = vadd.f32 %v2586, %v2922
        %v2924 = vpop.f32.mrf.mxu0
        %v2925 = vadd.f32 %v2586, %v2924
        %2926 = vmatmul.bf16.gmra.mxu0 %v2551
        %v2927 = vpop.f32.mrf.mxu0
        %v2928 = vadd.f32 %v2586, %v2927
        %v2929 = vpop.f32.mrf.mxu0
        %v2930 = vadd.f32 %v2586, %v2929
        %2931 = vmatmul.bf16.gmra.mxu0 %v2552
        %v2932 = vpop.f32.mrf.mxu0
        %v2933 = vadd.f32 %v2586, %v2932
        %v2934 = vpop.f32.mrf.mxu0
        %v2935 = vadd.f32 %v2586, %v2934
        %2936 = vmatmul.bf16.gmra.mxu0 %v2553
        %v2937 = vpop.f32.mrf.mxu0
        %v2938 = vadd.f32 %v2586, %v2937
        %v2939 = vpop.f32.mrf.mxu0
        %v2940 = vadd.f32 %v2586, %v2939
        %2941 = vmatmul.bf16.gmra.mxu0 %v2554
        %v2942 = vpop.f32.mrf.mxu0
        %v2943 = vadd.f32 %v2586, %v2942
        %v2944 = vpop.f32.mrf.mxu0
        %v2945 = vadd.f32 %v2586, %v2944
        %2946 = vmatmul.bf16.gmra.mxu0 %v2555
        %v2947 = vpop.f32.mrf.mxu0
        %v2948 = vadd.f32 %v2586, %v2947
        %v2949 = vpop.f32.mrf.mxu0
        %v2950 = vadd.f32 %v2586, %v2949
        %2951 = vmatmul.bf16.gmra.mxu0 %v2556
        %v2952 = vpop.f32.mrf.mxu0
        %v2953 = vadd.f32 %v2586, %v2952
        %v2954 = vpop.f32.mrf.mxu0
        %v2955 = vadd.f32 %v2586, %v2954
        %2956 = vmatmul.bf16.gmra.mxu0 %v2557
        %v2957 = vpop.f32.mrf.mxu0
        %v2958 = vadd.f32 %v2586, %v2957
        %v2959 = vpop.f32.mrf.mxu0
        %v2960 = vadd.f32 %v2586, %v2959
        %2961 = vmatmul.bf16.gmra.mxu0 %v2558
        %v2962 = vpop.f32.mrf.mxu0
        %v2963 = vadd.f32 %v2586, %v2962
        %v2964 = vpop.f32.mrf.mxu0
        %v2965 = vadd.f32 %v2586, %v2964
        %2966 = vmatmul.bf16.gmra.mxu0 %v2559
        %v2967 = vpop.f32.mrf.mxu0
        %v2968 = vadd.f32 %v2586, %v2967
        %v2969 = vpop.f32.mrf.mxu0
        %v2970 = vadd.f32 %v2586, %v2969
        %2971 = vmatmul.bf16.gmra.mxu0 %v2560
        %v2972 = vpop.f32.mrf.mxu0
        %v2973 = vadd.f32 %v2586, %v2972
        %v2974 = vpop.f32.mrf.mxu0
        %v2975 = vadd.f32 %v2586, %v2974
        %2976 = vmatmul.bf16.gmra.mxu0 %v2561
        %v2977 = vpop.f32.mrf.mxu0
        %v2978 = vadd.f32 %v2586, %v2977
        %v2979 = vpop.f32.mrf.mxu0
        %v2980 = vadd.f32 %v2586, %v2979
        %2981 = vmatmul.bf16.gmra.mxu0 %v2562
        %v2982 = vpop.f32.mrf.mxu0
        %v2983 = vadd.f32 %v2586, %v2982
        %v2984 = vpop.f32.mrf.mxu0
        %v2985 = vadd.f32 %v2586, %v2984
        %2986 = vmatmul.bf16.gmra.mxu0 %v2563
        %v2987 = vpop.f32.mrf.mxu0
        %v2988 = vadd.f32 %v2586, %v2987
        %v2989 = vpop.f32.mrf.mxu0
        %v2990 = vadd.f32 %v2586, %v2989
        %2991 = vmatmul.bf16.gmra.mxu0 %v2564
        %v2992 = vpop.f32.mrf.mxu0
        %v2993 = vadd.f32 %v2586, %v2992
        %v2994 = vpop.f32.mrf.mxu0
        %v2995 = vadd.f32 %v2586, %v2994
        %2996 = vmatmul.bf16.gmra.mxu0 %v2565
        %v2997 = vpop.f32.mrf.mxu0
        %v2998 = vadd.f32 %v2586, %v2997
        %v2999 = vpop.f32.mrf.mxu0
        %v3000 = vadd.f32 %v2586, %v2999
        %3001 = vmatmul.bf16.gmra.mxu0 %v2566
        %v3002 = vpop.f32.mrf.mxu0
        %v3003 = vadd.f32 %v2586, %v3002
        %v3004 = vpop.f32.mrf.mxu0
        %v3005 = vadd.f32 %v2586, %v3004
        %3006 = vdwg.mxu0
        %v3007 = vmax.f32 %v2679, 0.0
        %v3008 = vmax.f32 %v2848, 0.0
        %v3009 = vmax.f32 %v2681, 0.0
        %v3010 = vmax.f32 %v2850, 0.0
        %v3011 = vmax.f32 %v2684, 0.0
        %v3012 = vmax.f32 %v2853, 0.0
        %v3013 = vmax.f32 %v2686, 0.0
        %v3014 = vmax.f32 %v2855, 0.0
        %v3015 = vmax.f32 %v2689, 0.0
        %v3016 = vmax.f32 %v2858, 0.0
        %v3017 = vmax.f32 %v2691, 0.0
        %v3018 = vmax.f32 %v2860, 0.0
        %v3019 = vmax.f32 %v2694, 0.0
        %v3020 = vmax.f32 %v2863, 0.0
        %v3021 = vmax.f32 %v2696, 0.0
        %v3022 = vmax.f32 %v2865, 0.0
        %v3023 = vmax.f32 %v2699, 0.0
        %v3024 = vmax.f32 %v2868, 0.0
        %v3025 = vmax.f32 %v2701, 0.0
        %v3026 = vmax.f32 %v2870, 0.0
        %v3027 = vmax.f32 %v2704, 0.0
        %v3028 = vmax.f32 %v2873, 0.0
        %v3029 = vmax.f32 %v2706, 0.0
        %v3030 = vmax.f32 %v2875, 0.0
        %v3031 = vmax.f32 %v2709, 0.0
        %v3032 = vmax.f32 %v2878, 0.0
        %v3033 = vmax.f32 %v2711, 0.0
        %v3034 = vmax.f32 %v2880, 0.0
        %v3035 = vmax.f32 %v2714, 0.0
        %v3036 = vmax.f32 %v2883, 0.0
        %v3037 = vmax.f32 %v2716, 0.0
        %v3038 = vmax.f32 %v2885, 0.0
        %v3039 = vmax.f32 %v2719, 0.0
        %v3040 = vmax.f32 %v2888, 0.0
        %v3041 = vmax.f32 %v2721, 0.0
        %v3042 = vmax.f32 %v2890, 0.0
        %v3043 = vmax.f32 %v2724, 0.0
        %v3044 = vmax.f32 %v2893, 0.0
        %v3045 = vmax.f32 %v2726, 0.0
        %v3046 = vmax.f32 %v2895, 0.0
        %v3047 = vmax.f32 %v2729, 0.0
        %v3048 = vmax.f32 %v2898, 0.0
        %v3049 = vmax.f32 %v2731, 0.0
        %v3050 = vmax.f32 %v2900, 0.0
        %v3051 = vmax.f32 %v2734, 0.0
        %v3052 = vmax.f32 %v2903, 0.0
        %v3053 = vmax.f32 %v2736, 0.0
        %v3054 = vmax.f32 %v2905, 0.0
        %v3055 = vmax.f32 %v2739, 0.0
        %v3056 = vmax.f32 %v2908, 0.0
        %v3057 = vmax.f32 %v2741, 0.0
        %v3058 = vmax.f32 %v2910, 0.0
        %v3059 = vmax.f32 %v2744, 0.0
        %v3060 = vmax.f32 %v2913, 0.0
        %v3061 = vmax.f32 %v2746, 0.0
        %v3062 = vmax.f32 %v2915, 0.0
        %v3063 = vmax.f32 %v2749, 0.0
        %v3064 = vmax.f32 %v2918, 0.0
        %v3065 = vmax.f32 %v2751, 0.0
        %v3066 = vmax.f32 %v2920, 0.0
        %v3067 = vmax.f32 %v2754, 0.0
        %v3068 = vmax.f32 %v2923, 0.0
        %v3069 = vmax.f32 %v2756, 0.0
        %v3070 = vmax.f32 %v2925, 0.0
        %v3071 = vmax.f32 %v2759, 0.0
        %v3072 = vmax.f32 %v2928, 0.0
        %v3073 = vmax.f32 %v2761, 0.0
        %v3074 = vmax.f32 %v2930, 0.0
        %v3075 = vmax.f32 %v2764, 0.0
        %v3076 = vmax.f32 %v2933, 0.0
        %v3077 = vmax.f32 %v2766, 0.0
        %v3078 = vmax.f32 %v2935, 0.0
        %v3079 = vmax.f32 %v2769, 0.0
        %v3080 = vmax.f32 %v2938, 0.0
        %v3081 = vmax.f32 %v2771, 0.0
        %v3082 = vmax.f32 %v2940, 0.0
        %v3083 = vmax.f32 %v2774, 0.0
        %v3084 = vmax.f32 %v2943, 0.0
        %v3085 = vmax.f32 %v2776, 0.0
        %v3086 = vmax.f32 %v2945, 0.0
        %v3087 = vmax.f32 %v2779, 0.0
        %v3088 = vmax.f32 %v2948, 0.0
        %v3089 = vmax.f32 %v2781, 0.0
        %v3090 = vmax.f32 %v2950, 0.0
        %v3091 = vmax.f32 %v2784, 0.0
        %v3092 = vmax.f32 %v2953, 0.0
        %v3093 = vmax.f32 %v2786, 0.0
        %v3094 = vmax.f32 %v2955, 0.0
        %v3095 = vmax.f32 %v2789, 0.0
        %v3096 = vmax.f32 %v2958, 0.0
        %v3097 = vmax.f32 %v2791, 0.0
        %v3098 = vmax.f32 %v2960, 0.0
        %v3099 = vmax.f32 %v2794, 0.0
        %v3100 = vmax.f32 %v2963, 0.0
        %v3101 = vmax.f32 %v2796, 0.0
        %v3102 = vmax.f32 %v2965, 0.0
        %v3103 = vmax.f32 %v2799, 0.0
        %v3104 = vmax.f32 %v2968, 0.0
        %v3105 = vmax.f32 %v2801, 0.0
        %v3106 = vmax.f32 %v2970, 0.0
        %v3107 = vmax.f32 %v2804, 0.0
        %v3108 = vmax.f32 %v2973, 0.0
        %v3109 = vmax.f32 %v2806, 0.0
        %v3110 = vmax.f32 %v2975, 0.0
        %v3111 = vmax.f32 %v2809, 0.0
        %v3112 = vmax.f32 %v2978, 0.0
        %v3113 = vmax.f32 %v2811, 0.0
        %v3114 = vmax.f32 %v2980, 0.0
        %v3115 = vmax.f32 %v2814, 0.0
        %v3116 = vmax.f32 %v2983, 0.0
        %v3117 = vmax.f32 %v2816, 0.0
        %v3118 = vmax.f32 %v2985, 0.0
        %v3119 = vmax.f32 %v2819, 0.0
        %v3120 = vmax.f32 %v2988, 0.0
        %v3121 = vmax.f32 %v2821, 0.0
        %v3122 = vmax.f32 %v2990, 0.0
        %v3123 = vmax.f32 %v2824, 0.0
        %v3124 = vmax.f32 %v2993, 0.0
        %v3125 = vmax.f32 %v2826, 0.0
        %v3126 = vmax.f32 %v2995, 0.0
        %v3127 = vmax.f32 %v2829, 0.0
        %v3128 = vmax.f32 %v2998, 0.0
        %v3129 = vmax.f32 %v2831, 0.0
        %v3130 = vmax.f32 %v3000, 0.0
        %v3131 = vmax.f32 %v2834, 0.0
        %v3132 = vmax.f32 %v3003, 0.0
        %v3133 = vmax.f32 %v2836, 0.0
        %v3134 = vmax.f32 %v3005, 0.0
        %v3135 = vmax.f32 %v3007, %v3011
        %v3136 = vmax.f32 %v3009, %v3013
        %v3137 = vmax.f32 %v3135, %v3015
        %v3138 = vmax.f32 %v3136, %v3017
        %v3139 = vmax.f32 %v3137, %v3019
        %v3140 = vmax.f32 %v3138, %v3021
        %v3141 = vmax.f32 %v3139, %v3023
        %v3142 = vmax.f32 %v3140, %v3025
        %v3143 = vmax.f32 %v3141, %v3027
        %v3144 = vmax.f32 %v3142, %v3029
        %v3145 = vmax.f32 %v3143, %v3031
        %v3146 = vmax.f32 %v3144, %v3033
        %v3147 = vmax.f32 %v3145, %v3035
        %v3148 = vmax.f32 %v3146, %v3037
        %v3149 = vmax.f32 %v3147, %v3039
        %v3150 = vmax.f32 %v3148, %v3041
        %v3151 = vmax.f32 %v3149, %v3043
        %v3152 = vmax.f32 %v3150, %v3045
        %v3153 = vmax.f32 %v3151, %v3047
        %v3154 = vmax.f32 %v3152, %v3049
        %v3155 = vmax.f32 %v3153, %v3051
        %v3156 = vmax.f32 %v3154, %v3053
        %v3157 = vmax.f32 %v3155, %v3055
        %v3158 = vmax.f32 %v3156, %v3057
        %v3159 = vmax.f32 %v3157, %v3059
        %v3160 = vmax.f32 %v3158, %v3061
        %v3161 = vmax.f32 %v3159, %v3063
        %v3162 = vmax.f32 %v3160, %v3065
        %v3163 = vmax.f32 %v3161, %v3067
        %v3164 = vmax.f32 %v3162, %v3069
        %v3165 = vmax.f32 %v3163, %v3071
        %v3166 = vmax.f32 %v3164, %v3073
        %v3167 = vmax.f32 %v3165, %v3075
        %v3168 = vmax.f32 %v3166, %v3077
        %v3169 = vmax.f32 %v3167, %v3079
        %v3170 = vmax.f32 %v3168, %v3081
        %v3171 = vmax.f32 %v3169, %v3083
        %v3172 = vmax.f32 %v3170, %v3085
        %v3173 = vmax.f32 %v3171, %v3087
        %v3174 = vmax.f32 %v3172, %v3089
        %v3175 = vmax.f32 %v3173, %v3091
        %v3176 = vmax.f32 %v3174, %v3093
        %v3177 = vmax.f32 %v3175, %v3095
        %v3178 = vmax.f32 %v3176, %v3097
        %v3179 = vmax.f32 %v3177, %v3099
        %v3180 = vmax.f32 %v3178, %v3101
        %v3181 = vmax.f32 %v3179, %v3103
        %v3182 = vmax.f32 %v3180, %v3105
        %v3183 = vmax.f32 %v3181, %v3107
        %v3184 = vmax.f32 %v3182, %v3109
        %v3185 = vmax.f32 %v3183, %v3111
        %v3186 = vmax.f32 %v3184, %v3113
        %v3187 = vmax.f32 %v3185, %v3115
        %v3188 = vmax.f32 %v3186, %v3117
        %v3189 = vmax.f32 %v3187, %v3119
        %v3190 = vmax.f32 %v3188, %v3121
        %v3191 = vmax.f32 %v3189, %v3123
        %v3192 = vmax.f32 %v3190, %v3125
        %v3193 = vmax.f32 %v3191, %v3127
        %v3194 = vmax.f32 %v3192, %v3129
        %v3195 = vmax.f32 %v3193, %v3131
        %v3196 = vmax.f32 %v3194, %v3133
        %v3197 = vmax.f32 %v3195, %v3196
        %v3198 = vmax.f32 %v3008, %v3012
        %v3199 = vmax.f32 %v3010, %v3014
        %v3200 = vmax.f32 %v3198, %v3016
        %v3201 = vmax.f32 %v3199, %v3018
        %v3202 = vmax.f32 %v3200, %v3020
        %v3203 = vmax.f32 %v3201, %v3022
        %v3204 = vmax.f32 %v3202, %v3024
        %v3205 = vmax.f32 %v3203, %v3026
        %v3206 = vmax.f32 %v3204, %v3028
        %v3207 = vmax.f32 %v3205, %v3030
        %v3208 = vmax.f32 %v3206, %v3032
        %v3209 = vmax.f32 %v3207, %v3034
        %v3210 = vmax.f32 %v3208, %v3036
        %v3211 = vmax.f32 %v3209, %v3038
        %v3212 = vmax.f32 %v3210, %v3040
        %v3213 = vmax.f32 %v3211, %v3042
        %v3214 = vmax.f32 %v3212, %v3044
        %v3215 = vmax.f32 %v3213, %v3046
        %v3216 = vmax.f32 %v3214, %v3048
        %v3217 = vmax.f32 %v3215, %v3050
        %v3218 = vmax.f32 %v3216, %v3052
        %v3219 = vmax.f32 %v3217, %v3054
        %v3220 = vmax.f32 %v3218, %v3056
        %v3221 = vmax.f32 %v3219, %v3058
        %v3222 = vmax.f32 %v3220, %v3060
        %v3223 = vmax.f32 %v3221, %v3062
        %v3224 = vmax.f32 %v3222, %v3064
        %v3225 = vmax.f32 %v3223, %v3066
        %v3226 = vmax.f32 %v3224, %v3068
        %v3227 = vmax.f32 %v3225, %v3070
        %v3228 = vmax.f32 %v3226, %v3072
        %v3229 = vmax.f32 %v3227, %v3074
        %v3230 = vmax.f32 %v3228, %v3076
        %v3231 = vmax.f32 %v3229, %v3078
        %v3232 = vmax.f32 %v3230, %v3080
        %v3233 = vmax.f32 %v3231, %v3082
        %v3234 = vmax.f32 %v3232, %v3084
        %v3235 = vmax.f32 %v3233, %v3086
        %v3236 = vmax.f32 %v3234, %v3088
        %v3237 = vmax.f32 %v3235, %v3090
        %v3238 = vmax.f32 %v3236, %v3092
        %v3239 = vmax.f32 %v3237, %v3094
        %v3240 = vmax.f32 %v3238, %v3096
        %v3241 = vmax.f32 %v3239, %v3098
        %v3242 = vmax.f32 %v3240, %v3100
        %v3243 = vmax.f32 %v3241, %v3102
        %v3244 = vmax.f32 %v3242, %v3104
        %v3245 = vmax.f32 %v3243, %v3106
        %v3246 = vmax.f32 %v3244, %v3108
        %v3247 = vmax.f32 %v3245, %v3110
        %v3248 = vmax.f32 %v3246, %v3112
        %v3249 = vmax.f32 %v3247, %v3114
        %v3250 = vmax.f32 %v3248, %v3116
        %v3251 = vmax.f32 %v3249, %v3118
        %v3252 = vmax.f32 %v3250, %v3120
        %v3253 = vmax.f32 %v3251, %v3122
        %v3254 = vmax.f32 %v3252, %v3124
        %v3255 = vmax.f32 %v3253, %v3126
        %v3256 = vmax.f32 %v3254, %v3128
        %v3257 = vmax.f32 %v3255, %v3130
        %v3258 = vmax.f32 %v3256, %v3132
        %v3259 = vmax.f32 %v3257, %v3134
        %v3260 = vmax.f32 %v3258, %v3259
        %v3261 = vld [vmem:[%s362] sm:$0xff]
        %v3262 = vld [vmem:[%s362 + $0x8] sm:$0xff]
        %v3263 = vmax.f32 %v3261, %v3197
        %v3264 = vmax.f32 %v3262, %v3260
        %3265 = vst [vmem:[%s362] sm:$0xff] %v3263
        %3266 = vst [vmem:[%s362 + $0x8] sm:$0xff] %v3264
        %v3267 = vld [vmem:[%s7 + $0x8] sm:$0xff]
        %v3268 = vld [vmem:[%s7 + $0x28] sm:$0xff]
        %v3269 = vld [vmem:[%s7 + $0x48] sm:$0xff]
        %v3270 = vld [vmem:[%s7 + $0x68] sm:$0xff]
        %v3271 = vld [vmem:[%s7 + $0x88] sm:$0xff]
        %v3272 = vld [vmem:[%s7 + $0xa8] sm:$0xff]
        %v3273 = vld [vmem:[%s7 + $0xc8] sm:$0xff]
        %v3274 = vld [vmem:[%s7 + $0xe8] sm:$0xff]
        %v3275 = vld [vmem:[%s7 + $0x108] sm:$0xff]
        %v3276 = vld [vmem:[%s7 + $0x128] sm:$0xff]
        %v3277 = vld [vmem:[%s7 + $0x148] sm:$0xff]
        %v3278 = vld [vmem:[%s7 + $0x168] sm:$0xff]
        %v3279 = vld [vmem:[%s7 + $0x188] sm:$0xff]
        %v3280 = vld [vmem:[%s7 + $0x1a8] sm:$0xff]
        %v3281 = vld [vmem:[%s7 + $0x1c8] sm:$0xff]
        %v3282 = vld [vmem:[%s7 + $0x1e8] sm:$0xff]
        %v3283 = vld [vmem:[%s8 + $0x2] sm:$0x3]
        %v3285 = vperm.slane %v3283, 0
        %v3286 = vperm.slane %v3283, 1
        %v3305 = vunpack.c.l.b16 %v3267
        %v3306 = vunpack.c.h.b16 %v3267
        %v3307 = vunpack.c.l.b16 %v3268
        %v3308 = vunpack.c.h.b16 %v3268
        %v3309 = vunpack.c.l.b16 %v3269
        %v3310 = vunpack.c.h.b16 %v3269
        %v3311 = vunpack.c.l.b16 %v3270
        %v3312 = vunpack.c.h.b16 %v3270
        %v3313 = vunpack.c.l.b16 %v3271
        %v3314 = vunpack.c.h.b16 %v3271
        %v3315 = vunpack.c.l.b16 %v3272
        %v3316 = vunpack.c.h.b16 %v3272
        %v3317 = vunpack.c.l.b16 %v3273
        %v3318 = vunpack.c.h.b16 %v3273
        %v3319 = vunpack.c.l.b16 %v3274
        %v3320 = vunpack.c.h.b16 %v3274
        %v3321 = vunpack.c.l.b16 %v3275
        %v3322 = vunpack.c.h.b16 %v3275
        %v3323 = vunpack.c.l.b16 %v3276
        %v3324 = vunpack.c.h.b16 %v3276
        %v3325 = vunpack.c.l.b16 %v3277
        %v3326 = vunpack.c.h.b16 %v3277
        %v3327 = vunpack.c.l.b16 %v3278
        %v3328 = vunpack.c.h.b16 %v3278
        %v3329 = vunpack.c.l.b16 %v3279
        %v3330 = vunpack.c.h.b16 %v3279
        %v3331 = vunpack.c.l.b16 %v3280
        %v3332 = vunpack.c.h.b16 %v3280
        %v3333 = vunpack.c.l.b16 %v3281
        %v3334 = vunpack.c.h.b16 %v3281
        %v3335 = vunpack.c.l.b16 %v3282
        %v3336 = vunpack.c.h.b16 %v3282
        %v3337 = vpack.c.b16 %v3307, %v3305
        %v3338 = vpack.c.b16 %v3308, %v3306
        %v3339 = vpack.c.b16 %v3311, %v3309
        %v3340 = vpack.c.b16 %v3312, %v3310
        %v3341 = vpack.c.b16 %v3315, %v3313
        %v3342 = vpack.c.b16 %v3316, %v3314
        %v3343 = vpack.c.b16 %v3319, %v3317
        %v3344 = vpack.c.b16 %v3320, %v3318
        %v3345 = vpack.c.b16 %v3323, %v3321
        %v3346 = vpack.c.b16 %v3324, %v3322
        %v3347 = vpack.c.b16 %v3327, %v3325
        %v3348 = vpack.c.b16 %v3328, %v3326
        %v3349 = vpack.c.b16 %v3331, %v3329
        %v3350 = vpack.c.b16 %v3332, %v3330
        %v3351 = vpack.c.b16 %v3335, %v3333
        %v3352 = vpack.c.b16 %v3336, %v3334
        %3369 = vmatpush.bf16.msra.mxu0 %v3351
        %3370 = vmatpush.bf16.msra.mxu0 %v3349
        %3371 = vmatpush.bf16.msra.mxu0 %v3347
        %3372 = vmatpush.bf16.msra.mxu0 %v3345
        %3373 = vmatpush.bf16.msra.mxu0 %v3343
        %3374 = vmatpush.bf16.msra.mxu0 %v3341
        %3375 = vmatpush.bf16.msra.mxu0 %v3339
        %3376 = vmatpush.bf16.msra.mxu0 %v3337
        %3377 = vmatmul.bf16.gmra.mxu0 %v2535
        %v3378 = vpop.f32.mrf.mxu0
        %v3379 = vadd.f32 %v3285, %v3378
        %v3380 = vpop.f32.mrf.mxu0
        %v3381 = vadd.f32 %v3285, %v3380
        %3382 = vmatmul.bf16.gmra.mxu0 %v2536
        %v3383 = vpop.f32.mrf.mxu0
        %v3384 = vadd.f32 %v3285, %v3383
        %v3385 = vpop.f32.mrf.mxu0
        %v3386 = vadd.f32 %v3285, %v3385
        %3387 = vmatmul.bf16.gmra.mxu0 %v2537
        %v3388 = vpop.f32.mrf.mxu0
        %v3389 = vadd.f32 %v3285, %v3388
        %v3390 = vpop.f32.mrf.mxu0
        %v3391 = vadd.f32 %v3285, %v3390
        %3392 = vmatmul.bf16.gmra.mxu0 %v2538
        %v3393 = vpop.f32.mrf.mxu0
        %v3394 = vadd.f32 %v3285, %v3393
        %v3395 = vpop.f32.mrf.mxu0
        %v3396 = vadd.f32 %v3285, %v3395
        %3397 = vmatmul.bf16.gmra.mxu0 %v2539
        %v3398 = vpop.f32.mrf.mxu0
        %v3399 = vadd.f32 %v3285, %v3398
        %v3400 = vpop.f32.mrf.mxu0
        %v3401 = vadd.f32 %v3285, %v3400
        %3402 = vmatmul.bf16.gmra.mxu0 %v2540
        %v3403 = vpop.f32.mrf.mxu0
        %v3404 = vadd.f32 %v3285, %v3403
        %v3405 = vpop.f32.mrf.mxu0
        %v3406 = vadd.f32 %v3285, %v3405
        %3407 = vmatmul.bf16.gmra.mxu0 %v2541
        %v3408 = vpop.f32.mrf.mxu0
        %v3409 = vadd.f32 %v3285, %v3408
        %v3410 = vpop.f32.mrf.mxu0
        %v3411 = vadd.f32 %v3285, %v3410
        %3412 = vmatmul.bf16.gmra.mxu0 %v2542
        %v3413 = vpop.f32.mrf.mxu0
        %v3414 = vadd.f32 %v3285, %v3413
        %v3415 = vpop.f32.mrf.mxu0
        %v3416 = vadd.f32 %v3285, %v3415
        %3417 = vmatmul.bf16.gmra.mxu0 %v2543
        %v3418 = vpop.f32.mrf.mxu0
        %v3419 = vadd.f32 %v3285, %v3418
        %v3420 = vpop.f32.mrf.mxu0
        %v3421 = vadd.f32 %v3285, %v3420
        %3422 = vmatmul.bf16.gmra.mxu0 %v2544
        %v3423 = vpop.f32.mrf.mxu0
        %v3424 = vadd.f32 %v3285, %v3423
        %v3425 = vpop.f32.mrf.mxu0
        %v3426 = vadd.f32 %v3285, %v3425
        %3427 = vmatmul.bf16.gmra.mxu0 %v2545
        %v3428 = vpop.f32.mrf.mxu0
        %v3429 = vadd.f32 %v3285, %v3428
        %v3430 = vpop.f32.mrf.mxu0
        %v3431 = vadd.f32 %v3285, %v3430
        %3432 = vmatmul.bf16.gmra.mxu0 %v2546
        %v3433 = vpop.f32.mrf.mxu0
        %v3434 = vadd.f32 %v3285, %v3433
        %v3435 = vpop.f32.mrf.mxu0
        %v3436 = vadd.f32 %v3285, %v3435
        %3437 = vmatmul.bf16.gmra.mxu0 %v2547
        %v3438 = vpop.f32.mrf.mxu0
        %v3439 = vadd.f32 %v3285, %v3438
        %v3440 = vpop.f32.mrf.mxu0
        %v3441 = vadd.f32 %v3285, %v3440
        %3442 = vmatmul.bf16.gmra.mxu0 %v2548
        %v3443 = vpop.f32.mrf.mxu0
        %v3444 = vadd.f32 %v3285, %v3443
        %v3445 = vpop.f32.mrf.mxu0
        %v3446 = vadd.f32 %v3285, %v3445
        %3447 = vmatmul.bf16.gmra.mxu0 %v2549
        %v3448 = vpop.f32.mrf.mxu0
        %v3449 = vadd.f32 %v3285, %v3448
        %v3450 = vpop.f32.mrf.mxu0
        %v3451 = vadd.f32 %v3285, %v3450
        %3452 = vmatmul.bf16.gmra.mxu0 %v2550
        %v3453 = vpop.f32.mrf.mxu0
        %v3454 = vadd.f32 %v3285, %v3453
        %v3455 = vpop.f32.mrf.mxu0
        %v3456 = vadd.f32 %v3285, %v3455
        %3457 = vmatmul.bf16.gmra.mxu0 %v2551
        %v3458 = vpop.f32.mrf.mxu0
        %v3459 = vadd.f32 %v3285, %v3458
        %v3460 = vpop.f32.mrf.mxu0
        %v3461 = vadd.f32 %v3285, %v3460
        %3462 = vmatmul.bf16.gmra.mxu0 %v2552
        %v3463 = vpop.f32.mrf.mxu0
        %v3464 = vadd.f32 %v3285, %v3463
        %v3465 = vpop.f32.mrf.mxu0
        %v3466 = vadd.f32 %v3285, %v3465
        %3467 = vmatmul.bf16.gmra.mxu0 %v2553
        %v3468 = vpop.f32.mrf.mxu0
        %v3469 = vadd.f32 %v3285, %v3468
        %v3470 = vpop.f32.mrf.mxu0
        %v3471 = vadd.f32 %v3285, %v3470
        %3472 = vmatmul.bf16.gmra.mxu0 %v2554
        %v3473 = vpop.f32.mrf.mxu0
        %v3474 = vadd.f32 %v3285, %v3473
        %v3475 = vpop.f32.mrf.mxu0
        %v3476 = vadd.f32 %v3285, %v3475
        %3477 = vmatmul.bf16.gmra.mxu0 %v2555
        %v3478 = vpop.f32.mrf.mxu0
        %v3479 = vadd.f32 %v3285, %v3478
        %v3480 = vpop.f32.mrf.mxu0
        %v3481 = vadd.f32 %v3285, %v3480
        %3482 = vmatmul.bf16.gmra.mxu0 %v2556
        %v3483 = vpop.f32.mrf.mxu0
        %v3484 = vadd.f32 %v3285, %v3483
        %v3485 = vpop.f32.mrf.mxu0
        %v3486 = vadd.f32 %v3285, %v3485
        %3487 = vmatmul.bf16.gmra.mxu0 %v2557
        %v3488 = vpop.f32.mrf.mxu0
        %v3489 = vadd.f32 %v3285, %v3488
        %v3490 = vpop.f32.mrf.mxu0
        %v3491 = vadd.f32 %v3285, %v3490
        %3492 = vmatmul.bf16.gmra.mxu0 %v2558
        %v3493 = vpop.f32.mrf.mxu0
        %v3494 = vadd.f32 %v3285, %v3493
        %v3495 = vpop.f32.mrf.mxu0
        %v3496 = vadd.f32 %v3285, %v3495
        %3497 = vmatmul.bf16.gmra.mxu0 %v2559
        %v3498 = vpop.f32.mrf.mxu0
        %v3499 = vadd.f32 %v3285, %v3498
        %v3500 = vpop.f32.mrf.mxu0
        %v3501 = vadd.f32 %v3285, %v3500
        %3502 = vmatmul.bf16.gmra.mxu0 %v2560
        %v3503 = vpop.f32.mrf.mxu0
        %v3504 = vadd.f32 %v3285, %v3503
        %v3505 = vpop.f32.mrf.mxu0
        %v3506 = vadd.f32 %v3285, %v3505
        %3507 = vmatmul.bf16.gmra.mxu0 %v2561
        %v3508 = vpop.f32.mrf.mxu0
        %v3509 = vadd.f32 %v3285, %v3508
        %v3510 = vpop.f32.mrf.mxu0
        %v3511 = vadd.f32 %v3285, %v3510
        %3512 = vmatmul.bf16.gmra.mxu0 %v2562
        %v3513 = vpop.f32.mrf.mxu0
        %v3514 = vadd.f32 %v3285, %v3513
        %v3515 = vpop.f32.mrf.mxu0
        %v3516 = vadd.f32 %v3285, %v3515
        %3517 = vmatmul.bf16.gmra.mxu0 %v2563
        %v3518 = vpop.f32.mrf.mxu0
        %v3519 = vadd.f32 %v3285, %v3518
        %v3520 = vpop.f32.mrf.mxu0
        %v3521 = vadd.f32 %v3285, %v3520
        %3522 = vmatmul.bf16.gmra.mxu0 %v2564
        %v3523 = vpop.f32.mrf.mxu0
        %v3524 = vadd.f32 %v3285, %v3523
        %v3525 = vpop.f32.mrf.mxu0
        %v3526 = vadd.f32 %v3285, %v3525
        %3527 = vmatmul.bf16.gmra.mxu0 %v2565
        %v3528 = vpop.f32.mrf.mxu0
        %v3529 = vadd.f32 %v3285, %v3528
        %v3530 = vpop.f32.mrf.mxu0
        %v3531 = vadd.f32 %v3285, %v3530
        %3532 = vmatmul.bf16.gmra.mxu0 %v2566
        %v3533 = vpop.f32.mrf.mxu0
        %v3534 = vadd.f32 %v3285, %v3533
        %v3535 = vpop.f32.mrf.mxu0
        %v3536 = vadd.f32 %v3285, %v3535
        %3537 = vdwg.mxu0
        %3538 = vmatpush.bf16.msra.mxu0 %v3352
        %3539 = vmatpush.bf16.msra.mxu0 %v3350
        %3540 = vmatpush.bf16.msra.mxu0 %v3348
        %3541 = vmatpush.bf16.msra.mxu0 %v3346
        %3542 = vmatpush.bf16.msra.mxu0 %v3344
        %3543 = vmatpush.bf16.msra.mxu0 %v3342
        %3544 = vmatpush.bf16.msra.mxu0 %v3340
        %3545 = vmatpush.bf16.msra.mxu0 %v3338
        %3546 = vmatmul.bf16.gmra.mxu0 %v2535
        %v3547 = vpop.f32.mrf.mxu0
        %v3548 = vadd.f32 %v3286, %v3547
        %v3549 = vpop.f32.mrf.mxu0
        %v3550 = vadd.f32 %v3286, %v3549
        %3551 = vmatmul.bf16.gmra.mxu0 %v2536
        %v3552 = vpop.f32.mrf.mxu0
        %v3553 = vadd.f32 %v3286, %v3552
        %v3554 = vpop.f32.mrf.mxu0
        %v3555 = vadd.f32 %v3286, %v3554
        %3556 = vmatmul.bf16.gmra.mxu0 %v2537
        %v3557 = vpop.f32.mrf.mxu0
        %v3558 = vadd.f32 %v3286, %v3557
        %v3559 = vpop.f32.mrf.mxu0
        %v3560 = vadd.f32 %v3286, %v3559
        %3561 = vmatmul.bf16.gmra.mxu0 %v2538
        %v3562 = vpop.f32.mrf.mxu0
        %v3563 = vadd.f32 %v3286, %v3562
        %v3564 = vpop.f32.mrf.mxu0
        %v3565 = vadd.f32 %v3286, %v3564
        %3566 = vmatmul.bf16.gmra.mxu0 %v2539
        %v3567 = vpop.f32.mrf.mxu0
        %v3568 = vadd.f32 %v3286, %v3567
        %v3569 = vpop.f32.mrf.mxu0
        %v3570 = vadd.f32 %v3286, %v3569
        %3571 = vmatmul.bf16.gmra.mxu0 %v2540
        %v3572 = vpop.f32.mrf.mxu0
        %v3573 = vadd.f32 %v3286, %v3572
        %v3574 = vpop.f32.mrf.mxu0
        %v3575 = vadd.f32 %v3286, %v3574
        %3576 = vmatmul.bf16.gmra.mxu0 %v2541
        %v3577 = vpop.f32.mrf.mxu0
        %v3578 = vadd.f32 %v3286, %v3577
        %v3579 = vpop.f32.mrf.mxu0
        %v3580 = vadd.f32 %v3286, %v3579
        %3581 = vmatmul.bf16.gmra.mxu0 %v2542
        %v3582 = vpop.f32.mrf.mxu0
        %v3583 = vadd.f32 %v3286, %v3582
        %v3584 = vpop.f32.mrf.mxu0
        %v3585 = vadd.f32 %v3286, %v3584
        %3586 = vmatmul.bf16.gmra.mxu0 %v2543
        %v3587 = vpop.f32.mrf.mxu0
        %v3588 = vadd.f32 %v3286, %v3587
        %v3589 = vpop.f32.mrf.mxu0
        %v3590 = vadd.f32 %v3286, %v3589
        %3591 = vmatmul.bf16.gmra.mxu0 %v2544
        %v3592 = vpop.f32.mrf.mxu0
        %v3593 = vadd.f32 %v3286, %v3592
        %v3594 = vpop.f32.mrf.mxu0
        %v3595 = vadd.f32 %v3286, %v3594
        %3596 = vmatmul.bf16.gmra.mxu0 %v2545
        %v3597 = vpop.f32.mrf.mxu0
        %v3598 = vadd.f32 %v3286, %v3597
        %v3599 = vpop.f32.mrf.mxu0
        %v3600 = vadd.f32 %v3286, %v3599
        %3601 = vmatmul.bf16.gmra.mxu0 %v2546
        %v3602 = vpop.f32.mrf.mxu0
        %v3603 = vadd.f32 %v3286, %v3602
        %v3604 = vpop.f32.mrf.mxu0
        %v3605 = vadd.f32 %v3286, %v3604
        %3606 = vmatmul.bf16.gmra.mxu0 %v2547
        %v3607 = vpop.f32.mrf.mxu0
        %v3608 = vadd.f32 %v3286, %v3607
        %v3609 = vpop.f32.mrf.mxu0
        %v3610 = vadd.f32 %v3286, %v3609
        %3611 = vmatmul.bf16.gmra.mxu0 %v2548
        %v3612 = vpop.f32.mrf.mxu0
        %v3613 = vadd.f32 %v3286, %v3612
        %v3614 = vpop.f32.mrf.mxu0
        %v3615 = vadd.f32 %v3286, %v3614
        %3616 = vmatmul.bf16.gmra.mxu0 %v2549
        %v3617 = vpop.f32.mrf.mxu0
        %v3618 = vadd.f32 %v3286, %v3617
        %v3619 = vpop.f32.mrf.mxu0
        %v3620 = vadd.f32 %v3286, %v3619
        %3621 = vmatmul.bf16.gmra.mxu0 %v2550
        %v3622 = vpop.f32.mrf.mxu0
        %v3623 = vadd.f32 %v3286, %v3622
        %v3624 = vpop.f32.mrf.mxu0
        %v3625 = vadd.f32 %v3286, %v3624
        %3626 = vmatmul.bf16.gmra.mxu0 %v2551
        %v3627 = vpop.f32.mrf.mxu0
        %v3628 = vadd.f32 %v3286, %v3627
        %v3629 = vpop.f32.mrf.mxu0
        %v3630 = vadd.f32 %v3286, %v3629
        %3631 = vmatmul.bf16.gmra.mxu0 %v2552
        %v3632 = vpop.f32.mrf.mxu0
        %v3633 = vadd.f32 %v3286, %v3632
        %v3634 = vpop.f32.mrf.mxu0
        %v3635 = vadd.f32 %v3286, %v3634
        %3636 = vmatmul.bf16.gmra.mxu0 %v2553
        %v3637 = vpop.f32.mrf.mxu0
        %v3638 = vadd.f32 %v3286, %v3637
        %v3639 = vpop.f32.mrf.mxu0
        %v3640 = vadd.f32 %v3286, %v3639
        %3641 = vmatmul.bf16.gmra.mxu0 %v2554
        %v3642 = vpop.f32.mrf.mxu0
        %v3643 = vadd.f32 %v3286, %v3642
        %v3644 = vpop.f32.mrf.mxu0
        %v3645 = vadd.f32 %v3286, %v3644
        %3646 = vmatmul.bf16.gmra.mxu0 %v2555
        %v3647 = vpop.f32.mrf.mxu0
        %v3648 = vadd.f32 %v3286, %v3647
        %v3649 = vpop.f32.mrf.mxu0
        %v3650 = vadd.f32 %v3286, %v3649
        %3651 = vmatmul.bf16.gmra.mxu0 %v2556
        %v3652 = vpop.f32.mrf.mxu0
        %v3653 = vadd.f32 %v3286, %v3652
        %v3654 = vpop.f32.mrf.mxu0
        %v3655 = vadd.f32 %v3286, %v3654
        %3656 = vmatmul.bf16.gmra.mxu0 %v2557
        %v3657 = vpop.f32.mrf.mxu0
        %v3658 = vadd.f32 %v3286, %v3657
        %v3659 = vpop.f32.mrf.mxu0
        %v3660 = vadd.f32 %v3286, %v3659
        %3661 = vmatmul.bf16.gmra.mxu0 %v2558
        %v3662 = vpop.f32.mrf.mxu0
        %v3663 = vadd.f32 %v3286, %v3662
        %v3664 = vpop.f32.mrf.mxu0
        %v3665 = vadd.f32 %v3286, %v3664
        %3666 = vmatmul.bf16.gmra.mxu0 %v2559
        %v3667 = vpop.f32.mrf.mxu0
        %v3668 = vadd.f32 %v3286, %v3667
        %v3669 = vpop.f32.mrf.mxu0
        %v3670 = vadd.f32 %v3286, %v3669
        %3671 = vmatmul.bf16.gmra.mxu0 %v2560
        %v3672 = vpop.f32.mrf.mxu0
        %v3673 = vadd.f32 %v3286, %v3672
        %v3674 = vpop.f32.mrf.mxu0
        %v3675 = vadd.f32 %v3286, %v3674
        %3676 = vmatmul.bf16.gmra.mxu0 %v2561
        %v3677 = vpop.f32.mrf.mxu0
        %v3678 = vadd.f32 %v3286, %v3677
        %v3679 = vpop.f32.mrf.mxu0
        %v3680 = vadd.f32 %v3286, %v3679
        %3681 = vmatmul.bf16.gmra.mxu0 %v2562
        %v3682 = vpop.f32.mrf.mxu0
        %v3683 = vadd.f32 %v3286, %v3682
        %v3684 = vpop.f32.mrf.mxu0
        %v3685 = vadd.f32 %v3286, %v3684
        %3686 = vmatmul.bf16.gmra.mxu0 %v2563
        %v3687 = vpop.f32.mrf.mxu0
        %v3688 = vadd.f32 %v3286, %v3687
        %v3689 = vpop.f32.mrf.mxu0
        %v3690 = vadd.f32 %v3286, %v3689
        %3691 = vmatmul.bf16.gmra.mxu0 %v2564
        %v3692 = vpop.f32.mrf.mxu0
        %v3693 = vadd.f32 %v3286, %v3692
        %v3694 = vpop.f32.mrf.mxu0
        %v3695 = vadd.f32 %v3286, %v3694
        %3696 = vmatmul.bf16.gmra.mxu0 %v2565
        %v3697 = vpop.f32.mrf.mxu0
        %v3698 = vadd.f32 %v3286, %v3697
        %v3699 = vpop.f32.mrf.mxu0
        %v3700 = vadd.f32 %v3286, %v3699
        %3701 = vmatmul.bf16.gmra.mxu0 %v2566
        %v3702 = vpop.f32.mrf.mxu0
        %v3703 = vadd.f32 %v3286, %v3702
        %v3704 = vpop.f32.mrf.mxu0
        %v3705 = vadd.f32 %v3286, %v3704
        %3706 = vdwg.mxu0
        %v3707 = vmax.f32 %v3379, 0.0
        %v3708 = vmax.f32 %v3548, 0.0
        %v3709 = vmax.f32 %v3381, 0.0
        %v3710 = vmax.f32 %v3550, 0.0
        %v3711 = vmax.f32 %v3384, 0.0
        %v3712 = vmax.f32 %v3553, 0.0
        %v3713 = vmax.f32 %v3386, 0.0
        %v3714 = vmax.f32 %v3555, 0.0
        %v3715 = vmax.f32 %v3389, 0.0
        %v3716 = vmax.f32 %v3558, 0.0
        %v3717 = vmax.f32 %v3391, 0.0
        %v3718 = vmax.f32 %v3560, 0.0
        %v3719 = vmax.f32 %v3394, 0.0
        %v3720 = vmax.f32 %v3563, 0.0
        %v3721 = vmax.f32 %v3396, 0.0
        %v3722 = vmax.f32 %v3565, 0.0
        %v3723 = vmax.f32 %v3399, 0.0
        %v3724 = vmax.f32 %v3568, 0.0
        %v3725 = vmax.f32 %v3401, 0.0
        %v3726 = vmax.f32 %v3570, 0.0
        %v3727 = vmax.f32 %v3404, 0.0
        %v3728 = vmax.f32 %v3573, 0.0
        %v3729 = vmax.f32 %v3406, 0.0
        %v3730 = vmax.f32 %v3575, 0.0
        %v3731 = vmax.f32 %v3409, 0.0
        %v3732 = vmax.f32 %v3578, 0.0
        %v3733 = vmax.f32 %v3411, 0.0
        %v3734 = vmax.f32 %v3580, 0.0
        %v3735 = vmax.f32 %v3414, 0.0
        %v3736 = vmax.f32 %v3583, 0.0
        %v3737 = vmax.f32 %v3416, 0.0
        %v3738 = vmax.f32 %v3585, 0.0
        %v3739 = vmax.f32 %v3419, 0.0
        %v3740 = vmax.f32 %v3588, 0.0
        %v3741 = vmax.f32 %v3421, 0.0
        %v3742 = vmax.f32 %v3590, 0.0
        %v3743 = vmax.f32 %v3424, 0.0
        %v3744 = vmax.f32 %v3593, 0.0
        %v3745 = vmax.f32 %v3426, 0.0
        %v3746 = vmax.f32 %v3595, 0.0
        %v3747 = vmax.f32 %v3429, 0.0
        %v3748 = vmax.f32 %v3598, 0.0
        %v3749 = vmax.f32 %v3431, 0.0
        %v3750 = vmax.f32 %v3600, 0.0
        %v3751 = vmax.f32 %v3434, 0.0
        %v3752 = vmax.f32 %v3603, 0.0
        %v3753 = vmax.f32 %v3436, 0.0
        %v3754 = vmax.f32 %v3605, 0.0
        %v3755 = vmax.f32 %v3439, 0.0
        %v3756 = vmax.f32 %v3608, 0.0
        %v3757 = vmax.f32 %v3441, 0.0
        %v3758 = vmax.f32 %v3610, 0.0
        %v3759 = vmax.f32 %v3444, 0.0
        %v3760 = vmax.f32 %v3613, 0.0
        %v3761 = vmax.f32 %v3446, 0.0
        %v3762 = vmax.f32 %v3615, 0.0
        %v3763 = vmax.f32 %v3449, 0.0
        %v3764 = vmax.f32 %v3618, 0.0
        %v3765 = vmax.f32 %v3451, 0.0
        %v3766 = vmax.f32 %v3620, 0.0
        %v3767 = vmax.f32 %v3454, 0.0
        %v3768 = vmax.f32 %v3623, 0.0
        %v3769 = vmax.f32 %v3456, 0.0
        %v3770 = vmax.f32 %v3625, 0.0
        %v3771 = vmax.f32 %v3459, 0.0
        %v3772 = vmax.f32 %v3628, 0.0
        %v3773 = vmax.f32 %v3461, 0.0
        %v3774 = vmax.f32 %v3630, 0.0
        %v3775 = vmax.f32 %v3464, 0.0
        %v3776 = vmax.f32 %v3633, 0.0
        %v3777 = vmax.f32 %v3466, 0.0
        %v3778 = vmax.f32 %v3635, 0.0
        %v3779 = vmax.f32 %v3469, 0.0
        %v3780 = vmax.f32 %v3638, 0.0
        %v3781 = vmax.f32 %v3471, 0.0
        %v3782 = vmax.f32 %v3640, 0.0
        %v3783 = vmax.f32 %v3474, 0.0
        %v3784 = vmax.f32 %v3643, 0.0
        %v3785 = vmax.f32 %v3476, 0.0
        %v3786 = vmax.f32 %v3645, 0.0
        %v3787 = vmax.f32 %v3479, 0.0
        %v3788 = vmax.f32 %v3648, 0.0
        %v3789 = vmax.f32 %v3481, 0.0
        %v3790 = vmax.f32 %v3650, 0.0
        %v3791 = vmax.f32 %v3484, 0.0
        %v3792 = vmax.f32 %v3653, 0.0
        %v3793 = vmax.f32 %v3486, 0.0
        %v3794 = vmax.f32 %v3655, 0.0
        %v3795 = vmax.f32 %v3489, 0.0
        %v3796 = vmax.f32 %v3658, 0.0
        %v3797 = vmax.f32 %v3491, 0.0
        %v3798 = vmax.f32 %v3660, 0.0
        %v3799 = vmax.f32 %v3494, 0.0
        %v3800 = vmax.f32 %v3663, 0.0
        %v3801 = vmax.f32 %v3496, 0.0
        %v3802 = vmax.f32 %v3665, 0.0
        %v3803 = vmax.f32 %v3499, 0.0
        %v3804 = vmax.f32 %v3668, 0.0
        %v3805 = vmax.f32 %v3501, 0.0
        %v3806 = vmax.f32 %v3670, 0.0
        %v3807 = vmax.f32 %v3504, 0.0
        %v3808 = vmax.f32 %v3673, 0.0
        %v3809 = vmax.f32 %v3506, 0.0
        %v3810 = vmax.f32 %v3675, 0.0
        %v3811 = vmax.f32 %v3509, 0.0
        %v3812 = vmax.f32 %v3678, 0.0
        %v3813 = vmax.f32 %v3511, 0.0
        %v3814 = vmax.f32 %v3680, 0.0
        %v3815 = vmax.f32 %v3514, 0.0
        %v3816 = vmax.f32 %v3683, 0.0
        %v3817 = vmax.f32 %v3516, 0.0
        %v3818 = vmax.f32 %v3685, 0.0
        %v3819 = vmax.f32 %v3519, 0.0
        %v3820 = vmax.f32 %v3688, 0.0
        %v3821 = vmax.f32 %v3521, 0.0
        %v3822 = vmax.f32 %v3690, 0.0
        %v3823 = vmax.f32 %v3524, 0.0
        %v3824 = vmax.f32 %v3693, 0.0
        %v3825 = vmax.f32 %v3526, 0.0
        %v3826 = vmax.f32 %v3695, 0.0
        %v3827 = vmax.f32 %v3529, 0.0
        %v3828 = vmax.f32 %v3698, 0.0
        %v3829 = vmax.f32 %v3531, 0.0
        %v3830 = vmax.f32 %v3700, 0.0
        %v3831 = vmax.f32 %v3534, 0.0
        %v3832 = vmax.f32 %v3703, 0.0
        %v3833 = vmax.f32 %v3536, 0.0
        %v3834 = vmax.f32 %v3705, 0.0
        %v3835 = vmax.f32 %v3707, %v3711
        %v3836 = vmax.f32 %v3709, %v3713
        %v3837 = vmax.f32 %v3835, %v3715
        %v3838 = vmax.f32 %v3836, %v3717
        %v3839 = vmax.f32 %v3837, %v3719
        %v3840 = vmax.f32 %v3838, %v3721
        %v3841 = vmax.f32 %v3839, %v3723
        %v3842 = vmax.f32 %v3840, %v3725
        %v3843 = vmax.f32 %v3841, %v3727
        %v3844 = vmax.f32 %v3842, %v3729
        %v3845 = vmax.f32 %v3843, %v3731
        %v3846 = vmax.f32 %v3844, %v3733
        %v3847 = vmax.f32 %v3845, %v3735
        %v3848 = vmax.f32 %v3846, %v3737
        %v3849 = vmax.f32 %v3847, %v3739
        %v3850 = vmax.f32 %v3848, %v3741
        %v3851 = vmax.f32 %v3849, %v3743
        %v3852 = vmax.f32 %v3850, %v3745
        %v3853 = vmax.f32 %v3851, %v3747
        %v3854 = vmax.f32 %v3852, %v3749
        %v3855 = vmax.f32 %v3853, %v3751
        %v3856 = vmax.f32 %v3854, %v3753
        %v3857 = vmax.f32 %v3855, %v3755
        %v3858 = vmax.f32 %v3856, %v3757
        %v3859 = vmax.f32 %v3857, %v3759
        %v3860 = vmax.f32 %v3858, %v3761
        %v3861 = vmax.f32 %v3859, %v3763
        %v3862 = vmax.f32 %v3860, %v3765
        %v3863 = vmax.f32 %v3861, %v3767
        %v3864 = vmax.f32 %v3862, %v3769
        %v3865 = vmax.f32 %v3863, %v3771
        %v3866 = vmax.f32 %v3864, %v3773
        %v3867 = vmax.f32 %v3865, %v3775
        %v3868 = vmax.f32 %v3866, %v3777
        %v3869 = vmax.f32 %v3867, %v3779
        %v3870 = vmax.f32 %v3868, %v3781
        %v3871 = vmax.f32 %v3869, %v3783
        %v3872 = vmax.f32 %v3870, %v3785
        %v3873 = vmax.f32 %v3871, %v3787
        %v3874 = vmax.f32 %v3872, %v3789
        %v3875 = vmax.f32 %v3873, %v3791
        %v3876 = vmax.f32 %v3874, %v3793
        %v3877 = vmax.f32 %v3875, %v3795
        %v3878 = vmax.f32 %v3876, %v3797
        %v3879 = vmax.f32 %v3877, %v3799
        %v3880 = vmax.f32 %v3878, %v3801
        %v3881 = vmax.f32 %v3879, %v3803
        %v3882 = vmax.f32 %v3880, %v3805
        %v3883 = vmax.f32 %v3881, %v3807
        %v3884 = vmax.f32 %v3882, %v3809
        %v3885 = vmax.f32 %v3883, %v3811
        %v3886 = vmax.f32 %v3884, %v3813
        %v3887 = vmax.f32 %v3885, %v3815
        %v3888 = vmax.f32 %v3886, %v3817
        %v3889 = vmax.f32 %v3887, %v3819
        %v3890 = vmax.f32 %v3888, %v3821
        %v3891 = vmax.f32 %v3889, %v3823
        %v3892 = vmax.f32 %v3890, %v3825
        %v3893 = vmax.f32 %v3891, %v3827
        %v3894 = vmax.f32 %v3892, %v3829
        %v3895 = vmax.f32 %v3893, %v3831
        %v3896 = vmax.f32 %v3894, %v3833
        %v3897 = vmax.f32 %v3895, %v3896
        %v3898 = vmax.f32 %v3708, %v3712
        %v3899 = vmax.f32 %v3710, %v3714
        %v3900 = vmax.f32 %v3898, %v3716
        %v3901 = vmax.f32 %v3899, %v3718
        %v3902 = vmax.f32 %v3900, %v3720
        %v3903 = vmax.f32 %v3901, %v3722
        %v3904 = vmax.f32 %v3902, %v3724
        %v3905 = vmax.f32 %v3903, %v3726
        %v3906 = vmax.f32 %v3904, %v3728
        %v3907 = vmax.f32 %v3905, %v3730
        %v3908 = vmax.f32 %v3906, %v3732
        %v3909 = vmax.f32 %v3907, %v3734
        %v3910 = vmax.f32 %v3908, %v3736
        %v3911 = vmax.f32 %v3909, %v3738
        %v3912 = vmax.f32 %v3910, %v3740
        %v3913 = vmax.f32 %v3911, %v3742
        %v3914 = vmax.f32 %v3912, %v3744
        %v3915 = vmax.f32 %v3913, %v3746
        %v3916 = vmax.f32 %v3914, %v3748
        %v3917 = vmax.f32 %v3915, %v3750
        %v3918 = vmax.f32 %v3916, %v3752
        %v3919 = vmax.f32 %v3917, %v3754
        %v3920 = vmax.f32 %v3918, %v3756
        %v3921 = vmax.f32 %v3919, %v3758
        %v3922 = vmax.f32 %v3920, %v3760
        %v3923 = vmax.f32 %v3921, %v3762
        %v3924 = vmax.f32 %v3922, %v3764
        %v3925 = vmax.f32 %v3923, %v3766
        %v3926 = vmax.f32 %v3924, %v3768
        %v3927 = vmax.f32 %v3925, %v3770
        %v3928 = vmax.f32 %v3926, %v3772
        %v3929 = vmax.f32 %v3927, %v3774
        %v3930 = vmax.f32 %v3928, %v3776
        %v3931 = vmax.f32 %v3929, %v3778
        %v3932 = vmax.f32 %v3930, %v3780
        %v3933 = vmax.f32 %v3931, %v3782
        %v3934 = vmax.f32 %v3932, %v3784
        %v3935 = vmax.f32 %v3933, %v3786
        %v3936 = vmax.f32 %v3934, %v3788
        %v3937 = vmax.f32 %v3935, %v3790
        %v3938 = vmax.f32 %v3936, %v3792
        %v3939 = vmax.f32 %v3937, %v3794
        %v3940 = vmax.f32 %v3938, %v3796
        %v3941 = vmax.f32 %v3939, %v3798
        %v3942 = vmax.f32 %v3940, %v3800
        %v3943 = vmax.f32 %v3941, %v3802
        %v3944 = vmax.f32 %v3942, %v3804
        %v3945 = vmax.f32 %v3943, %v3806
        %v3946 = vmax.f32 %v3944, %v3808
        %v3947 = vmax.f32 %v3945, %v3810
        %v3948 = vmax.f32 %v3946, %v3812
        %v3949 = vmax.f32 %v3947, %v3814
        %v3950 = vmax.f32 %v3948, %v3816
        %v3951 = vmax.f32 %v3949, %v3818
        %v3952 = vmax.f32 %v3950, %v3820
        %v3953 = vmax.f32 %v3951, %v3822
        %v3954 = vmax.f32 %v3952, %v3824
        %v3955 = vmax.f32 %v3953, %v3826
        %v3956 = vmax.f32 %v3954, %v3828
        %v3957 = vmax.f32 %v3955, %v3830
        %v3958 = vmax.f32 %v3956, %v3832
        %v3959 = vmax.f32 %v3957, %v3834
        %v3960 = vmax.f32 %v3958, %v3959
        %v3961 = vld [vmem:[%s362 + $0x10] sm:$0xff]
        %v3962 = vld [vmem:[%s362 + $0x18] sm:$0xff]
        %v3963 = vmax.f32 %v3961, %v3897
        %v3964 = vmax.f32 %v3962, %v3960
        %3965 = vst [vmem:[%s362 + $0x10] sm:$0xff] %v3963
        %3966 = vst [vmem:[%s362 + $0x18] sm:$0xff] %v3964
        %v3967 = vld [vmem:[%s7 + $0x10] sm:$0xff]
        %v3968 = vld [vmem:[%s7 + $0x30] sm:$0xff]
        %v3969 = vld [vmem:[%s7 + $0x50] sm:$0xff]
        %v3970 = vld [vmem:[%s7 + $0x70] sm:$0xff]
        %v3971 = vld [vmem:[%s7 + $0x90] sm:$0xff]
        %v3972 = vld [vmem:[%s7 + $0xb0] sm:$0xff]
        %v3973 = vld [vmem:[%s7 + $0xd0] sm:$0xff]
        %v3974 = vld [vmem:[%s7 + $0xf0] sm:$0xff]
        %v3975 = vld [vmem:[%s7 + $0x110] sm:$0xff]
        %v3976 = vld [vmem:[%s7 + $0x130] sm:$0xff]
        %v3977 = vld [vmem:[%s7 + $0x150] sm:$0xff]
        %v3978 = vld [vmem:[%s7 + $0x170] sm:$0xff]
        %v3979 = vld [vmem:[%s7 + $0x190] sm:$0xff]
        %v3980 = vld [vmem:[%s7 + $0x1b0] sm:$0xff]
        %v3981 = vld [vmem:[%s7 + $0x1d0] sm:$0xff]
        %v3982 = vld [vmem:[%s7 + $0x1f0] sm:$0xff]
        %v3983 = vld [vmem:[%s8 + $0x4] sm:$0x3]
        %v3985 = vperm.slane %v3983, 0
        %v3986 = vperm.slane %v3983, 1
        %v4005 = vunpack.c.l.b16 %v3967
        %v4006 = vunpack.c.h.b16 %v3967
        %v4007 = vunpack.c.l.b16 %v3968
        %v4008 = vunpack.c.h.b16 %v3968
        %v4009 = vunpack.c.l.b16 %v3969
        %v4010 = vunpack.c.h.b16 %v3969
        %v4011 = vunpack.c.l.b16 %v3970
        %v4012 = vunpack.c.h.b16 %v3970
        %v4013 = vunpack.c.l.b16 %v3971
        %v4014 = vunpack.c.h.b16 %v3971
        %v4015 = vunpack.c.l.b16 %v3972
        %v4016 = vunpack.c.h.b16 %v3972
        %v4017 = vunpack.c.l.b16 %v3973
        %v4018 = vunpack.c.h.b16 %v3973
        %v4019 = vunpack.c.l.b16 %v3974
        %v4020 = vunpack.c.h.b16 %v3974
        %v4021 = vunpack.c.l.b16 %v3975
        %v4022 = vunpack.c.h.b16 %v3975
        %v4023 = vunpack.c.l.b16 %v3976
        %v4024 = vunpack.c.h.b16 %v3976
        %v4025 = vunpack.c.l.b16 %v3977
        %v4026 = vunpack.c.h.b16 %v3977
        %v4027 = vunpack.c.l.b16 %v3978
        %v4028 = vunpack.c.h.b16 %v3978
        %v4029 = vunpack.c.l.b16 %v3979
        %v4030 = vunpack.c.h.b16 %v3979
        %v4031 = vunpack.c.l.b16 %v3980
        %v4032 = vunpack.c.h.b16 %v3980
        %v4033 = vunpack.c.l.b16 %v3981
        %v4034 = vunpack.c.h.b16 %v3981
        %v4035 = vunpack.c.l.b16 %v3982
        %v4036 = vunpack.c.h.b16 %v3982
        %v4037 = vpack.c.b16 %v4007, %v4005
        %v4038 = vpack.c.b16 %v4008, %v4006
        %v4039 = vpack.c.b16 %v4011, %v4009
        %v4040 = vpack.c.b16 %v4012, %v4010
        %v4041 = vpack.c.b16 %v4015, %v4013
        %v4042 = vpack.c.b16 %v4016, %v4014
        %v4043 = vpack.c.b16 %v4019, %v4017
        %v4044 = vpack.c.b16 %v4020, %v4018
        %v4045 = vpack.c.b16 %v4023, %v4021
        %v4046 = vpack.c.b16 %v4024, %v4022
        %v4047 = vpack.c.b16 %v4027, %v4025
        %v4048 = vpack.c.b16 %v4028, %v4026
        %v4049 = vpack.c.b16 %v4031, %v4029
        %v4050 = vpack.c.b16 %v4032, %v4030
        %v4051 = vpack.c.b16 %v4035, %v4033
        %v4052 = vpack.c.b16 %v4036, %v4034
        %4069 = vmatpush.bf16.msra.mxu0 %v4051
        %4070 = vmatpush.bf16.msra.mxu0 %v4049
        %4071 = vmatpush.bf16.msra.mxu0 %v4047
        %4072 = vmatpush.bf16.msra.mxu0 %v4045
        %4073 = vmatpush.bf16.msra.mxu0 %v4043
        %4074 = vmatpush.bf16.msra.mxu0 %v4041
        %4075 = vmatpush.bf16.msra.mxu0 %v4039
        %4076 = vmatpush.bf16.msra.mxu0 %v4037
        %4077 = vmatmul.bf16.gmra.mxu0 %v2535
        %v4078 = vpop.f32.mrf.mxu0
        %v4079 = vadd.f32 %v3985, %v4078
        %v4080 = vpop.f32.mrf.mxu0
        %v4081 = vadd.f32 %v3985, %v4080
        %4082 = vmatmul.bf16.gmra.mxu0 %v2536
        %v4083 = vpop.f32.mrf.mxu0
        %v4084 = vadd.f32 %v3985, %v4083
        %v4085 = vpop.f32.mrf.mxu0
        %v4086 = vadd.f32 %v3985, %v4085
        %4087 = vmatmul.bf16.gmra.mxu0 %v2537
        %v4088 = vpop.f32.mrf.mxu0
        %v4089 = vadd.f32 %v3985, %v4088
        %v4090 = vpop.f32.mrf.mxu0
        %v4091 = vadd.f32 %v3985, %v4090
        %4092 = vmatmul.bf16.gmra.mxu0 %v2538
        %v4093 = vpop.f32.mrf.mxu0
        %v4094 = vadd.f32 %v3985, %v4093
        %v4095 = vpop.f32.mrf.mxu0
        %v4096 = vadd.f32 %v3985, %v4095
        %4097 = vmatmul.bf16.gmra.mxu0 %v2539
        %v4098 = vpop.f32.mrf.mxu0
        %v4099 = vadd.f32 %v3985, %v4098
        %v4100 = vpop.f32.mrf.mxu0
        %v4101 = vadd.f32 %v3985, %v4100
        %4102 = vmatmul.bf16.gmra.mxu0 %v2540
        %v4103 = vpop.f32.mrf.mxu0
        %v4104 = vadd.f32 %v3985, %v4103
        %v4105 = vpop.f32.mrf.mxu0
        %v4106 = vadd.f32 %v3985, %v4105
        %4107 = vmatmul.bf16.gmra.mxu0 %v2541
        %v4108 = vpop.f32.mrf.mxu0
        %v4109 = vadd.f32 %v3985, %v4108
        %v4110 = vpop.f32.mrf.mxu0
        %v4111 = vadd.f32 %v3985, %v4110
        %4112 = vmatmul.bf16.gmra.mxu0 %v2542
        %v4113 = vpop.f32.mrf.mxu0
        %v4114 = vadd.f32 %v3985, %v4113
        %v4115 = vpop.f32.mrf.mxu0
        %v4116 = vadd.f32 %v3985, %v4115
        %4117 = vmatmul.bf16.gmra.mxu0 %v2543
        %v4118 = vpop.f32.mrf.mxu0
        %v4119 = vadd.f32 %v3985, %v4118
        %v4120 = vpop.f32.mrf.mxu0
        %v4121 = vadd.f32 %v3985, %v4120
        %4122 = vmatmul.bf16.gmra.mxu0 %v2544
        %v4123 = vpop.f32.mrf.mxu0
        %v4124 = vadd.f32 %v3985, %v4123
        %v4125 = vpop.f32.mrf.mxu0
        %v4126 = vadd.f32 %v3985, %v4125
        %4127 = vmatmul.bf16.gmra.mxu0 %v2545
        %v4128 = vpop.f32.mrf.mxu0
        %v4129 = vadd.f32 %v3985, %v4128
        %v4130 = vpop.f32.mrf.mxu0
        %v4131 = vadd.f32 %v3985, %v4130
        %4132 = vmatmul.bf16.gmra.mxu0 %v2546
        %v4133 = vpop.f32.mrf.mxu0
        %v4134 = vadd.f32 %v3985, %v4133
        %v4135 = vpop.f32.mrf.mxu0
        %v4136 = vadd.f32 %v3985, %v4135
        %4137 = vmatmul.bf16.gmra.mxu0 %v2547
        %v4138 = vpop.f32.mrf.mxu0
        %v4139 = vadd.f32 %v3985, %v4138
        %v4140 = vpop.f32.mrf.mxu0
        %v4141 = vadd.f32 %v3985, %v4140
        %4142 = vmatmul.bf16.gmra.mxu0 %v2548
        %v4143 = vpop.f32.mrf.mxu0
        %v4144 = vadd.f32 %v3985, %v4143
        %v4145 = vpop.f32.mrf.mxu0
        %v4146 = vadd.f32 %v3985, %v4145
        %4147 = vmatmul.bf16.gmra.mxu0 %v2549
        %v4148 = vpop.f32.mrf.mxu0
        %v4149 = vadd.f32 %v3985, %v4148
        %v4150 = vpop.f32.mrf.mxu0
        %v4151 = vadd.f32 %v3985, %v4150
        %4152 = vmatmul.bf16.gmra.mxu0 %v2550
        %v4153 = vpop.f32.mrf.mxu0
        %v4154 = vadd.f32 %v3985, %v4153
        %v4155 = vpop.f32.mrf.mxu0
        %v4156 = vadd.f32 %v3985, %v4155
        %4157 = vmatmul.bf16.gmra.mxu0 %v2551
        %v4158 = vpop.f32.mrf.mxu0
        %v4159 = vadd.f32 %v3985, %v4158
        %v4160 = vpop.f32.mrf.mxu0
        %v4161 = vadd.f32 %v3985, %v4160
        %4162 = vmatmul.bf16.gmra.mxu0 %v2552
        %v4163 = vpop.f32.mrf.mxu0
        %v4164 = vadd.f32 %v3985, %v4163
        %v4165 = vpop.f32.mrf.mxu0
        %v4166 = vadd.f32 %v3985, %v4165
        %4167 = vmatmul.bf16.gmra.mxu0 %v2553
        %v4168 = vpop.f32.mrf.mxu0
        %v4169 = vadd.f32 %v3985, %v4168
        %v4170 = vpop.f32.mrf.mxu0
        %v4171 = vadd.f32 %v3985, %v4170
        %4172 = vmatmul.bf16.gmra.mxu0 %v2554
        %v4173 = vpop.f32.mrf.mxu0
        %v4174 = vadd.f32 %v3985, %v4173
        %v4175 = vpop.f32.mrf.mxu0
        %v4176 = vadd.f32 %v3985, %v4175
        %4177 = vmatmul.bf16.gmra.mxu0 %v2555
        %v4178 = vpop.f32.mrf.mxu0
        %v4179 = vadd.f32 %v3985, %v4178
        %v4180 = vpop.f32.mrf.mxu0
        %v4181 = vadd.f32 %v3985, %v4180
        %4182 = vmatmul.bf16.gmra.mxu0 %v2556
        %v4183 = vpop.f32.mrf.mxu0
        %v4184 = vadd.f32 %v3985, %v4183
        %v4185 = vpop.f32.mrf.mxu0
        %v4186 = vadd.f32 %v3985, %v4185
        %4187 = vmatmul.bf16.gmra.mxu0 %v2557
        %v4188 = vpop.f32.mrf.mxu0
        %v4189 = vadd.f32 %v3985, %v4188
        %v4190 = vpop.f32.mrf.mxu0
        %v4191 = vadd.f32 %v3985, %v4190
        %4192 = vmatmul.bf16.gmra.mxu0 %v2558
        %v4193 = vpop.f32.mrf.mxu0
        %v4194 = vadd.f32 %v3985, %v4193
        %v4195 = vpop.f32.mrf.mxu0
        %v4196 = vadd.f32 %v3985, %v4195
        %4197 = vmatmul.bf16.gmra.mxu0 %v2559
        %v4198 = vpop.f32.mrf.mxu0
        %v4199 = vadd.f32 %v3985, %v4198
        %v4200 = vpop.f32.mrf.mxu0
        %v4201 = vadd.f32 %v3985, %v4200
        %4202 = vmatmul.bf16.gmra.mxu0 %v2560
        %v4203 = vpop.f32.mrf.mxu0
        %v4204 = vadd.f32 %v3985, %v4203
        %v4205 = vpop.f32.mrf.mxu0
        %v4206 = vadd.f32 %v3985, %v4205
        %4207 = vmatmul.bf16.gmra.mxu0 %v2561
        %v4208 = vpop.f32.mrf.mxu0
        %v4209 = vadd.f32 %v3985, %v4208
        %v4210 = vpop.f32.mrf.mxu0
        %v4211 = vadd.f32 %v3985, %v4210
        %4212 = vmatmul.bf16.gmra.mxu0 %v2562
        %v4213 = vpop.f32.mrf.mxu0
        %v4214 = vadd.f32 %v3985, %v4213
        %v4215 = vpop.f32.mrf.mxu0
        %v4216 = vadd.f32 %v3985, %v4215
        %4217 = vmatmul.bf16.gmra.mxu0 %v2563
        %v4218 = vpop.f32.mrf.mxu0
        %v4219 = vadd.f32 %v3985, %v4218
        %v4220 = vpop.f32.mrf.mxu0
        %v4221 = vadd.f32 %v3985, %v4220
        %4222 = vmatmul.bf16.gmra.mxu0 %v2564
        %v4223 = vpop.f32.mrf.mxu0
        %v4224 = vadd.f32 %v3985, %v4223
        %v4225 = vpop.f32.mrf.mxu0
        %v4226 = vadd.f32 %v3985, %v4225
        %4227 = vmatmul.bf16.gmra.mxu0 %v2565
        %v4228 = vpop.f32.mrf.mxu0
        %v4229 = vadd.f32 %v3985, %v4228
        %v4230 = vpop.f32.mrf.mxu0
        %v4231 = vadd.f32 %v3985, %v4230
        %4232 = vmatmul.bf16.gmra.mxu0 %v2566
        %v4233 = vpop.f32.mrf.mxu0
        %v4234 = vadd.f32 %v3985, %v4233
        %v4235 = vpop.f32.mrf.mxu0
        %v4236 = vadd.f32 %v3985, %v4235
        %4237 = vdwg.mxu0
        %4238 = vmatpush.bf16.msra.mxu0 %v4052
        %4239 = vmatpush.bf16.msra.mxu0 %v4050
        %4240 = vmatpush.bf16.msra.mxu0 %v4048
        %4241 = vmatpush.bf16.msra.mxu0 %v4046
        %4242 = vmatpush.bf16.msra.mxu0 %v4044
        %4243 = vmatpush.bf16.msra.mxu0 %v4042
        %4244 = vmatpush.bf16.msra.mxu0 %v4040
        %4245 = vmatpush.bf16.msra.mxu0 %v4038
        %4246 = vmatmul.bf16.gmra.mxu0 %v2535
        %v4247 = vpop.f32.mrf.mxu0
        %v4248 = vadd.f32 %v3986, %v4247
        %v4249 = vpop.f32.mrf.mxu0
        %v4250 = vadd.f32 %v3986, %v4249
        %4251 = vmatmul.bf16.gmra.mxu0 %v2536
        %v4252 = vpop.f32.mrf.mxu0
        %v4253 = vadd.f32 %v3986, %v4252
        %v4254 = vpop.f32.mrf.mxu0
        %v4255 = vadd.f32 %v3986, %v4254
        %4256 = vmatmul.bf16.gmra.mxu0 %v2537
        %v4257 = vpop.f32.mrf.mxu0
        %v4258 = vadd.f32 %v3986, %v4257
        %v4259 = vpop.f32.mrf.mxu0
        %v4260 = vadd.f32 %v3986, %v4259
        %4261 = vmatmul.bf16.gmra.mxu0 %v2538
        %v4262 = vpop.f32.mrf.mxu0
        %v4263 = vadd.f32 %v3986, %v4262
        %v4264 = vpop.f32.mrf.mxu0
        %v4265 = vadd.f32 %v3986, %v4264
        %4266 = vmatmul.bf16.gmra.mxu0 %v2539
        %v4267 = vpop.f32.mrf.mxu0
        %v4268 = vadd.f32 %v3986, %v4267
        %v4269 = vpop.f32.mrf.mxu0
        %v4270 = vadd.f32 %v3986, %v4269
        %4271 = vmatmul.bf16.gmra.mxu0 %v2540
        %v4272 = vpop.f32.mrf.mxu0
        %v4273 = vadd.f32 %v3986, %v4272
        %v4274 = vpop.f32.mrf.mxu0
        %v4275 = vadd.f32 %v3986, %v4274
        %4276 = vmatmul.bf16.gmra.mxu0 %v2541
        %v4277 = vpop.f32.mrf.mxu0
        %v4278 = vadd.f32 %v3986, %v4277
        %v4279 = vpop.f32.mrf.mxu0
        %v4280 = vadd.f32 %v3986, %v4279
        %4281 = vmatmul.bf16.gmra.mxu0 %v2542
        %v4282 = vpop.f32.mrf.mxu0
        %v4283 = vadd.f32 %v3986, %v4282
        %v4284 = vpop.f32.mrf.mxu0
        %v4285 = vadd.f32 %v3986, %v4284
        %4286 = vmatmul.bf16.gmra.mxu0 %v2543
        %v4287 = vpop.f32.mrf.mxu0
        %v4288 = vadd.f32 %v3986, %v4287
        %v4289 = vpop.f32.mrf.mxu0
        %v4290 = vadd.f32 %v3986, %v4289
        %4291 = vmatmul.bf16.gmra.mxu0 %v2544
        %v4292 = vpop.f32.mrf.mxu0
        %v4293 = vadd.f32 %v3986, %v4292
        %v4294 = vpop.f32.mrf.mxu0
        %v4295 = vadd.f32 %v3986, %v4294
        %4296 = vmatmul.bf16.gmra.mxu0 %v2545
        %v4297 = vpop.f32.mrf.mxu0
        %v4298 = vadd.f32 %v3986, %v4297
        %v4299 = vpop.f32.mrf.mxu0
        %v4300 = vadd.f32 %v3986, %v4299
        %4301 = vmatmul.bf16.gmra.mxu0 %v2546
        %v4302 = vpop.f32.mrf.mxu0
        %v4303 = vadd.f32 %v3986, %v4302
        %v4304 = vpop.f32.mrf.mxu0
        %v4305 = vadd.f32 %v3986, %v4304
        %4306 = vmatmul.bf16.gmra.mxu0 %v2547
        %v4307 = vpop.f32.mrf.mxu0
        %v4308 = vadd.f32 %v3986, %v4307
        %v4309 = vpop.f32.mrf.mxu0
        %v4310 = vadd.f32 %v3986, %v4309
        %4311 = vmatmul.bf16.gmra.mxu0 %v2548
        %v4312 = vpop.f32.mrf.mxu0
        %v4313 = vadd.f32 %v3986, %v4312
        %v4314 = vpop.f32.mrf.mxu0
        %v4315 = vadd.f32 %v3986, %v4314
        %4316 = vmatmul.bf16.gmra.mxu0 %v2549
        %v4317 = vpop.f32.mrf.mxu0
        %v4318 = vadd.f32 %v3986, %v4317
        %v4319 = vpop.f32.mrf.mxu0
        %v4320 = vadd.f32 %v3986, %v4319
        %4321 = vmatmul.bf16.gmra.mxu0 %v2550
        %v4322 = vpop.f32.mrf.mxu0
        %v4323 = vadd.f32 %v3986, %v4322
        %v4324 = vpop.f32.mrf.mxu0
        %v4325 = vadd.f32 %v3986, %v4324
        %4326 = vmatmul.bf16.gmra.mxu0 %v2551
        %v4327 = vpop.f32.mrf.mxu0
        %v4328 = vadd.f32 %v3986, %v4327
        %v4329 = vpop.f32.mrf.mxu0
        %v4330 = vadd.f32 %v3986, %v4329
        %4331 = vmatmul.bf16.gmra.mxu0 %v2552
        %v4332 = vpop.f32.mrf.mxu0
        %v4333 = vadd.f32 %v3986, %v4332
        %v4334 = vpop.f32.mrf.mxu0
        %v4335 = vadd.f32 %v3986, %v4334
        %4336 = vmatmul.bf16.gmra.mxu0 %v2553
        %v4337 = vpop.f32.mrf.mxu0
        %v4338 = vadd.f32 %v3986, %v4337
        %v4339 = vpop.f32.mrf.mxu0
        %v4340 = vadd.f32 %v3986, %v4339
        %4341 = vmatmul.bf16.gmra.mxu0 %v2554
        %v4342 = vpop.f32.mrf.mxu0
        %v4343 = vadd.f32 %v3986, %v4342
        %v4344 = vpop.f32.mrf.mxu0
        %v4345 = vadd.f32 %v3986, %v4344
        %4346 = vmatmul.bf16.gmra.mxu0 %v2555
        %v4347 = vpop.f32.mrf.mxu0
        %v4348 = vadd.f32 %v3986, %v4347
        %v4349 = vpop.f32.mrf.mxu0
        %v4350 = vadd.f32 %v3986, %v4349
        %4351 = vmatmul.bf16.gmra.mxu0 %v2556
        %v4352 = vpop.f32.mrf.mxu0
        %v4353 = vadd.f32 %v3986, %v4352
        %v4354 = vpop.f32.mrf.mxu0
        %v4355 = vadd.f32 %v3986, %v4354
        %4356 = vmatmul.bf16.gmra.mxu0 %v2557
        %v4357 = vpop.f32.mrf.mxu0
        %v4358 = vadd.f32 %v3986, %v4357
        %v4359 = vpop.f32.mrf.mxu0
        %v4360 = vadd.f32 %v3986, %v4359
        %4361 = vmatmul.bf16.gmra.mxu0 %v2558
        %v4362 = vpop.f32.mrf.mxu0
        %v4363 = vadd.f32 %v3986, %v4362
        %v4364 = vpop.f32.mrf.mxu0
        %v4365 = vadd.f32 %v3986, %v4364
        %4366 = vmatmul.bf16.gmra.mxu0 %v2559
        %v4367 = vpop.f32.mrf.mxu0
        %v4368 = vadd.f32 %v3986, %v4367
        %v4369 = vpop.f32.mrf.mxu0
        %v4370 = vadd.f32 %v3986, %v4369
        %4371 = vmatmul.bf16.gmra.mxu0 %v2560
        %v4372 = vpop.f32.mrf.mxu0
        %v4373 = vadd.f32 %v3986, %v4372
        %v4374 = vpop.f32.mrf.mxu0
        %v4375 = vadd.f32 %v3986, %v4374
        %4376 = vmatmul.bf16.gmra.mxu0 %v2561
        %v4377 = vpop.f32.mrf.mxu0
        %v4378 = vadd.f32 %v3986, %v4377
        %v4379 = vpop.f32.mrf.mxu0
        %v4380 = vadd.f32 %v3986, %v4379
        %4381 = vmatmul.bf16.gmra.mxu0 %v2562
        %v4382 = vpop.f32.mrf.mxu0
        %v4383 = vadd.f32 %v3986, %v4382
        %v4384 = vpop.f32.mrf.mxu0
        %v4385 = vadd.f32 %v3986, %v4384
        %4386 = vmatmul.bf16.gmra.mxu0 %v2563
        %v4387 = vpop.f32.mrf.mxu0
        %v4388 = vadd.f32 %v3986, %v4387
        %v4389 = vpop.f32.mrf.mxu0
        %v4390 = vadd.f32 %v3986, %v4389
        %4391 = vmatmul.bf16.gmra.mxu0 %v2564
        %v4392 = vpop.f32.mrf.mxu0
        %v4393 = vadd.f32 %v3986, %v4392
        %v4394 = vpop.f32.mrf.mxu0
        %v4395 = vadd.f32 %v3986, %v4394
        %4396 = vmatmul.bf16.gmra.mxu0 %v2565
        %v4397 = vpop.f32.mrf.mxu0
        %v4398 = vadd.f32 %v3986, %v4397
        %v4399 = vpop.f32.mrf.mxu0
        %v4400 = vadd.f32 %v3986, %v4399
        %4401 = vmatmul.bf16.gmra.mxu0 %v2566
        %v4402 = vpop.f32.mrf.mxu0
        %v4403 = vadd.f32 %v3986, %v4402
        %v4404 = vpop.f32.mrf.mxu0
        %v4405 = vadd.f32 %v3986, %v4404
        %4406 = vdwg.mxu0
        %v4407 = vmax.f32 %v4079, 0.0
        %v4408 = vmax.f32 %v4248, 0.0
        %v4409 = vmax.f32 %v4081, 0.0
        %v4410 = vmax.f32 %v4250, 0.0
        %v4411 = vmax.f32 %v4084, 0.0
        %v4412 = vmax.f32 %v4253, 0.0
        %v4413 = vmax.f32 %v4086, 0.0
        %v4414 = vmax.f32 %v4255, 0.0
        %v4415 = vmax.f32 %v4089, 0.0
        %v4416 = vmax.f32 %v4258, 0.0
        %v4417 = vmax.f32 %v4091, 0.0
        %v4418 = vmax.f32 %v4260, 0.0
        %v4419 = vmax.f32 %v4094, 0.0
        %v4420 = vmax.f32 %v4263, 0.0
        %v4421 = vmax.f32 %v4096, 0.0
        %v4422 = vmax.f32 %v4265, 0.0
        %v4423 = vmax.f32 %v4099, 0.0
        %v4424 = vmax.f32 %v4268, 0.0
        %v4425 = vmax.f32 %v4101, 0.0
        %v4426 = vmax.f32 %v4270, 0.0
        %v4427 = vmax.f32 %v4104, 0.0
        %v4428 = vmax.f32 %v4273, 0.0
        %v4429 = vmax.f32 %v4106, 0.0
        %v4430 = vmax.f32 %v4275, 0.0
        %v4431 = vmax.f32 %v4109, 0.0
        %v4432 = vmax.f32 %v4278, 0.0
        %v4433 = vmax.f32 %v4111, 0.0
        %v4434 = vmax.f32 %v4280, 0.0
        %v4435 = vmax.f32 %v4114, 0.0
        %v4436 = vmax.f32 %v4283, 0.0
        %v4437 = vmax.f32 %v4116, 0.0
        %v4438 = vmax.f32 %v4285, 0.0
        %v4439 = vmax.f32 %v4119, 0.0
        %v4440 = vmax.f32 %v4288, 0.0
        %v4441 = vmax.f32 %v4121, 0.0
        %v4442 = vmax.f32 %v4290, 0.0
        %v4443 = vmax.f32 %v4124, 0.0
        %v4444 = vmax.f32 %v4293, 0.0
        %v4445 = vmax.f32 %v4126, 0.0
        %v4446 = vmax.f32 %v4295, 0.0
        %v4447 = vmax.f32 %v4129, 0.0
        %v4448 = vmax.f32 %v4298, 0.0
        %v4449 = vmax.f32 %v4131, 0.0
        %v4450 = vmax.f32 %v4300, 0.0
        %v4451 = vmax.f32 %v4134, 0.0
        %v4452 = vmax.f32 %v4303, 0.0
        %v4453 = vmax.f32 %v4136, 0.0
        %v4454 = vmax.f32 %v4305, 0.0
        %v4455 = vmax.f32 %v4139, 0.0
        %v4456 = vmax.f32 %v4308, 0.0
        %v4457 = vmax.f32 %v4141, 0.0
        %v4458 = vmax.f32 %v4310, 0.0
        %v4459 = vmax.f32 %v4144, 0.0
        %v4460 = vmax.f32 %v4313, 0.0
        %v4461 = vmax.f32 %v4146, 0.0
        %v4462 = vmax.f32 %v4315, 0.0
        %v4463 = vmax.f32 %v4149, 0.0
        %v4464 = vmax.f32 %v4318, 0.0
        %v4465 = vmax.f32 %v4151, 0.0
        %v4466 = vmax.f32 %v4320, 0.0
        %v4467 = vmax.f32 %v4154, 0.0
        %v4468 = vmax.f32 %v4323, 0.0
        %v4469 = vmax.f32 %v4156, 0.0
        %v4470 = vmax.f32 %v4325, 0.0
        %v4471 = vmax.f32 %v4159, 0.0
        %v4472 = vmax.f32 %v4328, 0.0
        %v4473 = vmax.f32 %v4161, 0.0
        %v4474 = vmax.f32 %v4330, 0.0
        %v4475 = vmax.f32 %v4164, 0.0
        %v4476 = vmax.f32 %v4333, 0.0
        %v4477 = vmax.f32 %v4166, 0.0
        %v4478 = vmax.f32 %v4335, 0.0
        %v4479 = vmax.f32 %v4169, 0.0
        %v4480 = vmax.f32 %v4338, 0.0
        %v4481 = vmax.f32 %v4171, 0.0
        %v4482 = vmax.f32 %v4340, 0.0
        %v4483 = vmax.f32 %v4174, 0.0
        %v4484 = vmax.f32 %v4343, 0.0
        %v4485 = vmax.f32 %v4176, 0.0
        %v4486 = vmax.f32 %v4345, 0.0
        %v4487 = vmax.f32 %v4179, 0.0
        %v4488 = vmax.f32 %v4348, 0.0
        %v4489 = vmax.f32 %v4181, 0.0
        %v4490 = vmax.f32 %v4350, 0.0
        %v4491 = vmax.f32 %v4184, 0.0
        %v4492 = vmax.f32 %v4353, 0.0
        %v4493 = vmax.f32 %v4186, 0.0
        %v4494 = vmax.f32 %v4355, 0.0
        %v4495 = vmax.f32 %v4189, 0.0
        %v4496 = vmax.f32 %v4358, 0.0
        %v4497 = vmax.f32 %v4191, 0.0
        %v4498 = vmax.f32 %v4360, 0.0
        %v4499 = vmax.f32 %v4194, 0.0
        %v4500 = vmax.f32 %v4363, 0.0
        %v4501 = vmax.f32 %v4196, 0.0
        %v4502 = vmax.f32 %v4365, 0.0
        %v4503 = vmax.f32 %v4199, 0.0
        %v4504 = vmax.f32 %v4368, 0.0
        %v4505 = vmax.f32 %v4201, 0.0
        %v4506 = vmax.f32 %v4370, 0.0
        %v4507 = vmax.f32 %v4204, 0.0
        %v4508 = vmax.f32 %v4373, 0.0
        %v4509 = vmax.f32 %v4206, 0.0
        %v4510 = vmax.f32 %v4375, 0.0
        %v4511 = vmax.f32 %v4209, 0.0
        %v4512 = vmax.f32 %v4378, 0.0
        %v4513 = vmax.f32 %v4211, 0.0
        %v4514 = vmax.f32 %v4380, 0.0
        %v4515 = vmax.f32 %v4214, 0.0
        %v4516 = vmax.f32 %v4383, 0.0
        %v4517 = vmax.f32 %v4216, 0.0
        %v4518 = vmax.f32 %v4385, 0.0
        %v4519 = vmax.f32 %v4219, 0.0
        %v4520 = vmax.f32 %v4388, 0.0
        %v4521 = vmax.f32 %v4221, 0.0
        %v4522 = vmax.f32 %v4390, 0.0
        %v4523 = vmax.f32 %v4224, 0.0
        %v4524 = vmax.f32 %v4393, 0.0
        %v4525 = vmax.f32 %v4226, 0.0
        %v4526 = vmax.f32 %v4395, 0.0
        %v4527 = vmax.f32 %v4229, 0.0
        %v4528 = vmax.f32 %v4398, 0.0
        %v4529 = vmax.f32 %v4231, 0.0
        %v4530 = vmax.f32 %v4400, 0.0
        %v4531 = vmax.f32 %v4234, 0.0
        %v4532 = vmax.f32 %v4403, 0.0
        %v4533 = vmax.f32 %v4236, 0.0
        %v4534 = vmax.f32 %v4405, 0.0
        %v4535 = vmax.f32 %v4407, %v4411
        %v4536 = vmax.f32 %v4409, %v4413
        %v4537 = vmax.f32 %v4535, %v4415
        %v4538 = vmax.f32 %v4536, %v4417
        %v4539 = vmax.f32 %v4537, %v4419
        %v4540 = vmax.f32 %v4538, %v4421
        %v4541 = vmax.f32 %v4539, %v4423
        %v4542 = vmax.f32 %v4540, %v4425
        %v4543 = vmax.f32 %v4541, %v4427
        %v4544 = vmax.f32 %v4542, %v4429
        %v4545 = vmax.f32 %v4543, %v4431
        %v4546 = vmax.f32 %v4544, %v4433
        %v4547 = vmax.f32 %v4545, %v4435
        %v4548 = vmax.f32 %v4546, %v4437
        %v4549 = vmax.f32 %v4547, %v4439
        %v4550 = vmax.f32 %v4548, %v4441
        %v4551 = vmax.f32 %v4549, %v4443
        %v4552 = vmax.f32 %v4550, %v4445
        %v4553 = vmax.f32 %v4551, %v4447
        %v4554 = vmax.f32 %v4552, %v4449
        %v4555 = vmax.f32 %v4553, %v4451
        %v4556 = vmax.f32 %v4554, %v4453
        %v4557 = vmax.f32 %v4555, %v4455
        %v4558 = vmax.f32 %v4556, %v4457
        %v4559 = vmax.f32 %v4557, %v4459
        %v4560 = vmax.f32 %v4558, %v4461
        %v4561 = vmax.f32 %v4559, %v4463
        %v4562 = vmax.f32 %v4560, %v4465
        %v4563 = vmax.f32 %v4561, %v4467
        %v4564 = vmax.f32 %v4562, %v4469
        %v4565 = vmax.f32 %v4563, %v4471
        %v4566 = vmax.f32 %v4564, %v4473
        %v4567 = vmax.f32 %v4565, %v4475
        %v4568 = vmax.f32 %v4566, %v4477
        %v4569 = vmax.f32 %v4567, %v4479
        %v4570 = vmax.f32 %v4568, %v4481
        %v4571 = vmax.f32 %v4569, %v4483
        %v4572 = vmax.f32 %v4570, %v4485
        %v4573 = vmax.f32 %v4571, %v4487
        %v4574 = vmax.f32 %v4572, %v4489
        %v4575 = vmax.f32 %v4573, %v4491
        %v4576 = vmax.f32 %v4574, %v4493
        %v4577 = vmax.f32 %v4575, %v4495
        %v4578 = vmax.f32 %v4576, %v4497
        %v4579 = vmax.f32 %v4577, %v4499
        %v4580 = vmax.f32 %v4578, %v4501
        %v4581 = vmax.f32 %v4579, %v4503
        %v4582 = vmax.f32 %v4580, %v4505
        %v4583 = vmax.f32 %v4581, %v4507
        %v4584 = vmax.f32 %v4582, %v4509
        %v4585 = vmax.f32 %v4583, %v4511
        %v4586 = vmax.f32 %v4584, %v4513
        %v4587 = vmax.f32 %v4585, %v4515
        %v4588 = vmax.f32 %v4586, %v4517
        %v4589 = vmax.f32 %v4587, %v4519
        %v4590 = vmax.f32 %v4588, %v4521
        %v4591 = vmax.f32 %v4589, %v4523
        %v4592 = vmax.f32 %v4590, %v4525
        %v4593 = vmax.f32 %v4591, %v4527
        %v4594 = vmax.f32 %v4592, %v4529
        %v4595 = vmax.f32 %v4593, %v4531
        %v4596 = vmax.f32 %v4594, %v4533
        %v4597 = vmax.f32 %v4595, %v4596
        %v4598 = vmax.f32 %v4408, %v4412
        %v4599 = vmax.f32 %v4410, %v4414
        %v4600 = vmax.f32 %v4598, %v4416
        %v4601 = vmax.f32 %v4599, %v4418
        %v4602 = vmax.f32 %v4600, %v4420
        %v4603 = vmax.f32 %v4601, %v4422
        %v4604 = vmax.f32 %v4602, %v4424
        %v4605 = vmax.f32 %v4603, %v4426
        %v4606 = vmax.f32 %v4604, %v4428
        %v4607 = vmax.f32 %v4605, %v4430
        %v4608 = vmax.f32 %v4606, %v4432
        %v4609 = vmax.f32 %v4607, %v4434
        %v4610 = vmax.f32 %v4608, %v4436
        %v4611 = vmax.f32 %v4609, %v4438
        %v4612 = vmax.f32 %v4610, %v4440
        %v4613 = vmax.f32 %v4611, %v4442
        %v4614 = vmax.f32 %v4612, %v4444
        %v4615 = vmax.f32 %v4613, %v4446
        %v4616 = vmax.f32 %v4614, %v4448
        %v4617 = vmax.f32 %v4615, %v4450
        %v4618 = vmax.f32 %v4616, %v4452
        %v4619 = vmax.f32 %v4617, %v4454
        %v4620 = vmax.f32 %v4618, %v4456
        %v4621 = vmax.f32 %v4619, %v4458
        %v4622 = vmax.f32 %v4620, %v4460
        %v4623 = vmax.f32 %v4621, %v4462
        %v4624 = vmax.f32 %v4622, %v4464
        %v4625 = vmax.f32 %v4623, %v4466
        %v4626 = vmax.f32 %v4624, %v4468
        %v4627 = vmax.f32 %v4625, %v4470
        %v4628 = vmax.f32 %v4626, %v4472
        %v4629 = vmax.f32 %v4627, %v4474
        %v4630 = vmax.f32 %v4628, %v4476
        %v4631 = vmax.f32 %v4629, %v4478
        %v4632 = vmax.f32 %v4630, %v4480
        %v4633 = vmax.f32 %v4631, %v4482
        %v4634 = vmax.f32 %v4632, %v4484
        %v4635 = vmax.f32 %v4633, %v4486
        %v4636 = vmax.f32 %v4634, %v4488
        %v4637 = vmax.f32 %v4635, %v4490
        %v4638 = vmax.f32 %v4636, %v4492
        %v4639 = vmax.f32 %v4637, %v4494
        %v4640 = vmax.f32 %v4638, %v4496
        %v4641 = vmax.f32 %v4639, %v4498
        %v4642 = vmax.f32 %v4640, %v4500
        %v4643 = vmax.f32 %v4641, %v4502
        %v4644 = vmax.f32 %v4642, %v4504
        %v4645 = vmax.f32 %v4643, %v4506
        %v4646 = vmax.f32 %v4644, %v4508
        %v4647 = vmax.f32 %v4645, %v4510
        %v4648 = vmax.f32 %v4646, %v4512
        %v4649 = vmax.f32 %v4647, %v4514
        %v4650 = vmax.f32 %v4648, %v4516
        %v4651 = vmax.f32 %v4649, %v4518
        %v4652 = vmax.f32 %v4650, %v4520
        %v4653 = vmax.f32 %v4651, %v4522
        %v4654 = vmax.f32 %v4652, %v4524
        %v4655 = vmax.f32 %v4653, %v4526
        %v4656 = vmax.f32 %v4654, %v4528
        %v4657 = vmax.f32 %v4655, %v4530
        %v4658 = vmax.f32 %v4656, %v4532
        %v4659 = vmax.f32 %v4657, %v4534
        %v4660 = vmax.f32 %v4658, %v4659
        %v4661 = vld [vmem:[%s362 + $0x20] sm:$0xff]
        %v4662 = vld [vmem:[%s362 + $0x28] sm:$0xff]
        %v4663 = vmax.f32 %v4661, %v4597
        %v4664 = vmax.f32 %v4662, %v4660
        %4665 = vst [vmem:[%s362 + $0x20] sm:$0xff] %v4663
        %4666 = vst [vmem:[%s362 + $0x28] sm:$0xff] %v4664
        %v4667 = vld [vmem:[%s7 + $0x18] sm:$0xff]
        %v4668 = vld [vmem:[%s7 + $0x38] sm:$0xff]
        %v4669 = vld [vmem:[%s7 + $0x58] sm:$0xff]
        %v4670 = vld [vmem:[%s7 + $0x78] sm:$0xff]
        %v4671 = vld [vmem:[%s7 + $0x98] sm:$0xff]
        %v4672 = vld [vmem:[%s7 + $0xb8] sm:$0xff]
        %v4673 = vld [vmem:[%s7 + $0xd8] sm:$0xff]
        %v4674 = vld [vmem:[%s7 + $0xf8] sm:$0xff]
        %v4675 = vld [vmem:[%s7 + $0x118] sm:$0xff]
        %v4676 = vld [vmem:[%s7 + $0x138] sm:$0xff]
        %v4677 = vld [vmem:[%s7 + $0x158] sm:$0xff]
        %v4678 = vld [vmem:[%s7 + $0x178] sm:$0xff]
        %v4679 = vld [vmem:[%s7 + $0x198] sm:$0xff]
        %v4680 = vld [vmem:[%s7 + $0x1b8] sm:$0xff]
        %v4681 = vld [vmem:[%s7 + $0x1d8] sm:$0xff]
        %v4682 = vld [vmem:[%s7 + $0x1f8] sm:$0xff]
        %v4683 = vld [vmem:[%s8 + $0x6] sm:$0x3]
        %v4685 = vperm.slane %v4683, 0
        %v4686 = vperm.slane %v4683, 1
        %v4705 = vunpack.c.l.b16 %v4667
        %v4706 = vunpack.c.h.b16 %v4667
        %v4707 = vunpack.c.l.b16 %v4668
        %v4708 = vunpack.c.h.b16 %v4668
        %v4709 = vunpack.c.l.b16 %v4669
        %v4710 = vunpack.c.h.b16 %v4669
        %v4711 = vunpack.c.l.b16 %v4670
        %v4712 = vunpack.c.h.b16 %v4670
        %v4713 = vunpack.c.l.b16 %v4671
        %v4714 = vunpack.c.h.b16 %v4671
        %v4715 = vunpack.c.l.b16 %v4672
        %v4716 = vunpack.c.h.b16 %v4672
        %v4717 = vunpack.c.l.b16 %v4673
        %v4718 = vunpack.c.h.b16 %v4673
        %v4719 = vunpack.c.l.b16 %v4674
        %v4720 = vunpack.c.h.b16 %v4674
        %v4721 = vunpack.c.l.b16 %v4675
        %v4722 = vunpack.c.h.b16 %v4675
        %v4723 = vunpack.c.l.b16 %v4676
        %v4724 = vunpack.c.h.b16 %v4676
        %v4725 = vunpack.c.l.b16 %v4677
        %v4726 = vunpack.c.h.b16 %v4677
        %v4727 = vunpack.c.l.b16 %v4678
        %v4728 = vunpack.c.h.b16 %v4678
        %v4729 = vunpack.c.l.b16 %v4679
        %v4730 = vunpack.c.h.b16 %v4679
        %v4731 = vunpack.c.l.b16 %v4680
        %v4732 = vunpack.c.h.b16 %v4680
        %v4733 = vunpack.c.l.b16 %v4681
        %v4734 = vunpack.c.h.b16 %v4681
        %v4735 = vunpack.c.l.b16 %v4682
        %v4736 = vunpack.c.h.b16 %v4682
        %v4737 = vpack.c.b16 %v4707, %v4705
        %v4738 = vpack.c.b16 %v4708, %v4706
        %v4739 = vpack.c.b16 %v4711, %v4709
        %v4740 = vpack.c.b16 %v4712, %v4710
        %v4741 = vpack.c.b16 %v4715, %v4713
        %v4742 = vpack.c.b16 %v4716, %v4714
        %v4743 = vpack.c.b16 %v4719, %v4717
        %v4744 = vpack.c.b16 %v4720, %v4718
        %v4745 = vpack.c.b16 %v4723, %v4721
        %v4746 = vpack.c.b16 %v4724, %v4722
        %v4747 = vpack.c.b16 %v4727, %v4725
        %v4748 = vpack.c.b16 %v4728, %v4726
        %v4749 = vpack.c.b16 %v4731, %v4729
        %v4750 = vpack.c.b16 %v4732, %v4730
        %v4751 = vpack.c.b16 %v4735, %v4733
        %v4752 = vpack.c.b16 %v4736, %v4734
        %4769 = vmatpush.bf16.msra.mxu0 %v4751
        %4770 = vmatpush.bf16.msra.mxu0 %v4749
        %4771 = vmatpush.bf16.msra.mxu0 %v4747
        %4772 = vmatpush.bf16.msra.mxu0 %v4745
        %4773 = vmatpush.bf16.msra.mxu0 %v4743
        %4774 = vmatpush.bf16.msra.mxu0 %v4741
        %4775 = vmatpush.bf16.msra.mxu0 %v4739
        %4776 = vmatpush.bf16.msra.mxu0 %v4737
        %4777 = vmatmul.bf16.gmra.mxu0 %v2535
        %v4778 = vpop.f32.mrf.mxu0
        %v4779 = vadd.f32 %v4685, %v4778
        %v4780 = vpop.f32.mrf.mxu0
        %v4781 = vadd.f32 %v4685, %v4780
        %4782 = vmatmul.bf16.gmra.mxu0 %v2536
        %v4783 = vpop.f32.mrf.mxu0
        %v4784 = vadd.f32 %v4685, %v4783
        %v4785 = vpop.f32.mrf.mxu0
        %v4786 = vadd.f32 %v4685, %v4785
        %4787 = vmatmul.bf16.gmra.mxu0 %v2537
        %v4788 = vpop.f32.mrf.mxu0
        %v4789 = vadd.f32 %v4685, %v4788
        %v4790 = vpop.f32.mrf.mxu0
        %v4791 = vadd.f32 %v4685, %v4790
        %4792 = vmatmul.bf16.gmra.mxu0 %v2538
        %v4793 = vpop.f32.mrf.mxu0
        %v4794 = vadd.f32 %v4685, %v4793
        %v4795 = vpop.f32.mrf.mxu0
        %v4796 = vadd.f32 %v4685, %v4795
        %4797 = vmatmul.bf16.gmra.mxu0 %v2539
        %v4798 = vpop.f32.mrf.mxu0
        %v4799 = vadd.f32 %v4685, %v4798
        %v4800 = vpop.f32.mrf.mxu0
        %v4801 = vadd.f32 %v4685, %v4800
        %4802 = vmatmul.bf16.gmra.mxu0 %v2540
        %v4803 = vpop.f32.mrf.mxu0
        %v4804 = vadd.f32 %v4685, %v4803
        %v4805 = vpop.f32.mrf.mxu0
        %v4806 = vadd.f32 %v4685, %v4805
        %4807 = vmatmul.bf16.gmra.mxu0 %v2541
        %v4808 = vpop.f32.mrf.mxu0
        %v4809 = vadd.f32 %v4685, %v4808
        %v4810 = vpop.f32.mrf.mxu0
        %v4811 = vadd.f32 %v4685, %v4810
        %4812 = vmatmul.bf16.gmra.mxu0 %v2542
        %v4813 = vpop.f32.mrf.mxu0
        %v4814 = vadd.f32 %v4685, %v4813
        %v4815 = vpop.f32.mrf.mxu0
        %v4816 = vadd.f32 %v4685, %v4815
        %4817 = vmatmul.bf16.gmra.mxu0 %v2543
        %v4818 = vpop.f32.mrf.mxu0
        %v4819 = vadd.f32 %v4685, %v4818
        %v4820 = vpop.f32.mrf.mxu0
        %v4821 = vadd.f32 %v4685, %v4820
        %4822 = vmatmul.bf16.gmra.mxu0 %v2544
        %v4823 = vpop.f32.mrf.mxu0
        %v4824 = vadd.f32 %v4685, %v4823
        %v4825 = vpop.f32.mrf.mxu0
        %v4826 = vadd.f32 %v4685, %v4825
        %4827 = vmatmul.bf16.gmra.mxu0 %v2545
        %v4828 = vpop.f32.mrf.mxu0
        %v4829 = vadd.f32 %v4685, %v4828
        %v4830 = vpop.f32.mrf.mxu0
        %v4831 = vadd.f32 %v4685, %v4830
        %4832 = vmatmul.bf16.gmra.mxu0 %v2546
        %v4833 = vpop.f32.mrf.mxu0
        %v4834 = vadd.f32 %v4685, %v4833
        %v4835 = vpop.f32.mrf.mxu0
        %v4836 = vadd.f32 %v4685, %v4835
        %4837 = vmatmul.bf16.gmra.mxu0 %v2547
        %v4838 = vpop.f32.mrf.mxu0
        %v4839 = vadd.f32 %v4685, %v4838
        %v4840 = vpop.f32.mrf.mxu0
        %v4841 = vadd.f32 %v4685, %v4840
        %4842 = vmatmul.bf16.gmra.mxu0 %v2548
        %v4843 = vpop.f32.mrf.mxu0
        %v4844 = vadd.f32 %v4685, %v4843
        %v4845 = vpop.f32.mrf.mxu0
        %v4846 = vadd.f32 %v4685, %v4845
        %4847 = vmatmul.bf16.gmra.mxu0 %v2549
        %v4848 = vpop.f32.mrf.mxu0
        %v4849 = vadd.f32 %v4685, %v4848
        %v4850 = vpop.f32.mrf.mxu0
        %v4851 = vadd.f32 %v4685, %v4850
        %4852 = vmatmul.bf16.gmra.mxu0 %v2550
        %v4853 = vpop.f32.mrf.mxu0
        %v4854 = vadd.f32 %v4685, %v4853
        %v4855 = vpop.f32.mrf.mxu0
        %v4856 = vadd.f32 %v4685, %v4855
        %4857 = vmatmul.bf16.gmra.mxu0 %v2551
        %v4858 = vpop.f32.mrf.mxu0
        %v4859 = vadd.f32 %v4685, %v4858
        %v4860 = vpop.f32.mrf.mxu0
        %v4861 = vadd.f32 %v4685, %v4860
        %4862 = vmatmul.bf16.gmra.mxu0 %v2552
        %v4863 = vpop.f32.mrf.mxu0
        %v4864 = vadd.f32 %v4685, %v4863
        %v4865 = vpop.f32.mrf.mxu0
        %v4866 = vadd.f32 %v4685, %v4865
        %4867 = vmatmul.bf16.gmra.mxu0 %v2553
        %v4868 = vpop.f32.mrf.mxu0
        %v4869 = vadd.f32 %v4685, %v4868
        %v4870 = vpop.f32.mrf.mxu0
        %v4871 = vadd.f32 %v4685, %v4870
        %4872 = vmatmul.bf16.gmra.mxu0 %v2554
        %v4873 = vpop.f32.mrf.mxu0
        %v4874 = vadd.f32 %v4685, %v4873
        %v4875 = vpop.f32.mrf.mxu0
        %v4876 = vadd.f32 %v4685, %v4875
        %4877 = vmatmul.bf16.gmra.mxu0 %v2555
        %v4878 = vpop.f32.mrf.mxu0
        %v4879 = vadd.f32 %v4685, %v4878
        %v4880 = vpop.f32.mrf.mxu0
        %v4881 = vadd.f32 %v4685, %v4880
        %4882 = vmatmul.bf16.gmra.mxu0 %v2556
        %v4883 = vpop.f32.mrf.mxu0
        %v4884 = vadd.f32 %v4685, %v4883
        %v4885 = vpop.f32.mrf.mxu0
        %v4886 = vadd.f32 %v4685, %v4885
        %4887 = vmatmul.bf16.gmra.mxu0 %v2557
        %v4888 = vpop.f32.mrf.mxu0
        %v4889 = vadd.f32 %v4685, %v4888
        %v4890 = vpop.f32.mrf.mxu0
        %v4891 = vadd.f32 %v4685, %v4890
        %4892 = vmatmul.bf16.gmra.mxu0 %v2558
        %v4893 = vpop.f32.mrf.mxu0
        %v4894 = vadd.f32 %v4685, %v4893
        %v4895 = vpop.f32.mrf.mxu0
        %v4896 = vadd.f32 %v4685, %v4895
        %4897 = vmatmul.bf16.gmra.mxu0 %v2559
        %v4898 = vpop.f32.mrf.mxu0
        %v4899 = vadd.f32 %v4685, %v4898
        %v4900 = vpop.f32.mrf.mxu0
        %v4901 = vadd.f32 %v4685, %v4900
        %4902 = vmatmul.bf16.gmra.mxu0 %v2560
        %v4903 = vpop.f32.mrf.mxu0
        %v4904 = vadd.f32 %v4685, %v4903
        %v4905 = vpop.f32.mrf.mxu0
        %v4906 = vadd.f32 %v4685, %v4905
        %4907 = vmatmul.bf16.gmra.mxu0 %v2561
        %v4908 = vpop.f32.mrf.mxu0
        %v4909 = vadd.f32 %v4685, %v4908
        %v4910 = vpop.f32.mrf.mxu0
        %v4911 = vadd.f32 %v4685, %v4910
        %4912 = vmatmul.bf16.gmra.mxu0 %v2562
        %v4913 = vpop.f32.mrf.mxu0
        %v4914 = vadd.f32 %v4685, %v4913
        %v4915 = vpop.f32.mrf.mxu0
        %v4916 = vadd.f32 %v4685, %v4915
        %4917 = vmatmul.bf16.gmra.mxu0 %v2563
        %v4918 = vpop.f32.mrf.mxu0
        %v4919 = vadd.f32 %v4685, %v4918
        %v4920 = vpop.f32.mrf.mxu0
        %v4921 = vadd.f32 %v4685, %v4920
        %4922 = vmatmul.bf16.gmra.mxu0 %v2564
        %v4923 = vpop.f32.mrf.mxu0
        %v4924 = vadd.f32 %v4685, %v4923
        %v4925 = vpop.f32.mrf.mxu0
        %v4926 = vadd.f32 %v4685, %v4925
        %4927 = vmatmul.bf16.gmra.mxu0 %v2565
        %v4928 = vpop.f32.mrf.mxu0
        %v4929 = vadd.f32 %v4685, %v4928
        %v4930 = vpop.f32.mrf.mxu0
        %v4931 = vadd.f32 %v4685, %v4930
        %4932 = vmatmul.bf16.gmra.mxu0 %v2566
        %v4933 = vpop.f32.mrf.mxu0
        %v4934 = vadd.f32 %v4685, %v4933
        %v4935 = vpop.f32.mrf.mxu0
        %v4936 = vadd.f32 %v4685, %v4935
        %4937 = vdwg.mxu0
        %4938 = vmatpush.bf16.msra.mxu0 %v4752
        %4939 = vmatpush.bf16.msra.mxu0 %v4750
        %4940 = vmatpush.bf16.msra.mxu0 %v4748
        %4941 = vmatpush.bf16.msra.mxu0 %v4746
        %4942 = vmatpush.bf16.msra.mxu0 %v4744
        %4943 = vmatpush.bf16.msra.mxu0 %v4742
        %4944 = vmatpush.bf16.msra.mxu0 %v4740
        %4945 = vmatpush.bf16.msra.mxu0 %v4738
        %4946 = vmatmul.bf16.gmra.mxu0 %v2535
        %v4947 = vpop.f32.mrf.mxu0
        %v4948 = vadd.f32 %v4686, %v4947
        %v4949 = vpop.f32.mrf.mxu0
        %v4950 = vadd.f32 %v4686, %v4949
        %4951 = vmatmul.bf16.gmra.mxu0 %v2536
        %v4952 = vpop.f32.mrf.mxu0
        %v4953 = vadd.f32 %v4686, %v4952
        %v4954 = vpop.f32.mrf.mxu0
        %v4955 = vadd.f32 %v4686, %v4954
        %4956 = vmatmul.bf16.gmra.mxu0 %v2537
        %v4957 = vpop.f32.mrf.mxu0
        %v4958 = vadd.f32 %v4686, %v4957
        %v4959 = vpop.f32.mrf.mxu0
        %v4960 = vadd.f32 %v4686, %v4959
        %4961 = vmatmul.bf16.gmra.mxu0 %v2538
        %v4962 = vpop.f32.mrf.mxu0
        %v4963 = vadd.f32 %v4686, %v4962
        %v4964 = vpop.f32.mrf.mxu0
        %v4965 = vadd.f32 %v4686, %v4964
        %4966 = vmatmul.bf16.gmra.mxu0 %v2539
        %v4967 = vpop.f32.mrf.mxu0
        %v4968 = vadd.f32 %v4686, %v4967
        %v4969 = vpop.f32.mrf.mxu0
        %v4970 = vadd.f32 %v4686, %v4969
        %4971 = vmatmul.bf16.gmra.mxu0 %v2540
        %v4972 = vpop.f32.mrf.mxu0
        %v4973 = vadd.f32 %v4686, %v4972
        %v4974 = vpop.f32.mrf.mxu0
        %v4975 = vadd.f32 %v4686, %v4974
        %4976 = vmatmul.bf16.gmra.mxu0 %v2541
        %v4977 = vpop.f32.mrf.mxu0
        %v4978 = vadd.f32 %v4686, %v4977
        %v4979 = vpop.f32.mrf.mxu0
        %v4980 = vadd.f32 %v4686, %v4979
        %4981 = vmatmul.bf16.gmra.mxu0 %v2542
        %v4982 = vpop.f32.mrf.mxu0
        %v4983 = vadd.f32 %v4686, %v4982
        %v4984 = vpop.f32.mrf.mxu0
        %v4985 = vadd.f32 %v4686, %v4984
        %4986 = vmatmul.bf16.gmra.mxu0 %v2543
        %v4987 = vpop.f32.mrf.mxu0
        %v4988 = vadd.f32 %v4686, %v4987
        %v4989 = vpop.f32.mrf.mxu0
        %v4990 = vadd.f32 %v4686, %v4989
        %4991 = vmatmul.bf16.gmra.mxu0 %v2544
        %v4992 = vpop.f32.mrf.mxu0
        %v4993 = vadd.f32 %v4686, %v4992
        %v4994 = vpop.f32.mrf.mxu0
        %v4995 = vadd.f32 %v4686, %v4994
        %4996 = vmatmul.bf16.gmra.mxu0 %v2545
        %v4997 = vpop.f32.mrf.mxu0
        %v4998 = vadd.f32 %v4686, %v4997
        %v4999 = vpop.f32.mrf.mxu0
        %v5000 = vadd.f32 %v4686, %v4999
        %5001 = vmatmul.bf16.gmra.mxu0 %v2546
        %v5002 = vpop.f32.mrf.mxu0
        %v5003 = vadd.f32 %v4686, %v5002
        %v5004 = vpop.f32.mrf.mxu0
        %v5005 = vadd.f32 %v4686, %v5004
        %5006 = vmatmul.bf16.gmra.mxu0 %v2547
        %v5007 = vpop.f32.mrf.mxu0
        %v5008 = vadd.f32 %v4686, %v5007
        %v5009 = vpop.f32.mrf.mxu0
        %v5010 = vadd.f32 %v4686, %v5009
        %5011 = vmatmul.bf16.gmra.mxu0 %v2548
        %v5012 = vpop.f32.mrf.mxu0
        %v5013 = vadd.f32 %v4686, %v5012
        %v5014 = vpop.f32.mrf.mxu0
        %v5015 = vadd.f32 %v4686, %v5014
        %5016 = vmatmul.bf16.gmra.mxu0 %v2549
        %v5017 = vpop.f32.mrf.mxu0
        %v5018 = vadd.f32 %v4686, %v5017
        %v5019 = vpop.f32.mrf.mxu0
        %v5020 = vadd.f32 %v4686, %v5019
        %5021 = vmatmul.bf16.gmra.mxu0 %v2550
        %v5022 = vpop.f32.mrf.mxu0
        %v5023 = vadd.f32 %v4686, %v5022
        %v5024 = vpop.f32.mrf.mxu0
        %v5025 = vadd.f32 %v4686, %v5024
        %5026 = vmatmul.bf16.gmra.mxu0 %v2551
        %v5027 = vpop.f32.mrf.mxu0
        %v5028 = vadd.f32 %v4686, %v5027
        %v5029 = vpop.f32.mrf.mxu0
        %v5030 = vadd.f32 %v4686, %v5029
        %5031 = vmatmul.bf16.gmra.mxu0 %v2552
        %v5032 = vpop.f32.mrf.mxu0
        %v5033 = vadd.f32 %v4686, %v5032
        %v5034 = vpop.f32.mrf.mxu0
        %v5035 = vadd.f32 %v4686, %v5034
        %5036 = vmatmul.bf16.gmra.mxu0 %v2553
        %v5037 = vpop.f32.mrf.mxu0
        %v5038 = vadd.f32 %v4686, %v5037
        %v5039 = vpop.f32.mrf.mxu0
        %v5040 = vadd.f32 %v4686, %v5039
        %5041 = vmatmul.bf16.gmra.mxu0 %v2554
        %v5042 = vpop.f32.mrf.mxu0
        %v5043 = vadd.f32 %v4686, %v5042
        %v5044 = vpop.f32.mrf.mxu0
        %v5045 = vadd.f32 %v4686, %v5044
        %5046 = vmatmul.bf16.gmra.mxu0 %v2555
        %v5047 = vpop.f32.mrf.mxu0
        %v5048 = vadd.f32 %v4686, %v5047
        %v5049 = vpop.f32.mrf.mxu0
        %v5050 = vadd.f32 %v4686, %v5049
        %5051 = vmatmul.bf16.gmra.mxu0 %v2556
        %v5052 = vpop.f32.mrf.mxu0
        %v5053 = vadd.f32 %v4686, %v5052
        %v5054 = vpop.f32.mrf.mxu0
        %v5055 = vadd.f32 %v4686, %v5054
        %5056 = vmatmul.bf16.gmra.mxu0 %v2557
        %v5057 = vpop.f32.mrf.mxu0
        %v5058 = vadd.f32 %v4686, %v5057
        %v5059 = vpop.f32.mrf.mxu0
        %v5060 = vadd.f32 %v4686, %v5059
        %5061 = vmatmul.bf16.gmra.mxu0 %v2558
        %v5062 = vpop.f32.mrf.mxu0
        %v5063 = vadd.f32 %v4686, %v5062
        %v5064 = vpop.f32.mrf.mxu0
        %v5065 = vadd.f32 %v4686, %v5064
        %5066 = vmatmul.bf16.gmra.mxu0 %v2559
        %v5067 = vpop.f32.mrf.mxu0
        %v5068 = vadd.f32 %v4686, %v5067
        %v5069 = vpop.f32.mrf.mxu0
        %v5070 = vadd.f32 %v4686, %v5069
        %5071 = vmatmul.bf16.gmra.mxu0 %v2560
        %v5072 = vpop.f32.mrf.mxu0
        %v5073 = vadd.f32 %v4686, %v5072
        %v5074 = vpop.f32.mrf.mxu0
        %v5075 = vadd.f32 %v4686, %v5074
        %5076 = vmatmul.bf16.gmra.mxu0 %v2561
        %v5077 = vpop.f32.mrf.mxu0
        %v5078 = vadd.f32 %v4686, %v5077
        %v5079 = vpop.f32.mrf.mxu0
        %v5080 = vadd.f32 %v4686, %v5079
        %5081 = vmatmul.bf16.gmra.mxu0 %v2562
        %v5082 = vpop.f32.mrf.mxu0
        %v5083 = vadd.f32 %v4686, %v5082
        %v5084 = vpop.f32.mrf.mxu0
        %v5085 = vadd.f32 %v4686, %v5084
        %5086 = vmatmul.bf16.gmra.mxu0 %v2563
        %v5087 = vpop.f32.mrf.mxu0
        %v5088 = vadd.f32 %v4686, %v5087
        %v5089 = vpop.f32.mrf.mxu0
        %v5090 = vadd.f32 %v4686, %v5089
        %5091 = vmatmul.bf16.gmra.mxu0 %v2564
        %v5092 = vpop.f32.mrf.mxu0
        %v5093 = vadd.f32 %v4686, %v5092
        %v5094 = vpop.f32.mrf.mxu0
        %v5095 = vadd.f32 %v4686, %v5094
        %5096 = vmatmul.bf16.gmra.mxu0 %v2565
        %v5097 = vpop.f32.mrf.mxu0
        %v5098 = vadd.f32 %v4686, %v5097
        %v5099 = vpop.f32.mrf.mxu0
        %v5100 = vadd.f32 %v4686, %v5099
        %5101 = vmatmul.bf16.gmra.mxu0 %v2566
        %v5102 = vpop.f32.mrf.mxu0
        %v5103 = vadd.f32 %v4686, %v5102
        %v5104 = vpop.f32.mrf.mxu0
        %v5105 = vadd.f32 %v4686, %v5104
        %5106 = vdwg.mxu0
        %v5107 = vmax.f32 %v4779, 0.0
        %v5108 = vmax.f32 %v4948, 0.0
        %v5109 = vmax.f32 %v4781, 0.0
        %v5110 = vmax.f32 %v4950, 0.0
        %v5111 = vmax.f32 %v4784, 0.0
        %v5112 = vmax.f32 %v4953, 0.0
        %v5113 = vmax.f32 %v4786, 0.0
        %v5114 = vmax.f32 %v4955, 0.0
        %v5115 = vmax.f32 %v4789, 0.0
        %v5116 = vmax.f32 %v4958, 0.0
        %v5117 = vmax.f32 %v4791, 0.0
        %v5118 = vmax.f32 %v4960, 0.0
        %v5119 = vmax.f32 %v4794, 0.0
        %v5120 = vmax.f32 %v4963, 0.0
        %v5121 = vmax.f32 %v4796, 0.0
        %v5122 = vmax.f32 %v4965, 0.0
        %v5123 = vmax.f32 %v4799, 0.0
        %v5124 = vmax.f32 %v4968, 0.0
        %v5125 = vmax.f32 %v4801, 0.0
        %v5126 = vmax.f32 %v4970, 0.0
        %v5127 = vmax.f32 %v4804, 0.0
        %v5128 = vmax.f32 %v4973, 0.0
        %v5129 = vmax.f32 %v4806, 0.0
        %v5130 = vmax.f32 %v4975, 0.0
        %v5131 = vmax.f32 %v4809, 0.0
        %v5132 = vmax.f32 %v4978, 0.0
        %v5133 = vmax.f32 %v4811, 0.0
        %v5134 = vmax.f32 %v4980, 0.0
        %v5135 = vmax.f32 %v4814, 0.0
        %v5136 = vmax.f32 %v4983, 0.0
        %v5137 = vmax.f32 %v4816, 0.0
        %v5138 = vmax.f32 %v4985, 0.0
        %v5139 = vmax.f32 %v4819, 0.0
        %v5140 = vmax.f32 %v4988, 0.0
        %v5141 = vmax.f32 %v4821, 0.0
        %v5142 = vmax.f32 %v4990, 0.0
        %v5143 = vmax.f32 %v4824, 0.0
        %v5144 = vmax.f32 %v4993, 0.0
        %v5145 = vmax.f32 %v4826, 0.0
        %v5146 = vmax.f32 %v4995, 0.0
        %v5147 = vmax.f32 %v4829, 0.0
        %v5148 = vmax.f32 %v4998, 0.0
        %v5149 = vmax.f32 %v4831, 0.0
        %v5150 = vmax.f32 %v5000, 0.0
        %v5151 = vmax.f32 %v4834, 0.0
        %v5152 = vmax.f32 %v5003, 0.0
        %v5153 = vmax.f32 %v4836, 0.0
        %v5154 = vmax.f32 %v5005, 0.0
        %v5155 = vmax.f32 %v4839, 0.0
        %v5156 = vmax.f32 %v5008, 0.0
        %v5157 = vmax.f32 %v4841, 0.0
        %v5158 = vmax.f32 %v5010, 0.0
        %v5159 = vmax.f32 %v4844, 0.0
        %v5160 = vmax.f32 %v5013, 0.0
        %v5161 = vmax.f32 %v4846, 0.0
        %v5162 = vmax.f32 %v5015, 0.0
        %v5163 = vmax.f32 %v4849, 0.0
        %v5164 = vmax.f32 %v5018, 0.0
        %v5165 = vmax.f32 %v4851, 0.0
        %v5166 = vmax.f32 %v5020, 0.0
        %v5167 = vmax.f32 %v4854, 0.0
        %v5168 = vmax.f32 %v5023, 0.0
        %v5169 = vmax.f32 %v4856, 0.0
        %v5170 = vmax.f32 %v5025, 0.0
        %v5171 = vmax.f32 %v4859, 0.0
        %v5172 = vmax.f32 %v5028, 0.0
        %v5173 = vmax.f32 %v4861, 0.0
        %v5174 = vmax.f32 %v5030, 0.0
        %v5175 = vmax.f32 %v4864, 0.0
        %v5176 = vmax.f32 %v5033, 0.0
        %v5177 = vmax.f32 %v4866, 0.0
        %v5178 = vmax.f32 %v5035, 0.0
        %v5179 = vmax.f32 %v4869, 0.0
        %v5180 = vmax.f32 %v5038, 0.0
        %v5181 = vmax.f32 %v4871, 0.0
        %v5182 = vmax.f32 %v5040, 0.0
        %v5183 = vmax.f32 %v4874, 0.0
        %v5184 = vmax.f32 %v5043, 0.0
        %v5185 = vmax.f32 %v4876, 0.0
        %v5186 = vmax.f32 %v5045, 0.0
        %v5187 = vmax.f32 %v4879, 0.0
        %v5188 = vmax.f32 %v5048, 0.0
        %v5189 = vmax.f32 %v4881, 0.0
        %v5190 = vmax.f32 %v5050, 0.0
        %v5191 = vmax.f32 %v4884, 0.0
        %v5192 = vmax.f32 %v5053, 0.0
        %v5193 = vmax.f32 %v4886, 0.0
        %v5194 = vmax.f32 %v5055, 0.0
        %v5195 = vmax.f32 %v4889, 0.0
        %v5196 = vmax.f32 %v5058, 0.0
        %v5197 = vmax.f32 %v4891, 0.0
        %v5198 = vmax.f32 %v5060, 0.0
        %v5199 = vmax.f32 %v4894, 0.0
        %v5200 = vmax.f32 %v5063, 0.0
        %v5201 = vmax.f32 %v4896, 0.0
        %v5202 = vmax.f32 %v5065, 0.0
        %v5203 = vmax.f32 %v4899, 0.0
        %v5204 = vmax.f32 %v5068, 0.0
        %v5205 = vmax.f32 %v4901, 0.0
        %v5206 = vmax.f32 %v5070, 0.0
        %v5207 = vmax.f32 %v4904, 0.0
        %v5208 = vmax.f32 %v5073, 0.0
        %v5209 = vmax.f32 %v4906, 0.0
        %v5210 = vmax.f32 %v5075, 0.0
        %v5211 = vmax.f32 %v4909, 0.0
        %v5212 = vmax.f32 %v5078, 0.0
        %v5213 = vmax.f32 %v4911, 0.0
        %v5214 = vmax.f32 %v5080, 0.0
        %v5215 = vmax.f32 %v4914, 0.0
        %v5216 = vmax.f32 %v5083, 0.0
        %v5217 = vmax.f32 %v4916, 0.0
        %v5218 = vmax.f32 %v5085, 0.0
        %v5219 = vmax.f32 %v4919, 0.0
        %v5220 = vmax.f32 %v5088, 0.0
        %v5221 = vmax.f32 %v4921, 0.0
        %v5222 = vmax.f32 %v5090, 0.0
        %v5223 = vmax.f32 %v4924, 0.0
        %v5224 = vmax.f32 %v5093, 0.0
        %v5225 = vmax.f32 %v4926, 0.0
        %v5226 = vmax.f32 %v5095, 0.0
        %v5227 = vmax.f32 %v4929, 0.0
        %v5228 = vmax.f32 %v5098, 0.0
        %v5229 = vmax.f32 %v4931, 0.0
        %v5230 = vmax.f32 %v5100, 0.0
        %v5231 = vmax.f32 %v4934, 0.0
        %v5232 = vmax.f32 %v5103, 0.0
        %v5233 = vmax.f32 %v4936, 0.0
        %v5234 = vmax.f32 %v5105, 0.0
        %v5235 = vmax.f32 %v5107, %v5111
        %v5236 = vmax.f32 %v5109, %v5113
        %v5237 = vmax.f32 %v5235, %v5115
        %v5238 = vmax.f32 %v5236, %v5117
        %v5239 = vmax.f32 %v5237, %v5119
        %v5240 = vmax.f32 %v5238, %v5121
        %v5241 = vmax.f32 %v5239, %v5123
        %v5242 = vmax.f32 %v5240, %v5125
        %v5243 = vmax.f32 %v5241, %v5127
        %v5244 = vmax.f32 %v5242, %v5129
        %v5245 = vmax.f32 %v5243, %v5131
        %v5246 = vmax.f32 %v5244, %v5133
        %v5247 = vmax.f32 %v5245, %v5135
        %v5248 = vmax.f32 %v5246, %v5137
        %v5249 = vmax.f32 %v5247, %v5139
        %v5250 = vmax.f32 %v5248, %v5141
        %v5251 = vmax.f32 %v5249, %v5143
        %v5252 = vmax.f32 %v5250, %v5145
        %v5253 = vmax.f32 %v5251, %v5147
        %v5254 = vmax.f32 %v5252, %v5149
        %v5255 = vmax.f32 %v5253, %v5151
        %v5256 = vmax.f32 %v5254, %v5153
        %v5257 = vmax.f32 %v5255, %v5155
        %v5258 = vmax.f32 %v5256, %v5157
        %v5259 = vmax.f32 %v5257, %v5159
        %v5260 = vmax.f32 %v5258, %v5161
        %v5261 = vmax.f32 %v5259, %v5163
        %v5262 = vmax.f32 %v5260, %v5165
        %v5263 = vmax.f32 %v5261, %v5167
        %v5264 = vmax.f32 %v5262, %v5169
        %v5265 = vmax.f32 %v5263, %v5171
        %v5266 = vmax.f32 %v5264, %v5173
        %v5267 = vmax.f32 %v5265, %v5175
        %v5268 = vmax.f32 %v5266, %v5177
        %v5269 = vmax.f32 %v5267, %v5179
        %v5270 = vmax.f32 %v5268, %v5181
        %v5271 = vmax.f32 %v5269, %v5183
        %v5272 = vmax.f32 %v5270, %v5185
        %v5273 = vmax.f32 %v5271, %v5187
        %v5274 = vmax.f32 %v5272, %v5189
        %v5275 = vmax.f32 %v5273, %v5191
        %v5276 = vmax.f32 %v5274, %v5193
        %v5277 = vmax.f32 %v5275, %v5195
        %v5278 = vmax.f32 %v5276, %v5197
        %v5279 = vmax.f32 %v5277, %v5199
        %v5280 = vmax.f32 %v5278, %v5201
        %v5281 = vmax.f32 %v5279, %v5203
        %v5282 = vmax.f32 %v5280, %v5205
        %v5283 = vmax.f32 %v5281, %v5207
        %v5284 = vmax.f32 %v5282, %v5209
        %v5285 = vmax.f32 %v5283, %v5211
        %v5286 = vmax.f32 %v5284, %v5213
        %v5287 = vmax.f32 %v5285, %v5215
        %v5288 = vmax.f32 %v5286, %v5217
        %v5289 = vmax.f32 %v5287, %v5219
        %v5290 = vmax.f32 %v5288, %v5221
        %v5291 = vmax.f32 %v5289, %v5223
        %v5292 = vmax.f32 %v5290, %v5225
        %v5293 = vmax.f32 %v5291, %v5227
        %v5294 = vmax.f32 %v5292, %v5229
        %v5295 = vmax.f32 %v5293, %v5231
        %v5296 = vmax.f32 %v5294, %v5233
        %v5297 = vmax.f32 %v5295, %v5296
        %v5298 = vmax.f32 %v5108, %v5112
        %v5299 = vmax.f32 %v5110, %v5114
        %v5300 = vmax.f32 %v5298, %v5116
        %v5301 = vmax.f32 %v5299, %v5118
        %v5302 = vmax.f32 %v5300, %v5120
        %v5303 = vmax.f32 %v5301, %v5122
        %v5304 = vmax.f32 %v5302, %v5124
        %v5305 = vmax.f32 %v5303, %v5126
        %v5306 = vmax.f32 %v5304, %v5128
        %v5307 = vmax.f32 %v5305, %v5130
        %v5308 = vmax.f32 %v5306, %v5132
        %v5309 = vmax.f32 %v5307, %v5134
        %v5310 = vmax.f32 %v5308, %v5136
        %v5311 = vmax.f32 %v5309, %v5138
        %v5312 = vmax.f32 %v5310, %v5140
        %v5313 = vmax.f32 %v5311, %v5142
        %v5314 = vmax.f32 %v5312, %v5144
        %v5315 = vmax.f32 %v5313, %v5146
        %v5316 = vmax.f32 %v5314, %v5148
        %v5317 = vmax.f32 %v5315, %v5150
        %v5318 = vmax.f32 %v5316, %v5152
        %v5319 = vmax.f32 %v5317, %v5154
        %v5320 = vmax.f32 %v5318, %v5156
        %v5321 = vmax.f32 %v5319, %v5158
        %v5322 = vmax.f32 %v5320, %v5160
        %v5323 = vmax.f32 %v5321, %v5162
        %v5324 = vmax.f32 %v5322, %v5164
        %v5325 = vmax.f32 %v5323, %v5166
        %v5326 = vmax.f32 %v5324, %v5168
        %v5327 = vmax.f32 %v5325, %v5170
        %v5328 = vmax.f32 %v5326, %v5172
        %v5329 = vmax.f32 %v5327, %v5174
        %v5330 = vmax.f32 %v5328, %v5176
        %v5331 = vmax.f32 %v5329, %v5178
        %v5332 = vmax.f32 %v5330, %v5180
        %v5333 = vmax.f32 %v5331, %v5182
        %v5334 = vmax.f32 %v5332, %v5184
        %v5335 = vmax.f32 %v5333, %v5186
        %v5336 = vmax.f32 %v5334, %v5188
        %v5337 = vmax.f32 %v5335, %v5190
        %v5338 = vmax.f32 %v5336, %v5192
        %v5339 = vmax.f32 %v5337, %v5194
        %v5340 = vmax.f32 %v5338, %v5196
        %v5341 = vmax.f32 %v5339, %v5198
        %v5342 = vmax.f32 %v5340, %v5200
        %v5343 = vmax.f32 %v5341, %v5202
        %v5344 = vmax.f32 %v5342, %v5204
        %v5345 = vmax.f32 %v5343, %v5206
        %v5346 = vmax.f32 %v5344, %v5208
        %v5347 = vmax.f32 %v5345, %v5210
        %v5348 = vmax.f32 %v5346, %v5212
        %v5349 = vmax.f32 %v5347, %v5214
        %v5350 = vmax.f32 %v5348, %v5216
        %v5351 = vmax.f32 %v5349, %v5218
        %v5352 = vmax.f32 %v5350, %v5220
        %v5353 = vmax.f32 %v5351, %v5222
        %v5354 = vmax.f32 %v5352, %v5224
        %v5355 = vmax.f32 %v5353, %v5226
        %v5356 = vmax.f32 %v5354, %v5228
        %v5357 = vmax.f32 %v5355, %v5230
        %v5358 = vmax.f32 %v5356, %v5232
        %v5359 = vmax.f32 %v5357, %v5234
        %v5360 = vmax.f32 %v5358, %v5359
        %v5361 = vld [vmem:[%s362 + $0x30] sm:$0xff]
        %v5362 = vld [vmem:[%s362 + $0x38] sm:$0xff]
        %v5363 = vmax.f32 %v5361, %v5297
        %v5364 = vmax.f32 %v5362, %v5360
        %5365 = vst [vmem:[%s362 + $0x30] sm:$0xff] %v5363
        %5366 = vst [vmem:[%s362 + $0x38] sm:$0xff] %v5364
        %s5367 = sand.u32 %s250, 1
        %s5368 = scalar_lea.sflag [#allocation3], %s5367
        %s5369 = sand.u32 %s250, 1
        %s5370 = smul.addr %s5369, 64
        %s5371 = scalar_lea.vmem [#allocation2], %s5370
        // Predicated region
        $region61: #{tpu_custom_call.1} parent=55 // pred_check
          %p5372 = pneg %p260
        $region62: #{tpu_custom_call.1} parent=55 // pred_check_branch
          %5374 = sbr.rel (%p5372) target = $region64
        $region63: #{tpu_custom_call.1} parent=55 // pred_region
          %5376 = vsyncadd %s5368, 0
          %s5377 = smul.addr %s28, 8
          %s5378 = smul.addr %s29, 8
          %s5379 = sadd.s32 %s5377, %s5378
          %s5380 = smul.addr %s5379, 8
          %s5381 = scalar_lea.hbm %s9, %s5380
          %s5383 = sshll.u32 %s5371, 4
          %s5384 = int_to_ptr.vmem [resolvable:$true] %s5383
          %s5385 = sshll.u32 %s5381, 4
          %s5386 = int_to_ptr.hbm [resolvable:$true] %s5385
          %5388 = dma.vmem_to_hbm [thread:$0]  %s5384, 1024, %s5386, %s5368
        $region64: #{tpu_custom_call.1} parent=55 // pred_fallthru
          _
      $region56: #{tpu_custom_call.1} parent=5 // pred_fallthru
        _
      %p5389 = scmp.le.s32.totalorder 2, %s18
      // Predicated region
      $region65: #{tpu_custom_call.1} parent=5 // pred_check
        %p5390 = pneg %p5389
      $region66: #{tpu_custom_call.1} parent=5 // pred_check_branch
        %5392 = sbr.rel (%p5390) target = $region68
      $region67: #{tpu_custom_call.1} parent=5 // pred_region
        %s5393 = ssub.s32 %s18, 2
        // Predicated region
        $region69: #{tpu_custom_call.1} parent=67 // pred_check
          %p5394 = pneg %p266
        $region70: #{tpu_custom_call.1} parent=67 // pred_check_branch
          %5396 = sbr.rel (%p5394) target = $region72
        $region71: #{tpu_custom_call.1} parent=67 // pred_region
          %s5397 = sand.u32 %s251, 1
          %s5398 = scalar_lea.sflag [#allocation3], %s5397
          %s5399 = sand.u32 %s251, 1
          %s5400 = smul.addr %s5399, 64
          %s5401 = scalar_lea.vmem [#allocation2], %s5400
          %5403 = dma.done %s5398, 1024
        $region72: #{tpu_custom_call.1} parent=67 // pred_fallthru
          _
      $region68: #{tpu_custom_call.1} parent=5 // pred_fallthru
        _
    $region6: #{tpu_custom_call.1} parent=1 // loop_footer
      %s22 = sadd.s32 1, %s18
    $region7: #{tpu_custom_call.1} parent=1 // loop_footer_branch
      %17 = sbr.rel target = $region3
    $region8: #{tpu_custom_call.1} parent=1 // loop_exit
      _
    %5404 = vsyncpa [#allocation3], 1
    %s5405 = scalar_lea.sflag [#allocation3], 1
    %5406 = vsyncpa %s5405, 1

</llo_original>
